<compile_context>
chip_gen: v7x
topology: tpu7x:2x2x1
jax: 0.10.0
libtpu: 0.0.40
codegen_flags: <defaults>
</compile_context>

<pallas_src>
import functools

import jax
import jax.numpy as jnp
from jax import lax
from jax.experimental import pallas as pl
from jax.experimental.pallas import tpu as pltpu

_CompilerParams = getattr(pltpu, "CompilerParams", None) or getattr(
    pltpu, "TPUCompilerParams")

_LANE = 128


def _round_up(x, m):
    return ((x + m - 1) // m) * m


def _hw_caps():
    vmem = None
    try:
        info = pltpu.get_tpu_info()
        vmem = getattr(info, "vmem_capacity_bytes", None)
    except Exception:
        vmem = None
    if vmem is not None and vmem >= 100 * 1024 * 1024:
        # v5e / v6e: 128 MiB physical VMEM -> larger tiles, larger scoped limit.
        return {"vmem_limit": 96 * 1024 * 1024, "tm_cap": 1024,
                "tn_cap": 512, "tk_cap": 512}
    # v7x (64 MiB physical) or unknown: stay conservative.
    return {"vmem_limit": 32 * 1024 * 1024, "tm_cap": 512,
            "tn_cap": 512, "tk_cap": 512}


_CAPS = _hw_caps()


def _pick_tile(total, cap, mult):
    """Largest multiple of `mult` <= cap dividing `total` (total % mult == 0)."""
    best = mult
    t = mult
    limit = min(cap, total)
    while t <= limit:
        if total % t == 0:
            best = t
        t += mult
    return best


def _choose_tm(m, cap):
    m16 = _round_up(max(m, 16), 16)          # bf16 packs 2 rows / sublane
    if m16 <= 256:
        return m16
    # >= 2 row tiles so a "parallel" axis has work for the v7x megacore.
    return min(cap, _round_up((m16 + 1) // 2, 16))


# ----------------------------------------------------------------------------
# Pallas kernels
# ----------------------------------------------------------------------------

def _mm_bias_act_kernel(a_ref, b_ref, bias_ref, o_ref, acc_ref, *, apply_silu):
    """Grid (G, M, N, K). bf16 A/B -> f32 accumulator; fused bias + SiLU."""
    kk = pl.program_id(3)

    @pl.when(kk == 0)
    def _init():
        acc_ref[...] = jnp.zeros_like(acc_ref)

    acc_ref[...] += jnp.dot(a_ref[...], b_ref[...],
                            preferred_element_type=jnp.float32)

    @pl.when(kk == pl.num_programs(3) - 1)
    def _finalize():
        y = acc_ref[...] + bias_ref[...]
        if apply_silu:
            y = y * jax.nn.sigmoid(y)            # SiLU; exp goes to the EUP slot
        o_ref[...] = y.astype(o_ref.dtype)


def _vae_heads_kernel(a_ref, w_ref, bias_ref, eps_ref,
                      mu_ref, lv_ref, z_ref, acc_ref, *, latent_dim):
    """Fused (fc1 | fc_log_var) matmul + reparameterization. Grid = (K_tiles,)."""
    kk = pl.program_id(0)

    @pl.when(kk == 0)
    def _init():
        acc_ref[...] = jnp.zeros_like(acc_ref)

    acc_ref[...] += jnp.dot(a_ref[...], w_ref[...],
                            preferred_element_type=jnp.float32)

    @pl.when(kk == pl.num_programs(0) - 1)
    def _finalize():
        r = acc_ref[...] + bias_ref[...]          # cols [0,L)=mu, [L,2L)=log_var
        lp = r.shape[-1]
        row = lax.broadcasted_iota(jnp.int32, (lp, lp), 0)
        col = lax.broadcasted_iota(jnp.int32, (lp, lp), 1)
        keep = col < latent_dim
        mu_sel = ((row == col) & keep).astype(jnp.float32)
        lv_sel = ((row == (col + latent_dim)) & keep).astype(jnp.float32)
        mu = jnp.dot(r, mu_sel, preferred_element_type=jnp.float32)
        lv = jnp.dot(r, lv_sel, preferred_element_type=jnp.float32)
        z = mu + eps_ref[...] * jnp.exp(0.5 * lv)
        mu_ref[...] = mu
        lv_ref[...] = lv
        z_ref[...] = z


# ----------------------------------------------------------------------------
# Pallas wrappers
# ----------------------------------------------------------------------------

def pallas_matmul_bias(a, w_prep, bias_prep, n_out, *, apply_silu=False,
                       out_dtype=jnp.bfloat16):
    """(G,M,K) @ (G,Kp,Np) + bias(1,Np) [+SiLU] -> (G,M,n_out) in out_dtype."""
    squeeze = (a.ndim == 2)
    if squeeze:
        a = a[None]
    if w_prep.ndim == 2:
        w_prep = w_prep[None]
    g, m, ka = a.shape
    gw, kp, np_ = w_prep.shape
    assert g == gw and ka <= kp

    tm = _choose_tm(m, _CAPS["tm_cap"])
    m_p = _round_up(m, tm)
    tn = _pick_tile(np_, _CAPS["tn_cap"], _LANE)
    tk = _pick_tile(kp, _CAPS["tk_cap"], _LANE)

    a_p = a.astype(jnp.bfloat16)
    if m_p != m or kp != ka:
        a_p = jnp.pad(a_p, ((0, 0), (0, m_p - m), (0, kp - ka)))

    grid = (g, m_p // tm, np_ // tn, kp // tk)
    out = pl.pallas_call(
        functools.partial(_mm_bias_act_kernel, apply_silu=apply_silu),
        out_shape=jax.ShapeDtypeStruct((g, m_p, np_), out_dtype),
        grid=grid,
        in_specs=[
            pl.BlockSpec((None, tm, tk), lambda gi, i, j, kk: (gi, i, kk)),
            pl.BlockSpec((None, tk, tn), lambda gi, i, j, kk: (gi, kk, j)),
            pl.BlockSpec((1, tn), lambda gi, i, j, kk: (0, j)),
        ],
        out_specs=pl.BlockSpec((None, tm, tn), lambda gi, i, j, kk: (gi, i, j)),
        scratch_shapes=[pltpu.VMEM((tm, tn), jnp.float32)],
        compiler_params=_CompilerParams(
            dimension_semantics=("parallel", "parallel", "parallel", "arbitrary"),
            vmem_limit_bytes=_CAPS["vmem_limit"]),
    )(a_p, w_prep, bias_prep)
    out = out[:, :m, :n_out]
    return out[0] if squeeze else out


def vae_heads_reparam(flat, heads_prep, eps, latent_dim):
    """Single fused matmul for both heads + in-kernel reparameterization."""
    b, kf = flat.shape
    wp, bp = heads_prep["w"], heads_prep["b"]
    kp, lp = wp.shape
    b_p = _round_up(max(b, 16), 16)
    a = jnp.pad(flat.astype(jnp.bfloat16), ((0, b_p - b), (0, kp - kf)))
    eps_p = jnp.pad(eps.astype(jnp.float32),
                    ((0, b_p - b), (0, lp - latent_dim)))
    tk = _pick_tile(kp, _CAPS["tk_cap"], _LANE)

    mu, lv, z = pl.pallas_call(
        functools.partial(_vae_heads_kernel, latent_dim=latent_dim),
        out_shape=(jax.ShapeDtypeStruct((b_p, lp), jnp.float32),
                   jax.ShapeDtypeStruct((b_p, lp), jnp.float32),
                   jax.ShapeDtypeStruct((b_p, lp), jnp.float32)),
        grid=(kp // tk,),
        in_specs=[
            pl.BlockSpec((b_p, tk), lambda kk: (0, kk)),
            pl.BlockSpec((tk, lp), lambda kk: (kk, 0)),
            pl.BlockSpec((1, lp), lambda kk: (0, 0)),
            pl.BlockSpec((b_p, lp), lambda kk: (0, 0)),
        ],
        out_specs=(pl.BlockSpec((b_p, lp), lambda kk: (0, 0)),
                   pl.BlockSpec((b_p, lp), lambda kk: (0, 0)),
                   pl.BlockSpec((b_p, lp), lambda kk: (0, 0))),
        scratch_shapes=[pltpu.VMEM((b_p, lp), jnp.float32)],
        compiler_params=_CompilerParams(
            dimension_semantics=("arbitrary",),
            vmem_limit_bytes=_CAPS["vmem_limit"]),
    )(a, wp, bp, eps_p)
    # z stays lane-padded (width lp) so fc2 contracts over K = lp >= 128.
    return mu[:b, :latent_dim], lv[:b, :latent_dim], z[:b]


# ----------------------------------------------------------------------------
# One-time weight layout (hoisted out of the forward path)
# ----------------------------------------------------------------------------

def _prep_weight(w_kn, bias_n):
    """(K,N) weight + (N,) bias -> bf16 (Kp,Np) / f32 (1,Np), 128-padded."""
    k, n = w_kn.shape
    kp, np_ = _round_up(k, _LANE), _round_up(n, _LANE)
    wp = jnp.pad(w_kn.astype(jnp.float32),
                 ((0, kp - k), (0, np_ - n))).astype(jnp.bfloat16)
    bp = jnp.pad(bias_n.astype(jnp.float32), (0, np_ - n)).reshape(1, np_)
    return wp, bp


def _taps_1d(phase, k, s, p):
    """ConvTranspose taps (kh, dh) contributing to output rows i = s*ii+phase."""
    taps = []
    for kk in range(k):
        if (phase + p - kk) % s == 0:
            taps.append((kk, (phase + p - kk) // s))
    return taps


def prepare_params(params, meta):
    k, s, p = meta["kernel_size"], meta["stride"], meta["padding"]
    latent = meta["latent_dim"]
    prep = {"encoder": [], "decoder": []}

    for layer in params["encoder"]:
        cout, cin = layer["w"].shape[0], layer["w"].shape[1]
        w_kn = jnp.transpose(layer["w"], (2, 3, 1, 0)).reshape(k * k * cin, cout)
        wp, bp = _prep_weight(w_kn, layer["b"])
        prep["encoder"].append({"w": wp, "b": bp})

    # Fused mu | log_var head: one lane-dense weight slab, one matmul.
    w_cat = jnp.concatenate([params["fc1"]["w"].T,
                             params["fc_log_var"]["w"].T], axis=1)
    b_cat = jnp.concatenate([params["fc1"]["b"], params["fc_log_var"]["b"]])
    hw, hb = _prep_weight(w_cat, b_cat)
    prep["heads"] = {"w": hw, "b": hb}

    # fc2: pre-pad the latent (K) dim to the heads' lane width so the padded z
    # feeds it directly (reduction dim >= 128 on every generation).
    lp = hw.shape[1]
    w2_kn = jnp.pad(params["fc2"]["w"].T.astype(jnp.float32),
                    ((0, lp - latent), (0, 0)))
    w2p, b2p = _prep_weight(w2_kn, params["fc2"]["b"])
    prep["fc2"] = {"w": w2p, "b": b2p}

    # Decoder ConvTranspose2d: per-output-phase weight stacks for the
    # sub-pixel phase decomposition (batched matmul, bias fused once per elem).
    for layer in params["decoder"]:
        w = layer["w"]                    # (Cin, Cout, k, k) PyTorch layout
        cin, cout = w.shape[0], w.shape[1]
        np_ = _round_up(cout, _LANE)
        kmax = max(len(_taps_1d(a, k, s, p)) * len(_taps_1d(b, k, s, p)) * cin
                   for a in range(s) for b in range(s))
        kp = _round_up(kmax, _LANE)
        w_phases = []
        for a in range(s):
            th = _taps_1d(a, k, s, p)
            for b in range(s):
                tw = _taps_1d(b, k, s, p)
                w_kn = jnp.concatenate(
                    [w[:, :, kh, kw] for (kh, _) in th for (kw, _) in tw], axis=0)
                w_kn = jnp.pad(w_kn.astype(jnp.float32),
                               ((0, kp - w_kn.shape[0]), (0, np_ - cout)))
                w_phases.append(w_kn.astype(jnp.bfloat16))
        bph = jnp.pad(layer["b"].astype(jnp.float32),
                      (0, np_ - cout)).reshape(1, np_)
        prep["decoder"].append({"w": jnp.stack(w_phases, axis=0), "b": bph})
    return prep


# ----------------------------------------------------------------------------
# Conv / ConvTranspose (NHWC glue around the matmul kernel)
# ----------------------------------------------------------------------------

def conv2d_encoder(x, wp, bp, cout, *, k, stride, padding, apply_silu,
                   out_dtype):
    """PyTorch Conv2d via im2col + fused matmul/bias/SiLU."""
    n, h, w_, cin = x.shape
    xp = jnp.pad(x, ((0, 0), (padding, padding), (padding, padding), (0, 0)))
    hp, wpd = h + 2 * padding, w_ + 2 * padding
    ho = (hp - k) // stride + 1
    wo = (wpd - k) // stride + 1
    slabs = []
    for kh in range(k):
        for kw in range(k):
            slabs.append(xp[:, kh: kh + stride * (ho - 1) + 1: stride,
                             kw: kw + stride * (wo - 1) + 1: stride, :])
    patches = jnp.concatenate(slabs, axis=-1).reshape(n * ho * wo, k * k * cin)
    out = pallas_matmul_bias(patches, wp, bp, cout, apply_silu=apply_silu,
                             out_dtype=out_dtype)
    return out.reshape(n, ho, wo, cout)


def conv_transpose2d_decoder(x, w_stack, bias_p, cout, *, k, stride, padding,
                             output_padding, apply_silu, out_dtype):
    """PyTorch ConvTranspose2d via sub-pixel phase decomposition (no col2im)."""
    n, h, w_, cin = x.shape
    s, p = stride, padding
    ho = (h - 1) * s - 2 * p + k + output_padding
    wo = (w_ - 1) * s - 2 * p + k + output_padding
    # TODO(synk): assumes ho % s == 0 (true for stride=2/output_padding=1);
    # ragged phases would be needed for other output sizes.
    assert ho % s == 0 and wo % s == 0
    hop, wop = ho // s, wo // s

    dhs = [d for a in range(s) for (_, d) in _taps_1d(a, k, s, p)]
    dws = [d for b in range(s) for (_, d) in _taps_1d(b, k, s, p)]
    pt, pb = max(0, -min(dhs)), max(0, max(dhs) + hop - h)
    plft, prgt = max(0, -min(dws)), max(0, max(dws) + wop - w_)
    xpad = jnp.pad(x, ((0, 0), (pt, pb), (plft, prgt), (0, 0)))

    kp = w_stack.shape[1]
    a_list = []
    for a in range(s):
        th = _taps_1d(a, k, s, p)
        for b in range(s):
            tw = _taps_1d(b, k, s, p)
            slabs = [xpad[:, dh + pt: dh + pt + hop,
                             dw + plft: dw + plft + wop, :]
                     for (_, dh) in th for (_, dw) in tw]
            amat = jnp.concatenate(slabs, axis=-1)
            amat = amat.reshape(n * hop * wop, len(slabs) * cin)
            a_list.append(jnp.pad(amat, ((0, 0), (0, kp - amat.shape[1]))))
    a_stack = jnp.stack(a_list, axis=0)                 # (s*s, M, Kp)

    out = pallas_matmul_bias(a_stack, w_stack, bias_p, cout,
                             apply_silu=apply_silu, out_dtype=out_dtype)
    out = out.reshape(s, s, n, hop, wop, cout)
    out = jnp.transpose(out, (2, 3, 0, 4, 1, 5)).reshape(n, ho, wo, cout)
    return out


# ----------------------------------------------------------------------------
# VAE parameters + forward
# ----------------------------------------------------------------------------

def init_vae_params(key, *, input_dim, latent_dim, layers_encoder, kernel_size,
                    stride=2, padding=1, output_padding=1):
    k = kernel_size
    keys = jax.random.split(key, 4 * len(layers_encoder) + 8)
    ki = 0

    def nrm(shape, scale=0.1):
        nonlocal ki
        v = scale * jax.random.normal(keys[ki], shape, dtype=jnp.float32)
        ki += 1
        return v

    params = {"encoder": [], "decoder": []}
    current_dim = input_dim
    for (cin, cout) in layers_encoder:
        params["encoder"].append({"w": nrm((cout, cin, k, k)), "b": nrm((cout,))})
        current_dim = (current_dim - k + 2 * padding) // stride + 1
    cout_last = layers_encoder[-1][1]
    flattened = cout_last * current_dim * current_dim

    params["fc1"] = {"w": nrm((latent_dim, flattened)), "b": nrm((latent_dim,))}
    params["fc_log_var"] = {"w": nrm((latent_dim, flattened)),
                            "b": nrm((latent_dim,))}
    params["fc2"] = {"w": nrm((flattened, latent_dim)), "b": nrm((flattened,))}
    for (cin, cout) in layers_encoder[::-1]:
        # PyTorch ConvTranspose2d(in=cout, out=cin).weight: (in, out, k, k)
        params["decoder"].append({"w": nrm((cout, cin, k, k)), "b": nrm((cin,))})

    # Module's Unflatten(1, (a, input_dim//b, input_dim//b)) equals the exact
    # encoder spatial size for valid configurations — use the exact value.
    meta = {"kernel_size": k, "stride": stride, "padding": padding,
            "output_padding": output_padding, "latent_dim": latent_dim,
            "enc_dims": list(layers_encoder), "flattened": flattened,
            "unflatten": (cout_last, current_dim, current_dim)}
    return params, meta


def vae_forward(prep, meta, x, eps):
    k, s, p = meta["kernel_size"], meta["stride"], meta["padding"]
    op, latent = meta["output_padding"], meta["latent_dim"]
    enc_dims = meta["enc_dims"]
    bsz = x.shape[0]

    # ---- encoder (NHWC internally, bf16 activations) ----
    h = jnp.transpose(x, (0, 2, 3, 1)).astype(jnp.bfloat16)
    n_enc = len(prep["encoder"])
    for i, layer in enumerate(prep["encoder"]):
        h = conv2d_encoder(h, layer["w"], layer["b"], enc_dims[i][1], k=k,
                           stride=s, padding=p, apply_silu=(i != n_enc - 1),
                           out_dtype=jnp.bfloat16)
        # TODO(synk): nn.Dropout treated as identity (inference semantics).

    # ---- flatten (torch.Flatten of NCHW order) + fused heads + reparam ----
    flat = jnp.transpose(h, (0, 3, 1, 2)).reshape(bsz, -1)
    mu, log_var, z_pad = vae_heads_reparam(flat, prep["heads"], eps, latent)

    # ---- decoder ----
    d = pallas_matmul_bias(z_pad, prep["fc2"]["w"], prep["fc2"]["b"],
                           meta["flattened"], apply_silu=False,
                           out_dtype=jnp.bfloat16)
    c_last, sp_, _ = meta["unflatten"]
    d = jnp.transpose(d.reshape(bsz, c_last, sp_, sp_), (0, 2, 3, 1))

    dec_dims = enc_dims[::-1]
    n_dec = len(prep["decoder"])
    for i, layer in enumerate(prep["decoder"]):
        last = (i == n_dec - 1)
        d = conv_transpose2d_decoder(
            d, layer["w"], layer["b"], dec_dims[i][0], k=k, stride=s,
            padding=p, output_padding=op, apply_silu=not last,
            out_dtype=jnp.float32 if last else jnp.bfloat16)

    decoded = jnp.transpose(d, (0, 3, 1, 2))            # back to NCHW
    return decoded, mu, log_var


# ----------------------------------------------------------------------------
# Pure-JAX f32 reference (independent path, for a sanity tolerance check)
# ----------------------------------------------------------------------------

def reference_forward(params, meta, x, eps):
    s, p = meta["stride"], meta["padding"]
    op, k = meta["output_padding"], meta["kernel_size"]
    h = x
    n_enc = len(params["encoder"])
    for i, layer in enumerate(params["encoder"]):
        h = lax.conv_general_dilated(h, layer["w"], (s, s), [(p, p), (p, p)],
                                     dimension_numbers=("NCHW", "OIHW", "NCHW"))
        h = h + layer["b"][None, :, None, None]
        if i != n_enc - 1:
            h = h * jax.nn.sigmoid(h)
    flat = h.reshape(h.shape[0], -1)
    mu = flat @ params["fc1"]["w"].T + params["fc1"]["b"]
    lv = flat @ params["fc_log_var"]["w"].T + params["fc_log_var"]["b"]
    z = mu + eps * jnp.exp(0.5 * lv)
    d = z @ params["fc2"]["w"].T + params["fc2"]["b"]
    c_last, sp_, _ = meta["unflatten"]
    d = d.reshape(-1, c_last, sp_, sp_)
    n_dec = len(params["decoder"])
    for i, layer in enumerate(params["decoder"]):
        w_conv = jnp.transpose(jnp.flip(layer["w"], (2, 3)), (1, 0, 2, 3))
        d = lax.conv_general_dilated(
            d, w_conv, window_strides=(1, 1),
            padding=[(k - 1 - p, k - 1 - p + op), (k - 1 - p, k - 1 - p + op)],
            lhs_dilation=(s, s),
            dimension_numbers=("NCHW", "OIHW", "NCHW"))
        d = d + layer["b"][None, :, None, None]
        if i != n_dec - 1:
            d = d * jax.nn.sigmoid(d)
    return d, mu, lv


# ----------------------------------------------------------------------------
# main
# ----------------------------------------------------------------------------

if __name__ == "__main__":
    INPUT_DIM = 16
    LATENT_DIM = 6
    LAYERS_ENCODER = [(3, 4), (4, 8)]
    KERNEL_SIZE = 3
    BATCH = 2

    root = jax.random.PRNGKey(0)
    k_params, k_x, k_eps = jax.random.split(root, 3)

    params, meta = init_vae_params(
        k_params, input_dim=INPUT_DIM, latent_dim=LATENT_DIM,
        layers_encoder=LAYERS_ENCODER, kernel_size=KERNEL_SIZE)
    prep = prepare_params(params, meta)      # one-time weight layout (hoisted)

    x = jax.random.normal(k_x, (BATCH, 3, INPUT_DIM, INPUT_DIM),
                          dtype=jnp.float32)
    eps = jax.random.normal(k_eps, (BATCH, LATENT_DIM), dtype=jnp.float32)

    fwd = jax.jit(lambda pp, xx, ee: vae_forward(pp, meta, xx, ee))
    decoded, mu, log_var = fwd(prep, x, eps)
    jax.block_until_ready((decoded, mu, log_var))

    assert decoded.shape == (BATCH, 3, INPUT_DIM, INPUT_DIM), decoded.shape
    assert mu.shape == (BATCH, LATENT_DIM), mu.shape
    assert log_var.shape == (BATCH, LATENT_DIM), log_var.shape
    assert bool(jnp.all(jnp.isfinite(decoded)))

    ref_dec, ref_mu, ref_lv = reference_forward(params, meta, x, eps)

    def _check(name, got, ref):
        err = float(jnp.max(jnp.abs(got.astype(jnp.float32) - ref)))
        tol = 1e-2 + 3e-2 * float(jnp.max(jnp.abs(ref)))
        assert err <= tol, f"{name}: max|err|={err:.4g} > tol={tol:.4g}"

    _check("decoded", decoded, ref_dec)
    _check("mu", mu, ref_mu)
    _check("log_var", log_var, ref_lv)

    print("KERNEL_OK")
</pallas_src>

<mosaic_0001>
module attributes {stable_mosaic.version = 11 : i64} {
  func.func @_mm_bias_act_kernel(%arg0: i32, %arg1: i32, %arg2: i32, %arg3: i32, %arg4: memref<1x128x128xbf16, #tpu.memory_space<vmem>>, %arg5: memref<1x128x128xbf16, #tpu.memory_space<vmem>>, %arg6: memref<1x128xf32, #tpu.memory_space<vmem>>, %arg7: memref<1x128x128xbf16, #tpu.memory_space<vmem>>, %arg8: memref<128x128xf32, #tpu.memory_space<vmem>>) attributes {dimension_semantics = [#tpu.dimension_semantics<parallel>, #tpu.dimension_semantics<parallel>, #tpu.dimension_semantics<parallel>, #tpu.dimension_semantics<arbitrary>], iteration_bounds = array<i64: 1, 1, 1, 1>, scalar_prefetch = 0 : i64, scratch_operands = 1 : i64, tpu.core_type = #tpu.core_type<tc>, window_params = [{transform_indices = @transform_0, window_bounds = array<i64: 1, 128, 128>}, {transform_indices = @transform_1, window_bounds = array<i64: 1, 128, 128>}, {transform_indices = @transform_2, window_bounds = array<i64: 1, 128>}, {transform_indices = @transform_3, window_bounds = array<i64: 1, 128, 128>}]} {
    %c0_i32 = arith.constant 0 : i32
    %0 = arith.cmpi eq, %arg3, %c0_i32 : i32
    %1 = arith.extui %0 : i1 to i32
    %c0_i32_0 = arith.constant 0 : i32
    %2 = arith.cmpi ne, %1, %c0_i32_0 : i32
    scf.if %2 {
      %cst_12 = arith.constant 0.000000e+00 : f32
      %14 = vector.broadcast %cst_12 : f32 to vector<128x128xf32>
      %c0_13 = arith.constant 0 : index
      %c0_14 = arith.constant 0 : index
      %15 = vector.load %arg8[%c0_13, %c0_14] : memref<128x128xf32, #tpu.memory_space<vmem>>, vector<128x128xf32>
      tpu.vector_store %arg8[%c0_13, %c0_14], %14 {strides = array<i32>} : memref<128x128xf32, #tpu.memory_space<vmem>>, vector<128x128xf32>,
    } else {
    }
    %c0 = arith.constant 0 : index
    %c0_1 = arith.constant 0 : index
    %3 = vector.load %arg8[%c0, %c0_1] : memref<128x128xf32, #tpu.memory_space<vmem>>, vector<128x128xf32>
    %c0_2 = arith.constant 0 : index
    %c0_3 = arith.constant 0 : index
    %c0_4 = arith.constant 0 : index
    %4 = vector.load %arg4[%c0_2, %c0_3, %c0_4] : memref<1x128x128xbf16, #tpu.memory_space<vmem>>, vector<1x128x128xbf16>
    %5 = vector.shape_cast %4 : vector<1x128x128xbf16> to vector<128x128xbf16>
    %c0_5 = arith.constant 0 : index
    %c0_6 = arith.constant 0 : index
    %c0_7 = arith.constant 0 : index
    %6 = vector.load %arg5[%c0_5, %c0_6, %c0_7] : memref<1x128x128xbf16, #tpu.memory_space<vmem>>, vector<1x128x128xbf16>
    %7 = vector.shape_cast %6 : vector<1x128x128xbf16> to vector<128x128xbf16>
    %cst = arith.constant dense<0.000000e+00> : vector<128x128xf32>
    %8 = tpu.matmul %5, %7, %cst {dimension_numbers = #tpu.dot_dimension_numbers<[1], [0], [0], [1], [0, 0, 1, 1], [], []>} : vector<128x128xbf16>, vector<128x128xbf16>, vector<128x128xf32> -> vector<128x128xf32>
    %9 = arith.addf %3, %8 : vector<128x128xf32>
    %c0_8 = arith.constant 0 : index
    %c0_9 = arith.constant 0 : index
    %10 = vector.load %arg8[%c0_8, %c0_9] : memref<128x128xf32, #tpu.memory_space<vmem>>, vector<128x128xf32>
    tpu.vector_store %arg8[%c0_8, %c0_9], %9 {strides = array<i32>} : memref<128x128xf32, #tpu.memory_space<vmem>>, vector<128x128xf32>,
    %c0_i32_10 = arith.constant 0 : i32
    %11 = arith.cmpi eq, %arg3, %c0_i32_10 : i32
    %12 = arith.extui %11 : i1 to i32
    %c0_i32_11 = arith.constant 0 : i32
    %13 = arith.cmpi ne, %12, %c0_i32_11 : i32
    scf.if %13 {
      %c0_12 = arith.constant 0 : index
      %c0_13 = arith.constant 0 : index
      %14 = vector.load %arg8[%c0_12, %c0_13] : memref<128x128xf32, #tpu.memory_space<vmem>>, vector<128x128xf32>
      %c0_14 = arith.constant 0 : index
      %c0_15 = arith.constant 0 : index
      %15 = vector.load %arg6[%c0_14, %c0_15] : memref<1x128xf32, #tpu.memory_space<vmem>>, vector<1x128xf32>
      %16 = vector.broadcast %15 : vector<1x128xf32> to vector<128x128xf32>
      %17 = arith.addf %14, %16 : vector<128x128xf32>
      %18 = arith.negf %17 : vector<128x128xf32>
      %19 = math.exp %18 : vector<128x128xf32>
      %cst_16 = arith.constant 1.000000e+00 : f32
      %20 = vector.broadcast %cst_16 : f32 to vector<128x128xf32>
      %21 = arith.addf %20, %19 : vector<128x128xf32>
      %22 = arith.divf %20, %21 : vector<128x128xf32>
      %23 = arith.mulf %17, %22 : vector<128x128xf32>
      %24 = arith.truncf %23 : vector<128x128xf32> to vector<128x128xbf16>
      %c0_17 = arith.constant 0 : index
      %c0_18 = arith.constant 0 : index
      %c0_19 = arith.constant 0 : index
      %25 = vector.load %arg7[%c0_17, %c0_18, %c0_19] : memref<1x128x128xbf16, #tpu.memory_space<vmem>>, vector<1x128x128xbf16>
      %26 = vector.shape_cast %25 : vector<1x128x128xbf16> to vector<128x128xbf16>
      %27 = vector.shape_cast %24 : vector<128x128xbf16> to vector<1x128x128xbf16>
      tpu.vector_store %arg7[%c0_17, %c0_18, %c0_19], %27 {strides = array<i32>} : memref<1x128x128xbf16, #tpu.memory_space<vmem>>, vector<1x128x128xbf16>,
    } else {
    }
    return
  }
  func.func @transform_0(%arg0: i32, %arg1: i32, %arg2: i32, %arg3: i32) -> (i32, i32, i32) {
    %c0_i32 = arith.constant 0 : i32
    return %arg0, %arg1, %arg3 : i32, i32, i32
  }
  func.func @transform_1(%arg0: i32, %arg1: i32, %arg2: i32, %arg3: i32) -> (i32, i32, i32) {
    %c0_i32 = arith.constant 0 : i32
    return %arg0, %arg3, %arg2 : i32, i32, i32
  }
  func.func @transform_2(%arg0: i32, %arg1: i32, %arg2: i32, %arg3: i32) -> (i32, i32) {
    %c0_i32 = arith.constant 0 : i32
    %c0_i32_0 = arith.constant 0 : i32
    return %c0_i32, %arg2 : i32, i32
  }
  func.func @transform_3(%arg0: i32, %arg1: i32, %arg2: i32, %arg3: i32) -> (i32, i32, i32) {
    %c0_i32 = arith.constant 0 : i32
    return %arg0, %arg1, %arg2 : i32, i32, i32
  }
}

module attributes {stable_mosaic.version = 11 : i64} {
  func.func @_mm_bias_act_kernel(%arg0: i32, %arg1: i32, %arg2: i32, %arg3: i32, %arg4: memref<1x32x128xbf16, #tpu.memory_space<vmem>>, %arg5: memref<1x128x128xbf16, #tpu.memory_space<vmem>>, %arg6: memref<1x128xf32, #tpu.memory_space<vmem>>, %arg7: memref<1x32x128xbf16, #tpu.memory_space<vmem>>, %arg8: memref<32x128xf32, #tpu.memory_space<vmem>>) attributes {dimension_semantics = [#tpu.dimension_semantics<parallel>, #tpu.dimension_semantics<parallel>, #tpu.dimension_semantics<parallel>, #tpu.dimension_semantics<arbitrary>], iteration_bounds = array<i64: 1, 1, 1, 1>, scalar_prefetch = 0 : i64, scratch_operands = 1 : i64, tpu.core_type = #tpu.core_type<tc>, window_params = [{transform_indices = @transform_0, window_bounds = array<i64: 1, 32, 128>}, {transform_indices = @transform_1, window_bounds = array<i64: 1, 128, 128>}, {transform_indices = @transform_2, window_bounds = array<i64: 1, 128>}, {transform_indices = @transform_3, window_bounds = array<i64: 1, 32, 128>}]} {
    %c0_i32 = arith.constant 0 : i32
    %0 = arith.cmpi eq, %arg3, %c0_i32 : i32
    %1 = arith.extui %0 : i1 to i32
    %c0_i32_0 = arith.constant 0 : i32
    %2 = arith.cmpi ne, %1, %c0_i32_0 : i32
    scf.if %2 {
      %cst_12 = arith.constant 0.000000e+00 : f32
      %14 = vector.broadcast %cst_12 : f32 to vector<32x128xf32>
      %c0_13 = arith.constant 0 : index
      %c0_14 = arith.constant 0 : index
      %15 = vector.load %arg8[%c0_13, %c0_14] : memref<32x128xf32, #tpu.memory_space<vmem>>, vector<32x128xf32>
      tpu.vector_store %arg8[%c0_13, %c0_14], %14 {strides = array<i32>} : memref<32x128xf32, #tpu.memory_space<vmem>>, vector<32x128xf32>,
    } else {
    }
    %c0 = arith.constant 0 : index
    %c0_1 = arith.constant 0 : index
    %3 = vector.load %arg8[%c0, %c0_1] : memref<32x128xf32, #tpu.memory_space<vmem>>, vector<32x128xf32>
    %c0_2 = arith.constant 0 : index
    %c0_3 = arith.constant 0 : index
    %c0_4 = arith.constant 0 : index
    %4 = vector.load %arg4[%c0_2, %c0_3, %c0_4] : memref<1x32x128xbf16, #tpu.memory_space<vmem>>, vector<1x32x128xbf16>
    %5 = vector.shape_cast %4 : vector<1x32x128xbf16> to vector<32x128xbf16>
    %c0_5 = arith.constant 0 : index
    %c0_6 = arith.constant 0 : index
    %c0_7 = arith.constant 0 : index
    %6 = vector.load %arg5[%c0_5, %c0_6, %c0_7] : memref<1x128x128xbf16, #tpu.memory_space<vmem>>, vector<1x128x128xbf16>
    %7 = vector.shape_cast %6 : vector<1x128x128xbf16> to vector<128x128xbf16>
    %cst = arith.constant dense<0.000000e+00> : vector<32x128xf32>
    %8 = tpu.matmul %5, %7, %cst {dimension_numbers = #tpu.dot_dimension_numbers<[1], [0], [0], [1], [0, 0, 1, 1], [], []>} : vector<32x128xbf16>, vector<128x128xbf16>, vector<32x128xf32> -> vector<32x128xf32>
    %9 = arith.addf %3, %8 : vector<32x128xf32>
    %c0_8 = arith.constant 0 : index
    %c0_9 = arith.constant 0 : index
    %10 = vector.load %arg8[%c0_8, %c0_9] : memref<32x128xf32, #tpu.memory_space<vmem>>, vector<32x128xf32>
    tpu.vector_store %arg8[%c0_8, %c0_9], %9 {strides = array<i32>} : memref<32x128xf32, #tpu.memory_space<vmem>>, vector<32x128xf32>,
    %c0_i32_10 = arith.constant 0 : i32
    %11 = arith.cmpi eq, %arg3, %c0_i32_10 : i32
    %12 = arith.extui %11 : i1 to i32
    %c0_i32_11 = arith.constant 0 : i32
    %13 = arith.cmpi ne, %12, %c0_i32_11 : i32
    scf.if %13 {
      %c0_12 = arith.constant 0 : index
      %c0_13 = arith.constant 0 : index
      %14 = vector.load %arg8[%c0_12, %c0_13] : memref<32x128xf32, #tpu.memory_space<vmem>>, vector<32x128xf32>
      %c0_14 = arith.constant 0 : index
      %c0_15 = arith.constant 0 : index
      %15 = vector.load %arg6[%c0_14, %c0_15] : memref<1x128xf32, #tpu.memory_space<vmem>>, vector<1x128xf32>
      %16 = vector.broadcast %15 : vector<1x128xf32> to vector<32x128xf32>
      %17 = arith.addf %14, %16 : vector<32x128xf32>
      %18 = arith.truncf %17 : vector<32x128xf32> to vector<32x128xbf16>
      %c0_16 = arith.constant 0 : index
      %c0_17 = arith.constant 0 : index
      %c0_18 = arith.constant 0 : index
      %19 = vector.load %arg7[%c0_16, %c0_17, %c0_18] : memref<1x32x128xbf16, #tpu.memory_space<vmem>>, vector<1x32x128xbf16>
      %20 = vector.shape_cast %19 : vector<1x32x128xbf16> to vector<32x128xbf16>
      %21 = vector.shape_cast %18 : vector<32x128xbf16> to vector<1x32x128xbf16>
      tpu.vector_store %arg7[%c0_16, %c0_17, %c0_18], %21 {strides = array<i32>} : memref<1x32x128xbf16, #tpu.memory_space<vmem>>, vector<1x32x128xbf16>,
    } else {
    }
    return
  }
  func.func @transform_0(%arg0: i32, %arg1: i32, %arg2: i32, %arg3: i32) -> (i32, i32, i32) {
    %c0_i32 = arith.constant 0 : i32
    return %arg0, %arg1, %arg3 : i32, i32, i32
  }
  func.func @transform_1(%arg0: i32, %arg1: i32, %arg2: i32, %arg3: i32) -> (i32, i32, i32) {
    %c0_i32 = arith.constant 0 : i32
    return %arg0, %arg3, %arg2 : i32, i32, i32
  }
  func.func @transform_2(%arg0: i32, %arg1: i32, %arg2: i32, %arg3: i32) -> (i32, i32) {
    %c0_i32 = arith.constant 0 : i32
    %c0_i32_0 = arith.constant 0 : i32
    return %c0_i32, %arg2 : i32, i32
  }
  func.func @transform_3(%arg0: i32, %arg1: i32, %arg2: i32, %arg3: i32) -> (i32, i32, i32) {
    %c0_i32 = arith.constant 0 : i32
    return %arg0, %arg1, %arg2 : i32, i32, i32
  }
}

module attributes {stable_mosaic.version = 11 : i64} {
  func.func @_vae_heads_kernel(%arg0: i32, %arg1: memref<16x128xbf16, #tpu.memory_space<vmem>>, %arg2: memref<128x128xbf16, #tpu.memory_space<vmem>>, %arg3: memref<1x128xf32, #tpu.memory_space<vmem>>, %arg4: memref<16x128xf32, #tpu.memory_space<vmem>>, %arg5: memref<16x128xf32, #tpu.memory_space<vmem>>, %arg6: memref<16x128xf32, #tpu.memory_space<vmem>>, %arg7: memref<16x128xf32, #tpu.memory_space<vmem>>, %arg8: memref<16x128xf32, #tpu.memory_space<vmem>>) attributes {dimension_semantics = [#tpu.dimension_semantics<arbitrary>], iteration_bounds = array<i64: 1>, scalar_prefetch = 0 : i64, scratch_operands = 1 : i64, tpu.core_type = #tpu.core_type<tc>, window_params = [{transform_indices = @transform_0, window_bounds = array<i64: 16, 128>}, {transform_indices = @transform_1, window_bounds = array<i64: 128, 128>}, {pipeline_mode = #tpu.pipeline_mode<synchronous>, transform_indices = @transform_2, window_bounds = array<i64: 1, 128>}, {pipeline_mode = #tpu.pipeline_mode<synchronous>, transform_indices = @transform_3, window_bounds = array<i64: 16, 128>}, {pipeline_mode = #tpu.pipeline_mode<synchronous>, transform_indices = @transform_4, window_bounds = array<i64: 16, 128>}, {pipeline_mode = #tpu.pipeline_mode<synchronous>, transform_indices = @transform_5, window_bounds = array<i64: 16, 128>}, {pipeline_mode = #tpu.pipeline_mode<synchronous>, transform_indices = @transform_6, window_bounds = array<i64: 16, 128>}]} {
    %c0_i32 = arith.constant 0 : i32
    %0 = arith.cmpi eq, %arg0, %c0_i32 : i32
    %1 = arith.extui %0 : i1 to i32
    %c0_i32_0 = arith.constant 0 : i32
    %2 = arith.cmpi ne, %1, %c0_i32_0 : i32
    scf.if %2 {
      %cst_10 = arith.constant 0.000000e+00 : f32
      %12 = vector.broadcast %cst_10 : f32 to vector<16x128xf32>
      %c0_11 = arith.constant 0 : index
      %c0_12 = arith.constant 0 : index
      %13 = vector.load %arg8[%c0_11, %c0_12] : memref<16x128xf32, #tpu.memory_space<vmem>>, vector<16x128xf32>
      tpu.vector_store %arg8[%c0_11, %c0_12], %12 {strides = array<i32>} : memref<16x128xf32, #tpu.memory_space<vmem>>, vector<16x128xf32>,
    } else {
    }
    %c0 = arith.constant 0 : index
    %c0_1 = arith.constant 0 : index
    %3 = vector.load %arg8[%c0, %c0_1] : memref<16x128xf32, #tpu.memory_space<vmem>>, vector<16x128xf32>
    %c0_2 = arith.constant 0 : index
    %c0_3 = arith.constant 0 : index
    %4 = vector.load %arg1[%c0_2, %c0_3] : memref<16x128xbf16, #tpu.memory_space<vmem>>, vector<16x128xbf16>
    %c0_4 = arith.constant 0 : index
    %c0_5 = arith.constant 0 : index
    %5 = vector.load %arg2[%c0_4, %c0_5] : memref<128x128xbf16, #tpu.memory_space<vmem>>, vector<128x128xbf16>
    %cst = arith.constant dense<0.000000e+00> : vector<16x128xf32>
    %6 = tpu.matmul %4, %5, %cst {dimension_numbers = #tpu.dot_dimension_numbers<[1], [0], [0], [1], [0, 0, 1, 1], [], []>} : vector<16x128xbf16>, vector<128x128xbf16>, vector<16x128xf32> -> vector<16x128xf32>
    %7 = arith.addf %3, %6 : vector<16x128xf32>
    %c0_6 = arith.constant 0 : index
    %c0_7 = arith.constant 0 : index
    %8 = vector.load %arg8[%c0_6, %c0_7] : memref<16x128xf32, #tpu.memory_space<vmem>>, vector<16x128xf32>
    tpu.vector_store %arg8[%c0_6, %c0_7], %7 {strides = array<i32>} : memref<16x128xf32, #tpu.memory_space<vmem>>, vector<16x128xf32>,
    %c0_i32_8 = arith.constant 0 : i32
    %9 = arith.cmpi eq, %arg0, %c0_i32_8 : i32
    %10 = arith.extui %9 : i1 to i32
    %c0_i32_9 = arith.constant 0 : i32
    %11 = arith.cmpi ne, %10, %c0_i32_9 : i32
    scf.if %11 {
      %c0_10 = arith.constant 0 : index
      %c0_11 = arith.constant 0 : index
      %12 = vector.load %arg8[%c0_10, %c0_11] : memref<16x128xf32, #tpu.memory_space<vmem>>, vector<16x128xf32>
      %c0_12 = arith.constant 0 : index
      %c0_13 = arith.constant 0 : index
      %13 = vector.load %arg3[%c0_12, %c0_13] : memref<1x128xf32, #tpu.memory_space<vmem>>, vector<1x128xf32>
      %14 = vector.broadcast %13 : vector<1x128xf32> to vector<16x128xf32>
      %15 = arith.addf %12, %14 : vector<16x128xf32>
      %16 = tpu.iota {dimensions = array<i32: 0>} : vector<128x128xi32>
      %17 = tpu.iota {dimensions = array<i32: 1>} : vector<128x128xi32>
      %c6_i32 = arith.constant 6 : i32
      %18 = vector.broadcast %c6_i32 : i32 to vector<128x128xi32>
      %19 = arith.cmpi slt, %17, %18 : vector<128x128xi32>
      %20 = arith.cmpi eq, %16, %17 : vector<128x128xi32>
      %21 = arith.andi %20, %19 : vector<128x128xi1>
      %22 = arith.extui %21 : vector<128x128xi1> to vector<128x128xi32>
      %23 = arith.sitofp %22 : vector<128x128xi32> to vector<128x128xf32>
      %c6_i32_14 = arith.constant 6 : i32
      %24 = vector.broadcast %c6_i32_14 : i32 to vector<128x128xi32>
      %25 = arith.addi %17, %24 : vector<128x128xi32>
      %26 = arith.cmpi eq, %16, %25 : vector<128x128xi32>
      %27 = arith.andi %26, %19 : vector<128x128xi1>
      %28 = arith.extui %27 : vector<128x128xi1> to vector<128x128xi32>
      %29 = arith.sitofp %28 : vector<128x128xi32> to vector<128x128xf32>
      %cst_15 = arith.constant dense<0.000000e+00> : vector<16x128xf32>
      %30 = tpu.matmul %15, %23, %cst_15 {dimension_numbers = #tpu.dot_dimension_numbers<[1], [0], [0], [1], [0, 0, 1, 1], [], []>} : vector<16x128xf32>, vector<128x128xf32>, vector<16x128xf32> -> vector<16x128xf32>
      %cst_16 = arith.constant dense<0.000000e+00> : vector<16x128xf32>
      %31 = tpu.matmul %15, %29, %cst_16 {dimension_numbers = #tpu.dot_dimension_numbers<[1], [0], [0], [1], [0, 0, 1, 1], [], []>} : vector<16x128xf32>, vector<128x128xf32>, vector<16x128xf32> -> vector<16x128xf32>
      %c0_17 = arith.constant 0 : index
      %c0_18 = arith.constant 0 : index
      %32 = vector.load %arg4[%c0_17, %c0_18] : memref<16x128xf32, #tpu.memory_space<vmem>>, vector<16x128xf32>
      %cst_19 = arith.constant 5.000000e-01 : f32
      %33 = vector.broadcast %cst_19 : f32 to vector<16x128xf32>
      %34 = arith.mulf %33, %31 : vector<16x128xf32>
      %35 = math.exp %34 : vector<16x128xf32>
      %36 = arith.mulf %32, %35 : vector<16x128xf32>
      %37 = arith.addf %30, %36 : vector<16x128xf32>
      %c0_20 = arith.constant 0 : index
      %c0_21 = arith.constant 0 : index
      %38 = vector.load %arg5[%c0_20, %c0_21] : memref<16x128xf32, #tpu.memory_space<vmem>>, vector<16x128xf32>
      tpu.vector_store %arg5[%c0_20, %c0_21], %30 {strides = array<i32>} : memref<16x128xf32, #tpu.memory_space<vmem>>, vector<16x128xf32>,
      %c0_22 = arith.constant 0 : index
      %c0_23 = arith.constant 0 : index
      %39 = vector.load %arg6[%c0_22, %c0_23] : memref<16x128xf32, #tpu.memory_space<vmem>>, vector<16x128xf32>
      tpu.vector_store %arg6[%c0_22, %c0_23], %31 {strides = array<i32>} : memref<16x128xf32, #tpu.memory_space<vmem>>, vector<16x128xf32>,
      %c0_24 = arith.constant 0 : index
      %c0_25 = arith.constant 0 : index
      %40 = vector.load %arg7[%c0_24, %c0_25] : memref<16x128xf32, #tpu.memory_space<vmem>>, vector<16x128xf32>
      tpu.vector_store %arg7[%c0_24, %c0_25], %37 {strides = array<i32>} : memref<16x128xf32, #tpu.memory_space<vmem>>, vector<16x128xf32>,
    } else {
    }
    return
  }
  func.func @transform_0(%arg0: i32) -> (i32, i32) {
    %c0_i32 = arith.constant 0 : i32
    %c0_i32_0 = arith.constant 0 : i32
    return %c0_i32, %arg0 : i32, i32
  }
  func.func @transform_1(%arg0: i32) -> (i32, i32) {
    %c0_i32 = arith.constant 0 : i32
    %c0_i32_0 = arith.constant 0 : i32
    return %arg0, %c0_i32 : i32, i32
  }
  func.func @transform_2(%arg0: i32) -> (i32, i32) {
    %c0_i32 = arith.constant 0 : i32
    %c0_i32_0 = arith.constant 0 : i32
    %c0_i32_1 = arith.constant 0 : i32
    return %c0_i32, %c0_i32_0 : i32, i32
  }
  func.func @transform_3(%arg0: i32) -> (i32, i32) {
    %c0_i32 = arith.constant 0 : i32
    %c0_i32_0 = arith.constant 0 : i32
    %c0_i32_1 = arith.constant 0 : i32
    return %c0_i32, %c0_i32_0 : i32, i32
  }
  func.func @transform_4(%arg0: i32) -> (i32, i32) {
    %c0_i32 = arith.constant 0 : i32
    %c0_i32_0 = arith.constant 0 : i32
    %c0_i32_1 = arith.constant 0 : i32
    return %c0_i32, %c0_i32_0 : i32, i32
  }
  func.func @transform_5(%arg0: i32) -> (i32, i32) {
    %c0_i32 = arith.constant 0 : i32
    %c0_i32_0 = arith.constant 0 : i32
    %c0_i32_1 = arith.constant 0 : i32
    return %c0_i32, %c0_i32_0 : i32, i32
  }
  func.func @transform_6(%arg0: i32) -> (i32, i32) {
    %c0_i32 = arith.constant 0 : i32
    %c0_i32_0 = arith.constant 0 : i32
    %c0_i32_1 = arith.constant 0 : i32
    return %c0_i32, %c0_i32_0 : i32, i32
  }
}

module attributes {stable_mosaic.version = 11 : i64} {
  func.func @_mm_bias_act_kernel(%arg0: i32, %arg1: i32, %arg2: i32, %arg3: i32, %arg4: memref<1x16x128xbf16, #tpu.memory_space<vmem>>, %arg5: memref<1x128x128xbf16, #tpu.memory_space<vmem>>, %arg6: memref<1x128xf32, #tpu.memory_space<vmem>>, %arg7: memref<1x16x128xbf16, #tpu.memory_space<vmem>>, %arg8: memref<16x128xf32, #tpu.memory_space<vmem>>) attributes {dimension_semantics = [#tpu.dimension_semantics<parallel>, #tpu.dimension_semantics<parallel>, #tpu.dimension_semantics<parallel>, #tpu.dimension_semantics<arbitrary>], iteration_bounds = array<i64: 1, 1, 1, 1>, scalar_prefetch = 0 : i64, scratch_operands = 1 : i64, tpu.core_type = #tpu.core_type<tc>, window_params = [{transform_indices = @transform_0, window_bounds = array<i64: 1, 16, 128>}, {transform_indices = @transform_1, window_bounds = array<i64: 1, 128, 128>}, {transform_indices = @transform_2, window_bounds = array<i64: 1, 128>}, {transform_indices = @transform_3, window_bounds = array<i64: 1, 16, 128>}]} {
    %c0_i32 = arith.constant 0 : i32
    %0 = arith.cmpi eq, %arg3, %c0_i32 : i32
    %1 = arith.extui %0 : i1 to i32
    %c0_i32_0 = arith.constant 0 : i32
    %2 = arith.cmpi ne, %1, %c0_i32_0 : i32
    scf.if %2 {
      %cst_12 = arith.constant 0.000000e+00 : f32
      %14 = vector.broadcast %cst_12 : f32 to vector<16x128xf32>
      %c0_13 = arith.constant 0 : index
      %c0_14 = arith.constant 0 : index
      %15 = vector.load %arg8[%c0_13, %c0_14] : memref<16x128xf32, #tpu.memory_space<vmem>>, vector<16x128xf32>
      tpu.vector_store %arg8[%c0_13, %c0_14], %14 {strides = array<i32>} : memref<16x128xf32, #tpu.memory_space<vmem>>, vector<16x128xf32>,
    } else {
    }
    %c0 = arith.constant 0 : index
    %c0_1 = arith.constant 0 : index
    %3 = vector.load %arg8[%c0, %c0_1] : memref<16x128xf32, #tpu.memory_space<vmem>>, vector<16x128xf32>
    %c0_2 = arith.constant 0 : index
    %c0_3 = arith.constant 0 : index
    %c0_4 = arith.constant 0 : index
    %4 = vector.load %arg4[%c0_2, %c0_3, %c0_4] : memref<1x16x128xbf16, #tpu.memory_space<vmem>>, vector<1x16x128xbf16>
    %5 = vector.shape_cast %4 : vector<1x16x128xbf16> to vector<16x128xbf16>
    %c0_5 = arith.constant 0 : index
    %c0_6 = arith.constant 0 : index
    %c0_7 = arith.constant 0 : index
    %6 = vector.load %arg5[%c0_5, %c0_6, %c0_7] : memref<1x128x128xbf16, #tpu.memory_space<vmem>>, vector<1x128x128xbf16>
    %7 = vector.shape_cast %6 : vector<1x128x128xbf16> to vector<128x128xbf16>
    %cst = arith.constant dense<0.000000e+00> : vector<16x128xf32>
    %8 = tpu.matmul %5, %7, %cst {dimension_numbers = #tpu.dot_dimension_numbers<[1], [0], [0], [1], [0, 0, 1, 1], [], []>} : vector<16x128xbf16>, vector<128x128xbf16>, vector<16x128xf32> -> vector<16x128xf32>
    %9 = arith.addf %3, %8 : vector<16x128xf32>
    %c0_8 = arith.constant 0 : index
    %c0_9 = arith.constant 0 : index
    %10 = vector.load %arg8[%c0_8, %c0_9] : memref<16x128xf32, #tpu.memory_space<vmem>>, vector<16x128xf32>
    tpu.vector_store %arg8[%c0_8, %c0_9], %9 {strides = array<i32>} : memref<16x128xf32, #tpu.memory_space<vmem>>, vector<16x128xf32>,
    %c0_i32_10 = arith.constant 0 : i32
    %11 = arith.cmpi eq, %arg3, %c0_i32_10 : i32
    %12 = arith.extui %11 : i1 to i32
    %c0_i32_11 = arith.constant 0 : i32
    %13 = arith.cmpi ne, %12, %c0_i32_11 : i32
    scf.if %13 {
      %c0_12 = arith.constant 0 : index
      %c0_13 = arith.constant 0 : index
      %14 = vector.load %arg8[%c0_12, %c0_13] : memref<16x128xf32, #tpu.memory_space<vmem>>, vector<16x128xf32>
      %c0_14 = arith.constant 0 : index
      %c0_15 = arith.constant 0 : index
      %15 = vector.load %arg6[%c0_14, %c0_15] : memref<1x128xf32, #tpu.memory_space<vmem>>, vector<1x128xf32>
      %16 = vector.broadcast %15 : vector<1x128xf32> to vector<16x128xf32>
      %17 = arith.addf %14, %16 : vector<16x128xf32>
      %18 = arith.truncf %17 : vector<16x128xf32> to vector<16x128xbf16>
      %c0_16 = arith.constant 0 : index
      %c0_17 = arith.constant 0 : index
      %c0_18 = arith.constant 0 : index
      %19 = vector.load %arg7[%c0_16, %c0_17, %c0_18] : memref<1x16x128xbf16, #tpu.memory_space<vmem>>, vector<1x16x128xbf16>
      %20 = vector.shape_cast %19 : vector<1x16x128xbf16> to vector<16x128xbf16>
      %21 = vector.shape_cast %18 : vector<16x128xbf16> to vector<1x16x128xbf16>
      tpu.vector_store %arg7[%c0_16, %c0_17, %c0_18], %21 {strides = array<i32>} : memref<1x16x128xbf16, #tpu.memory_space<vmem>>, vector<1x16x128xbf16>,
    } else {
    }
    return
  }
  func.func @transform_0(%arg0: i32, %arg1: i32, %arg2: i32, %arg3: i32) -> (i32, i32, i32) {
    %c0_i32 = arith.constant 0 : i32
    return %arg0, %arg1, %arg3 : i32, i32, i32
  }
  func.func @transform_1(%arg0: i32, %arg1: i32, %arg2: i32, %arg3: i32) -> (i32, i32, i32) {
    %c0_i32 = arith.constant 0 : i32
    return %arg0, %arg3, %arg2 : i32, i32, i32
  }
  func.func @transform_2(%arg0: i32, %arg1: i32, %arg2: i32, %arg3: i32) -> (i32, i32) {
    %c0_i32 = arith.constant 0 : i32
    %c0_i32_0 = arith.constant 0 : i32
    return %c0_i32, %arg2 : i32, i32
  }
  func.func @transform_3(%arg0: i32, %arg1: i32, %arg2: i32, %arg3: i32) -> (i32, i32, i32) {
    %c0_i32 = arith.constant 0 : i32
    return %arg0, %arg1, %arg2 : i32, i32, i32
  }
}

module attributes {stable_mosaic.version = 11 : i64} {
  func.func @_mm_bias_act_kernel(%arg0: i32, %arg1: i32, %arg2: i32, %arg3: i32, %arg4: memref<1x32x128xbf16, #tpu.memory_space<vmem>>, %arg5: memref<1x128x128xbf16, #tpu.memory_space<vmem>>, %arg6: memref<1x128xf32, #tpu.memory_space<vmem>>, %arg7: memref<1x32x128xbf16, #tpu.memory_space<vmem>>, %arg8: memref<32x128xf32, #tpu.memory_space<vmem>>) attributes {dimension_semantics = [#tpu.dimension_semantics<parallel>, #tpu.dimension_semantics<parallel>, #tpu.dimension_semantics<parallel>, #tpu.dimension_semantics<arbitrary>], iteration_bounds = array<i64: 4, 1, 1, 1>, scalar_prefetch = 0 : i64, scratch_operands = 1 : i64, tpu.core_type = #tpu.core_type<tc>, window_params = [{transform_indices = @transform_0, window_bounds = array<i64: 1, 32, 128>}, {transform_indices = @transform_1, window_bounds = array<i64: 1, 128, 128>}, {transform_indices = @transform_2, window_bounds = array<i64: 1, 128>}, {transform_indices = @transform_3, window_bounds = array<i64: 1, 32, 128>}]} {
    %c0_i32 = arith.constant 0 : i32
    %0 = arith.cmpi eq, %arg3, %c0_i32 : i32
    %1 = arith.extui %0 : i1 to i32
    %c0_i32_0 = arith.constant 0 : i32
    %2 = arith.cmpi ne, %1, %c0_i32_0 : i32
    scf.if %2 {
      %cst_12 = arith.constant 0.000000e+00 : f32
      %14 = vector.broadcast %cst_12 : f32 to vector<32x128xf32>
      %c0_13 = arith.constant 0 : index
      %c0_14 = arith.constant 0 : index
      %15 = vector.load %arg8[%c0_13, %c0_14] : memref<32x128xf32, #tpu.memory_space<vmem>>, vector<32x128xf32>
      tpu.vector_store %arg8[%c0_13, %c0_14], %14 {strides = array<i32>} : memref<32x128xf32, #tpu.memory_space<vmem>>, vector<32x128xf32>,
    } else {
    }
    %c0 = arith.constant 0 : index
    %c0_1 = arith.constant 0 : index
    %3 = vector.load %arg8[%c0, %c0_1] : memref<32x128xf32, #tpu.memory_space<vmem>>, vector<32x128xf32>
    %c0_2 = arith.constant 0 : index
    %c0_3 = arith.constant 0 : index
    %c0_4 = arith.constant 0 : index
    %4 = vector.load %arg4[%c0_2, %c0_3, %c0_4] : memref<1x32x128xbf16, #tpu.memory_space<vmem>>, vector<1x32x128xbf16>
    %5 = vector.shape_cast %4 : vector<1x32x128xbf16> to vector<32x128xbf16>
    %c0_5 = arith.constant 0 : index
    %c0_6 = arith.constant 0 : index
    %c0_7 = arith.constant 0 : index
    %6 = vector.load %arg5[%c0_5, %c0_6, %c0_7] : memref<1x128x128xbf16, #tpu.memory_space<vmem>>, vector<1x128x128xbf16>
    %7 = vector.shape_cast %6 : vector<1x128x128xbf16> to vector<128x128xbf16>
    %cst = arith.constant dense<0.000000e+00> : vector<32x128xf32>
    %8 = tpu.matmul %5, %7, %cst {dimension_numbers = #tpu.dot_dimension_numbers<[1], [0], [0], [1], [0, 0, 1, 1], [], []>} : vector<32x128xbf16>, vector<128x128xbf16>, vector<32x128xf32> -> vector<32x128xf32>
    %9 = arith.addf %3, %8 : vector<32x128xf32>
    %c0_8 = arith.constant 0 : index
    %c0_9 = arith.constant 0 : index
    %10 = vector.load %arg8[%c0_8, %c0_9] : memref<32x128xf32, #tpu.memory_space<vmem>>, vector<32x128xf32>
    tpu.vector_store %arg8[%c0_8, %c0_9], %9 {strides = array<i32>} : memref<32x128xf32, #tpu.memory_space<vmem>>, vector<32x128xf32>,
    %c0_i32_10 = arith.constant 0 : i32
    %11 = arith.cmpi eq, %arg3, %c0_i32_10 : i32
    %12 = arith.extui %11 : i1 to i32
    %c0_i32_11 = arith.constant 0 : i32
    %13 = arith.cmpi ne, %12, %c0_i32_11 : i32
    scf.if %13 {
      %c0_12 = arith.constant 0 : index
      %c0_13 = arith.constant 0 : index
      %14 = vector.load %arg8[%c0_12, %c0_13] : memref<32x128xf32, #tpu.memory_space<vmem>>, vector<32x128xf32>
      %c0_14 = arith.constant 0 : index
      %c0_15 = arith.constant 0 : index
      %15 = vector.load %arg6[%c0_14, %c0_15] : memref<1x128xf32, #tpu.memory_space<vmem>>, vector<1x128xf32>
      %16 = vector.broadcast %15 : vector<1x128xf32> to vector<32x128xf32>
      %17 = arith.addf %14, %16 : vector<32x128xf32>
      %18 = arith.negf %17 : vector<32x128xf32>
      %19 = math.exp %18 : vector<32x128xf32>
      %cst_16 = arith.constant 1.000000e+00 : f32
      %20 = vector.broadcast %cst_16 : f32 to vector<32x128xf32>
      %21 = arith.addf %20, %19 : vector<32x128xf32>
      %22 = arith.divf %20, %21 : vector<32x128xf32>
      %23 = arith.mulf %17, %22 : vector<32x128xf32>
      %24 = arith.truncf %23 : vector<32x128xf32> to vector<32x128xbf16>
      %c0_17 = arith.constant 0 : index
      %c0_18 = arith.constant 0 : index
      %c0_19 = arith.constant 0 : index
      %25 = vector.load %arg7[%c0_17, %c0_18, %c0_19] : memref<1x32x128xbf16, #tpu.memory_space<vmem>>, vector<1x32x128xbf16>
      %26 = vector.shape_cast %25 : vector<1x32x128xbf16> to vector<32x128xbf16>
      %27 = vector.shape_cast %24 : vector<32x128xbf16> to vector<1x32x128xbf16>
      tpu.vector_store %arg7[%c0_17, %c0_18, %c0_19], %27 {strides = array<i32>} : memref<1x32x128xbf16, #tpu.memory_space<vmem>>, vector<1x32x128xbf16>,
    } else {
    }
    return
  }
  func.func @transform_0(%arg0: i32, %arg1: i32, %arg2: i32, %arg3: i32) -> (i32, i32, i32) {
    %c0_i32 = arith.constant 0 : i32
    return %arg0, %arg1, %arg3 : i32, i32, i32
  }
  func.func @transform_1(%arg0: i32, %arg1: i32, %arg2: i32, %arg3: i32) -> (i32, i32, i32) {
    %c0_i32 = arith.constant 0 : i32
    return %arg0, %arg3, %arg2 : i32, i32, i32
  }
  func.func @transform_2(%arg0: i32, %arg1: i32, %arg2: i32, %arg3: i32) -> (i32, i32) {
    %c0_i32 = arith.constant 0 : i32
    %c0_i32_0 = arith.constant 0 : i32
    return %c0_i32, %arg2 : i32, i32
  }
  func.func @transform_3(%arg0: i32, %arg1: i32, %arg2: i32, %arg3: i32) -> (i32, i32, i32) {
    %c0_i32 = arith.constant 0 : i32
    return %arg0, %arg1, %arg2 : i32, i32, i32
  }
}

module attributes {stable_mosaic.version = 11 : i64} {
  func.func @_mm_bias_act_kernel(%arg0: i32, %arg1: i32, %arg2: i32, %arg3: i32, %arg4: memref<1x128x128xbf16, #tpu.memory_space<vmem>>, %arg5: memref<1x128x128xbf16, #tpu.memory_space<vmem>>, %arg6: memref<1x128xf32, #tpu.memory_space<vmem>>, %arg7: memref<1x128x128xf32, #tpu.memory_space<vmem>>, %arg8: memref<128x128xf32, #tpu.memory_space<vmem>>) attributes {dimension_semantics = [#tpu.dimension_semantics<parallel>, #tpu.dimension_semantics<parallel>, #tpu.dimension_semantics<parallel>, #tpu.dimension_semantics<arbitrary>], iteration_bounds = array<i64: 4, 1, 1, 1>, scalar_prefetch = 0 : i64, scratch_operands = 1 : i64, tpu.core_type = #tpu.core_type<tc>, window_params = [{transform_indices = @transform_0, window_bounds = array<i64: 1, 128, 128>}, {transform_indices = @transform_1, window_bounds = array<i64: 1, 128, 128>}, {transform_indices = @transform_2, window_bounds = array<i64: 1, 128>}, {transform_indices = @transform_3, window_bounds = array<i64: 1, 128, 128>}]} {
    %c0_i32 = arith.constant 0 : i32
    %0 = arith.cmpi eq, %arg3, %c0_i32 : i32
    %1 = arith.extui %0 : i1 to i32
    %c0_i32_0 = arith.constant 0 : i32
    %2 = arith.cmpi ne, %1, %c0_i32_0 : i32
    scf.if %2 {
      %cst_12 = arith.constant 0.000000e+00 : f32
      %14 = vector.broadcast %cst_12 : f32 to vector<128x128xf32>
      %c0_13 = arith.constant 0 : index
      %c0_14 = arith.constant 0 : index
      %15 = vector.load %arg8[%c0_13, %c0_14] : memref<128x128xf32, #tpu.memory_space<vmem>>, vector<128x128xf32>
      tpu.vector_store %arg8[%c0_13, %c0_14], %14 {strides = array<i32>} : memref<128x128xf32, #tpu.memory_space<vmem>>, vector<128x128xf32>,
    } else {
    }
    %c0 = arith.constant 0 : index
    %c0_1 = arith.constant 0 : index
    %3 = vector.load %arg8[%c0, %c0_1] : memref<128x128xf32, #tpu.memory_space<vmem>>, vector<128x128xf32>
    %c0_2 = arith.constant 0 : index
    %c0_3 = arith.constant 0 : index
    %c0_4 = arith.constant 0 : index
    %4 = vector.load %arg4[%c0_2, %c0_3, %c0_4] : memref<1x128x128xbf16, #tpu.memory_space<vmem>>, vector<1x128x128xbf16>
    %5 = vector.shape_cast %4 : vector<1x128x128xbf16> to vector<128x128xbf16>
    %c0_5 = arith.constant 0 : index
    %c0_6 = arith.constant 0 : index
    %c0_7 = arith.constant 0 : index
    %6 = vector.load %arg5[%c0_5, %c0_6, %c0_7] : memref<1x128x128xbf16, #tpu.memory_space<vmem>>, vector<1x128x128xbf16>
    %7 = vector.shape_cast %6 : vector<1x128x128xbf16> to vector<128x128xbf16>
    %cst = arith.constant dense<0.000000e+00> : vector<128x128xf32>
    %8 = tpu.matmul %5, %7, %cst {dimension_numbers = #tpu.dot_dimension_numbers<[1], [0], [0], [1], [0, 0, 1, 1], [], []>} : vector<128x128xbf16>, vector<128x128xbf16>, vector<128x128xf32> -> vector<128x128xf32>
    %9 = arith.addf %3, %8 : vector<128x128xf32>
    %c0_8 = arith.constant 0 : index
    %c0_9 = arith.constant 0 : index
    %10 = vector.load %arg8[%c0_8, %c0_9] : memref<128x128xf32, #tpu.memory_space<vmem>>, vector<128x128xf32>
    tpu.vector_store %arg8[%c0_8, %c0_9], %9 {strides = array<i32>} : memref<128x128xf32, #tpu.memory_space<vmem>>, vector<128x128xf32>,
    %c0_i32_10 = arith.constant 0 : i32
    %11 = arith.cmpi eq, %arg3, %c0_i32_10 : i32
    %12 = arith.extui %11 : i1 to i32
    %c0_i32_11 = arith.constant 0 : i32
    %13 = arith.cmpi ne, %12, %c0_i32_11 : i32
    scf.if %13 {
      %c0_12 = arith.constant 0 : index
      %c0_13 = arith.constant 0 : index
      %14 = vector.load %arg8[%c0_12, %c0_13] : memref<128x128xf32, #tpu.memory_space<vmem>>, vector<128x128xf32>
      %c0_14 = arith.constant 0 : index
      %c0_15 = arith.constant 0 : index
      %15 = vector.load %arg6[%c0_14, %c0_15] : memref<1x128xf32, #tpu.memory_space<vmem>>, vector<1x128xf32>
      %16 = vector.broadcast %15 : vector<1x128xf32> to vector<128x128xf32>
      %17 = arith.addf %14, %16 : vector<128x128xf32>
      %c0_16 = arith.constant 0 : index
      %c0_17 = arith.constant 0 : index
      %c0_18 = arith.constant 0 : index
      %18 = vector.load %arg7[%c0_16, %c0_17, %c0_18] : memref<1x128x128xf32, #tpu.memory_space<vmem>>, vector<1x128x128xf32>
      %19 = vector.shape_cast %18 : vector<1x128x128xf32> to vector<128x128xf32>
      %20 = vector.shape_cast %17 : vector<128x128xf32> to vector<1x128x128xf32>
      tpu.vector_store %arg7[%c0_16, %c0_17, %c0_18], %20 {strides = array<i32>} : memref<1x128x128xf32, #tpu.memory_space<vmem>>, vector<1x128x128xf32>,
    } else {
    }
    return
  }
  func.func @transform_0(%arg0: i32, %arg1: i32, %arg2: i32, %arg3: i32) -> (i32, i32, i32) {
    %c0_i32 = arith.constant 0 : i32
    return %arg0, %arg1, %arg3 : i32, i32, i32
  }
  func.func @transform_1(%arg0: i32, %arg1: i32, %arg2: i32, %arg3: i32) -> (i32, i32, i32) {
    %c0_i32 = arith.constant 0 : i32
    return %arg0, %arg3, %arg2 : i32, i32, i32
  }
  func.func @transform_2(%arg0: i32, %arg1: i32, %arg2: i32, %arg3: i32) -> (i32, i32) {
    %c0_i32 = arith.constant 0 : i32
    %c0_i32_0 = arith.constant 0 : i32
    return %c0_i32, %arg2 : i32, i32
  }
  func.func @transform_3(%arg0: i32, %arg1: i32, %arg2: i32, %arg3: i32) -> (i32, i32, i32) {
    %c0_i32 = arith.constant 0 : i32
    return %arg0, %arg1, %arg2 : i32, i32, i32
  }
}

</mosaic_0001>

<llo_original>
// kernel: _lambda_.6
$region0: #{_lambda_.6}
  #allocation0 [shape = 'u32[]', space=smem, size = 0x4, offset = 0x4, fixed_abs, tag = 'smem constant byte address 0x4 - core index']
  #allocation1 [shape = 'u32[144,128]{1,0:T(1,128)}', space=vmem, size = 0x12000, scoped, tag = 'internal scratch']
  #allocation2 [shape = 'f32[128,128]{1,0:T(8,128)}', space=vmem, size = 0x10000, scoped, tag = 'scratch operand']
  %s0 = inlined_call_operand.vmem [shape: bf16[1,128,128], index: 0, kind: input, shape index: {}]
  %s1 = inlined_call_operand.vmem [shape: bf16[1,128,128], index: 1, kind: input, shape index: {}]
  %s2 = inlined_call_operand.vmem [shape: f32[1,128], index: 2, kind: input, shape index: {}]
  %s3 = inlined_call_operand.vmem [shape: bf16[1,128,128], index: 3, kind: output, shape index: {}]
  %s4 = sld [smem:[#allocation0]]
  $region30: #{_lambda_.6} parent=0
    _
  %s6 = ssub.s32 1, %s4
  %s7 = scalar_select 0, %s6, %s4
  // Predicated region
  $region2: #{_lambda_.6} parent=0 // pred_check
    _
  $region3: #{_lambda_.6} parent=0 // pred_check_branch
    %9 = sbr.rel (0) target = $region5
  $region4: #{_lambda_.6} parent=0 // pred_region
    _
  $region5: #{_lambda_.6} parent=0 // pred_fallthru
    _
  // Predicated region
  $region6: #{_lambda_.6} parent=0 // pred_check
    _
  $region7: #{_lambda_.6} parent=0 // pred_check_branch
    %11 = sbr.rel (0) target = $region9
  $region8: #{_lambda_.6} parent=0 // pred_region
    _
  $region9: #{_lambda_.6} parent=0 // pred_fallthru
    _
  // Predicated region
  $region10: #{_lambda_.6} parent=0 // pred_check
    _
  $region11: #{_lambda_.6} parent=0 // pred_check_branch
    %13 = sbr.rel (0) target = $region13
  $region12: #{_lambda_.6} parent=0 // pred_region
    _
  $region13: #{_lambda_.6} parent=0 // pred_fallthru
    _
  %p15 = scmp.eq.s32.totalorder 0, 0
  // Predicated region
  $region14: #{_lambda_.6} parent=0 // pred_check
    %p16 = pneg %p15
  $region15: #{_lambda_.6} parent=0 // pred_check_branch
    %18 = sbr.rel (%p16) target = $region17
  $region16: #{_lambda_.6} parent=0 // pred_region
    %19 = vst [vmem:[#allocation2] sm:$0xff] 0.0
    %20 = vst [vmem:[#allocation2 + $0x8] sm:$0xff] 0.0
    %21 = vst [vmem:[#allocation2 + $0x10] sm:$0xff] 0.0
    %22 = vst [vmem:[#allocation2 + $0x18] sm:$0xff] 0.0
    %23 = vst [vmem:[#allocation2 + $0x20] sm:$0xff] 0.0
    %24 = vst [vmem:[#allocation2 + $0x28] sm:$0xff] 0.0
    %25 = vst [vmem:[#allocation2 + $0x30] sm:$0xff] 0.0
    %26 = vst [vmem:[#allocation2 + $0x38] sm:$0xff] 0.0
    %27 = vst [vmem:[#allocation2 + $0x40] sm:$0xff] 0.0
    %28 = vst [vmem:[#allocation2 + $0x48] sm:$0xff] 0.0
    %29 = vst [vmem:[#allocation2 + $0x50] sm:$0xff] 0.0
    %30 = vst [vmem:[#allocation2 + $0x58] sm:$0xff] 0.0
    %31 = vst [vmem:[#allocation2 + $0x60] sm:$0xff] 0.0
    %32 = vst [vmem:[#allocation2 + $0x68] sm:$0xff] 0.0
    %33 = vst [vmem:[#allocation2 + $0x70] sm:$0xff] 0.0
    %34 = vst [vmem:[#allocation2 + $0x78] sm:$0xff] 0.0
  $region17: #{_lambda_.6} parent=0 // pred_fallthru
    _
  %v35 = vld [vmem:[#allocation2] sm:$0xff]
  %v36 = vld [vmem:[#allocation2 + $0x8] sm:$0xff]
  %v37 = vld [vmem:[#allocation2 + $0x10] sm:$0xff]
  %v38 = vld [vmem:[#allocation2 + $0x18] sm:$0xff]
  %v39 = vld [vmem:[#allocation2 + $0x20] sm:$0xff]
  %v40 = vld [vmem:[#allocation2 + $0x28] sm:$0xff]
  %v41 = vld [vmem:[#allocation2 + $0x30] sm:$0xff]
  %v42 = vld [vmem:[#allocation2 + $0x38] sm:$0xff]
  %v43 = vld [vmem:[#allocation2 + $0x40] sm:$0xff]
  %v44 = vld [vmem:[#allocation2 + $0x48] sm:$0xff]
  %v45 = vld [vmem:[#allocation2 + $0x50] sm:$0xff]
  %v46 = vld [vmem:[#allocation2 + $0x58] sm:$0xff]
  %v47 = vld [vmem:[#allocation2 + $0x60] sm:$0xff]
  %v48 = vld [vmem:[#allocation2 + $0x68] sm:$0xff]
  %v49 = vld [vmem:[#allocation2 + $0x70] sm:$0xff]
  %v50 = vld [vmem:[#allocation2 + $0x78] sm:$0xff]
  %v51 = vld [vmem:[%s0] sm:$0xf]
  %v52 = vld [vmem:[%s0 + $0x4] sm:$0xf]
  %v53 = vld [vmem:[%s0 + $0x8] sm:$0xf]
  %v54 = vld [vmem:[%s0 + $0xc] sm:$0xf]
  %v55 = vld [vmem:[%s0 + $0x10] sm:$0xf]
  %v56 = vld [vmem:[%s0 + $0x14] sm:$0xf]
  %v57 = vld [vmem:[%s0 + $0x18] sm:$0xf]
  %v58 = vld [vmem:[%s0 + $0x1c] sm:$0xf]
  %v59 = vld [vmem:[%s0 + $0x20] sm:$0xf]
  %v60 = vld [vmem:[%s0 + $0x24] sm:$0xf]
  %v61 = vld [vmem:[%s0 + $0x28] sm:$0xf]
  %v62 = vld [vmem:[%s0 + $0x2c] sm:$0xf]
  %v63 = vld [vmem:[%s0 + $0x30] sm:$0xf]
  %v64 = vld [vmem:[%s0 + $0x34] sm:$0xf]
  %v65 = vld [vmem:[%s0 + $0x38] sm:$0xf]
  %v66 = vld [vmem:[%s0 + $0x3c] sm:$0xf]
  %v67 = vld [vmem:[%s1] sm:$0xf]
  %v68 = vld [vmem:[%s1 + $0x4] sm:$0xf]
  %v69 = vld [vmem:[%s1 + $0x8] sm:$0xf]
  %v70 = vld [vmem:[%s1 + $0xc] sm:$0xf]
  %v71 = vld [vmem:[%s1 + $0x10] sm:$0xf]
  %v72 = vld [vmem:[%s1 + $0x14] sm:$0xf]
  %v73 = vld [vmem:[%s1 + $0x18] sm:$0xf]
  %v74 = vld [vmem:[%s1 + $0x1c] sm:$0xf]
  %v75 = vld [vmem:[%s1 + $0x20] sm:$0xf]
  %v76 = vld [vmem:[%s1 + $0x24] sm:$0xf]
  %v77 = vld [vmem:[%s1 + $0x28] sm:$0xf]
  %v78 = vld [vmem:[%s1 + $0x2c] sm:$0xf]
  %v79 = vld [vmem:[%s1 + $0x30] sm:$0xf]
  %v80 = vld [vmem:[%s1 + $0x34] sm:$0xf]
  %v81 = vld [vmem:[%s1 + $0x38] sm:$0xf]
  %v82 = vld [vmem:[%s1 + $0x3c] sm:$0xf]
  %v99 = vunpack.c.l.b16 %v51
  %v100 = vunpack.c.l.b16 %v52
  %v101 = vunpack.c.l.b16 %v53
  %v102 = vunpack.c.l.b16 %v54
  %v103 = vunpack.c.l.b16 %v55
  %v104 = vunpack.c.l.b16 %v56
  %v105 = vunpack.c.l.b16 %v57
  %v106 = vunpack.c.l.b16 %v58
  %v107 = vunpack.c.l.b16 %v59
  %v108 = vunpack.c.l.b16 %v60
  %v109 = vunpack.c.l.b16 %v61
  %v110 = vunpack.c.l.b16 %v62
  %v111 = vunpack.c.l.b16 %v63
  %v112 = vunpack.c.l.b16 %v64
  %v113 = vunpack.c.l.b16 %v65
  %v114 = vunpack.c.l.b16 %v66
  %v115 = vpack.c.b16 %v100, %v99
  %v116 = vpack.c.b16 %v102, %v101
  %v117 = vpack.c.b16 %v104, %v103
  %v118 = vpack.c.b16 %v106, %v105
  %v119 = vpack.c.b16 %v108, %v107
  %v120 = vpack.c.b16 %v110, %v109
  %v121 = vpack.c.b16 %v112, %v111
  %v122 = vpack.c.b16 %v114, %v113
  %v147 = vunpack.c.l.b16 %v67
  %v148 = vunpack.c.l.b16 %v68
  %v149 = vunpack.c.l.b16 %v69
  %v150 = vunpack.c.l.b16 %v70
  %v151 = vunpack.c.l.b16 %v71
  %v152 = vunpack.c.l.b16 %v72
  %v153 = vunpack.c.l.b16 %v73
  %v154 = vunpack.c.l.b16 %v74
  %v155 = vunpack.c.l.b16 %v75
  %v156 = vunpack.c.l.b16 %v76
  %v157 = vunpack.c.l.b16 %v77
  %v158 = vunpack.c.l.b16 %v78
  %v159 = vunpack.c.l.b16 %v79
  %v160 = vunpack.c.l.b16 %v80
  %v161 = vunpack.c.l.b16 %v81
  %v162 = vunpack.c.l.b16 %v82
  %v163 = vpack.c.b16 %v148, %v147
  %v164 = vpack.c.b16 %v150, %v149
  %v165 = vpack.c.b16 %v152, %v151
  %v166 = vpack.c.b16 %v154, %v153
  %v167 = vpack.c.b16 %v156, %v155
  %v168 = vpack.c.b16 %v158, %v157
  %v169 = vpack.c.b16 %v160, %v159
  %v170 = vpack.c.b16 %v162, %v161
  %179 = vmatprep.subr.bf16.mxu0 0
  %180 = vmatpush1.bf16.msra.mxu0 %v163
  %181 = vmatprep.subr.bf16.mxu0 0
  %182 = vmatpush1.bf16.msra.mxu0 %v164
  %183 = vmatprep.subr.bf16.mxu0 0
  %184 = vmatpush1.bf16.msra.mxu0 %v165
  %185 = vmatprep.subr.bf16.mxu0 0
  %186 = vmatpush1.bf16.msra.mxu0 %v166
  %187 = vmatprep.subr.bf16.mxu0 0
  %188 = vmatpush1.bf16.msra.mxu0 %v167
  %189 = vmatprep.subr.bf16.mxu0 0
  %190 = vmatpush1.bf16.msra.mxu0 %v168
  %191 = vmatprep.subr.bf16.mxu0 0
  %192 = vmatpush1.bf16.msra.mxu0 %v169
  %193 = vmatprep.subr.bf16.mxu0 0
  %194 = vmatpush1.bf16.msra.mxu0 %v170
  %195 = vmatprep.subr.bf16.mxu0 0
  %196 = vmatpush1.bf16.msra.mxu0 0
  %197 = vmatprep.subr.bf16.mxu0 0
  %198 = vmatpush1.bf16.msra.mxu0 0
  %199 = vmatprep.subr.bf16.mxu0 0
  %200 = vmatpush1.bf16.msra.mxu0 0
  %201 = vmatprep.subr.bf16.mxu0 0
  %202 = vmatpush1.bf16.msra.mxu0 0
  %203 = vmatprep.subr.bf16.mxu0 0
  %204 = vmatpush1.bf16.msra.mxu0 0
  %205 = vmatprep.subr.bf16.mxu0 0
  %206 = vmatpush1.bf16.msra.mxu0 0
  %207 = vmatprep.subr.bf16.mxu0 0
  %208 = vmatpush1.bf16.msra.mxu0 0
  %209 = vmatprep.subr.bf16.mxu0 0
  %210 = vmatpush1.bf16.msra.mxu0 0
  %211 = vmatprep.mubr.bf16.mxu0 0
  %212 = vmatmul.mubr.bf16.gmra.mrb[0].mxu0 %v115
  %v213 = vpop.f32.mrb[0].mxu0
  %v214 = vadd.f32 0.0, %v213
  %v215 = vpop.f32.mrb[0].mxu0
  %v216 = vpop.f32.mrb[0].mxu0
  %v217 = vadd.f32 0.0, %v216
  %v218 = vpop.f32.mrb[0].mxu0
  %219 = vmatprep.mubr.bf16.mxu0 0
  %220 = vmatmul.mubr.bf16.gmra.mrb[0].mxu0 %v116
  %v221 = vpop.f32.mrb[0].mxu0
  %v222 = vadd.f32 0.0, %v221
  %v223 = vpop.f32.mrb[0].mxu0
  %v224 = vpop.f32.mrb[0].mxu0
  %v225 = vadd.f32 0.0, %v224
  %v226 = vpop.f32.mrb[0].mxu0
  %227 = vmatprep.mubr.bf16.mxu0 0
  %228 = vmatmul.mubr.bf16.gmra.mrb[0].mxu0 %v117
  %v229 = vpop.f32.mrb[0].mxu0
  %v230 = vadd.f32 0.0, %v229
  %v231 = vpop.f32.mrb[0].mxu0
  %v232 = vpop.f32.mrb[0].mxu0
  %v233 = vadd.f32 0.0, %v232
  %v234 = vpop.f32.mrb[0].mxu0
  %235 = vmatprep.mubr.bf16.mxu0 0
  %236 = vmatmul.mubr.bf16.gmra.mrb[0].mxu0 %v118
  %v237 = vpop.f32.mrb[0].mxu0
  %v238 = vadd.f32 0.0, %v237
  %v239 = vpop.f32.mrb[0].mxu0
  %v240 = vpop.f32.mrb[0].mxu0
  %v241 = vadd.f32 0.0, %v240
  %v242 = vpop.f32.mrb[0].mxu0
  %243 = vmatprep.mubr.bf16.mxu0 0
  %244 = vmatmul.mubr.bf16.gmra.mrb[0].mxu0 %v119
  %v245 = vpop.f32.mrb[0].mxu0
  %v246 = vadd.f32 0.0, %v245
  %v247 = vpop.f32.mrb[0].mxu0
  %v248 = vpop.f32.mrb[0].mxu0
  %v249 = vadd.f32 0.0, %v248
  %v250 = vpop.f32.mrb[0].mxu0
  %251 = vmatprep.mubr.bf16.mxu0 0
  %252 = vmatmul.mubr.bf16.gmra.mrb[0].mxu0 %v120
  %v253 = vpop.f32.mrb[0].mxu0
  %v254 = vadd.f32 0.0, %v253
  %v255 = vpop.f32.mrb[0].mxu0
  %v256 = vpop.f32.mrb[0].mxu0
  %v257 = vadd.f32 0.0, %v256
  %v258 = vpop.f32.mrb[0].mxu0
  %259 = vmatprep.mubr.bf16.mxu0 0
  %260 = vmatmul.mubr.bf16.gmra.mrb[0].mxu0 %v121
  %v261 = vpop.f32.mrb[0].mxu0
  %v262 = vadd.f32 0.0, %v261
  %v263 = vpop.f32.mrb[0].mxu0
  %v264 = vpop.f32.mrb[0].mxu0
  %v265 = vadd.f32 0.0, %v264
  %v266 = vpop.f32.mrb[0].mxu0
  %267 = vmatprep.mubr.bf16.mxu0 0
  %268 = vmatmul.mubr.bf16.gmra.mrb[0].mxu0 %v122
  %v269 = vpop.f32.mrb[0].mxu0
  %v270 = vadd.f32 0.0, %v269
  %v271 = vpop.f32.mrb[0].mxu0
  %v272 = vpop.f32.mrb[0].mxu0
  %v273 = vadd.f32 0.0, %v272
  %v274 = vpop.f32.mrb[0].mxu0
  %275 = vdwg.mxu0
  %v276 = vadd.f32 %v35, %v214
  %v277 = vadd.f32 %v36, %v217
  %v278 = vadd.f32 %v37, %v222
  %v279 = vadd.f32 %v38, %v225
  %v280 = vadd.f32 %v39, %v230
  %v281 = vadd.f32 %v40, %v233
  %v282 = vadd.f32 %v41, %v238
  %v283 = vadd.f32 %v42, %v241
  %v284 = vadd.f32 %v43, %v246
  %v285 = vadd.f32 %v44, %v249
  %v286 = vadd.f32 %v45, %v254
  %v287 = vadd.f32 %v46, %v257
  %v288 = vadd.f32 %v47, %v262
  %v289 = vadd.f32 %v48, %v265
  %v290 = vadd.f32 %v49, %v270
  %v291 = vadd.f32 %v50, %v273
  %292 = vst [vmem:[#allocation2] sm:$0xff] %v276
  %293 = vst [vmem:[#allocation2 + $0x8] sm:$0xff] %v277
  %294 = vst [vmem:[#allocation2 + $0x10] sm:$0xff] %v278
  %295 = vst [vmem:[#allocation2 + $0x18] sm:$0xff] %v279
  %296 = vst [vmem:[#allocation2 + $0x20] sm:$0xff] %v280
  %297 = vst [vmem:[#allocation2 + $0x28] sm:$0xff] %v281
  %298 = vst [vmem:[#allocation2 + $0x30] sm:$0xff] %v282
  %299 = vst [vmem:[#allocation2 + $0x38] sm:$0xff] %v283
  %300 = vst [vmem:[#allocation2 + $0x40] sm:$0xff] %v284
  %301 = vst [vmem:[#allocation2 + $0x48] sm:$0xff] %v285
  %302 = vst [vmem:[#allocation2 + $0x50] sm:$0xff] %v286
  %303 = vst [vmem:[#allocation2 + $0x58] sm:$0xff] %v287
  %304 = vst [vmem:[#allocation2 + $0x60] sm:$0xff] %v288
  %305 = vst [vmem:[#allocation2 + $0x68] sm:$0xff] %v289
  %306 = vst [vmem:[#allocation2 + $0x70] sm:$0xff] %v290
  %307 = vst [vmem:[#allocation2 + $0x78] sm:$0xff] %v291
  // Predicated region
  $region18: #{_lambda_.6} parent=0 // pred_check
    %p308 = pneg %p15
  $region19: #{_lambda_.6} parent=0 // pred_check_branch
    %310 = sbr.rel (%p308) target = $region21
  $region20: #{_lambda_.6} parent=0 // pred_region
    %v311 = vld [vmem:[#allocation2] sm:$0xff]
    %v312 = vld [vmem:[#allocation2 + $0x8] sm:$0xff]
    %v313 = vld [vmem:[#allocation2 + $0x10] sm:$0xff]
    %v314 = vld [vmem:[#allocation2 + $0x18] sm:$0xff]
    %v315 = vld [vmem:[#allocation2 + $0x20] sm:$0xff]
    %v316 = vld [vmem:[#allocation2 + $0x28] sm:$0xff]
    %v317 = vld [vmem:[#allocation2 + $0x30] sm:$0xff]
    %v318 = vld [vmem:[#allocation2 + $0x38] sm:$0xff]
    %v319 = vld [vmem:[#allocation2 + $0x40] sm:$0xff]
    %v320 = vld [vmem:[#allocation2 + $0x48] sm:$0xff]
    %v321 = vld [vmem:[#allocation2 + $0x50] sm:$0xff]
    %v322 = vld [vmem:[#allocation2 + $0x58] sm:$0xff]
    %v323 = vld [vmem:[#allocation2 + $0x60] sm:$0xff]
    %v324 = vld [vmem:[#allocation2 + $0x68] sm:$0xff]
    %v325 = vld [vmem:[#allocation2 + $0x70] sm:$0xff]
    %v326 = vld [vmem:[#allocation2 + $0x78] sm:$0xff]
    %v327 = vld [vmem:[%s2] sm:$0x1]
    %v329 = vlaneseq
    %v330 = vshrl.u32 %v329, 7
    %v331 = vsub.s32 0, %v330
    %v332 = vrot.slane %v327, %v331
    %v334 = vadd.f32 %v311, %v332
    %v335 = vadd.f32 %v312, %v332
    %v336 = vadd.f32 %v313, %v332
    %v337 = vadd.f32 %v314, %v332
    %v338 = vadd.f32 %v315, %v332
    %v339 = vadd.f32 %v316, %v332
    %v340 = vadd.f32 %v317, %v332
    %v341 = vadd.f32 %v318, %v332
    %v342 = vadd.f32 %v319, %v332
    %v343 = vadd.f32 %v320, %v332
    %v344 = vadd.f32 %v321, %v332
    %v345 = vadd.f32 %v322, %v332
    %v346 = vadd.f32 %v323, %v332
    %v347 = vadd.f32 %v324, %v332
    %v348 = vadd.f32 %v325, %v332
    %v349 = vadd.f32 %v326, %v332
    %v350 = vxor.u32 %v334, 2147483648
    %v351 = vxor.u32 %v335, 2147483648
    %v352 = vxor.u32 %v336, 2147483648
    %v353 = vxor.u32 %v337, 2147483648
    %v354 = vxor.u32 %v338, 2147483648
    %v355 = vxor.u32 %v339, 2147483648
    %v356 = vxor.u32 %v340, 2147483648
    %v357 = vxor.u32 %v341, 2147483648
    %v358 = vxor.u32 %v342, 2147483648
    %v359 = vxor.u32 %v343, 2147483648
    %v360 = vxor.u32 %v344, 2147483648
    %v361 = vxor.u32 %v345, 2147483648
    %v362 = vxor.u32 %v346, 2147483648
    %v363 = vxor.u32 %v347, 2147483648
    %v364 = vxor.u32 %v348, 2147483648
    %v365 = vxor.u32 %v349, 2147483648
    %v366 = vmul.f32 %v350, 1.442695
    %v367 = vpow.pop %v366
    %v368 = vmul.f32 %v351, 1.442695
    %v369 = vpow.pop %v368
    %v370 = vmul.f32 %v352, 1.442695
    %v371 = vpow.pop %v370
    %v372 = vmul.f32 %v353, 1.442695
    %v373 = vpow.pop %v372
    %v374 = vmul.f32 %v354, 1.442695
    %v375 = vpow.pop %v374
    %v376 = vmul.f32 %v355, 1.442695
    %v377 = vpow.pop %v376
    %v378 = vmul.f32 %v356, 1.442695
    %v379 = vpow.pop %v378
    %v380 = vmul.f32 %v357, 1.442695
    %v381 = vpow.pop %v380
    %v382 = vmul.f32 %v358, 1.442695
    %v383 = vpow.pop %v382
    %v384 = vmul.f32 %v359, 1.442695
    %v385 = vpow.pop %v384
    %v386 = vmul.f32 %v360, 1.442695
    %v387 = vpow.pop %v386
    %v388 = vmul.f32 %v361, 1.442695
    %v389 = vpow.pop %v388
    %v390 = vmul.f32 %v362, 1.442695
    %v391 = vpow.pop %v390
    %v392 = vmul.f32 %v363, 1.442695
    %v393 = vpow.pop %v392
    %v394 = vmul.f32 %v364, 1.442695
    %v395 = vpow.pop %v394
    %v396 = vmul.f32 %v365, 1.442695
    %v397 = vpow.pop %v396
    %v398 = vadd.f32 %v367, 1.0
    %v399 = vadd.f32 %v369, 1.0
    %v400 = vadd.f32 %v371, 1.0
    %v401 = vadd.f32 %v373, 1.0
    %v402 = vadd.f32 %v375, 1.0
    %v403 = vadd.f32 %v377, 1.0
    %v404 = vadd.f32 %v379, 1.0
    %v405 = vadd.f32 %v381, 1.0
    %v406 = vadd.f32 %v383, 1.0
    %v407 = vadd.f32 %v385, 1.0
    %v408 = vadd.f32 %v387, 1.0
    %v409 = vadd.f32 %v389, 1.0
    %v410 = vadd.f32 %v391, 1.0
    %v411 = vadd.f32 %v393, 1.0
    %v412 = vadd.f32 %v395, 1.0
    %v413 = vadd.f32 %v397, 1.0
    %v414 = vrcp.pop %v398
    %v415 = vmul.f32 1.0, %v414
    %v416 = vrcp.pop %v399
    %v417 = vmul.f32 1.0, %v416
    %v418 = vrcp.pop %v400
    %v419 = vmul.f32 1.0, %v418
    %v420 = vrcp.pop %v401
    %v421 = vmul.f32 1.0, %v420
    %v422 = vrcp.pop %v402
    %v423 = vmul.f32 1.0, %v422
    %v424 = vrcp.pop %v403
    %v425 = vmul.f32 1.0, %v424
    %v426 = vrcp.pop %v404
    %v427 = vmul.f32 1.0, %v426
    %v428 = vrcp.pop %v405
    %v429 = vmul.f32 1.0, %v428
    %v430 = vrcp.pop %v406
    %v431 = vmul.f32 1.0, %v430
    %v432 = vrcp.pop %v407
    %v433 = vmul.f32 1.0, %v432
    %v434 = vrcp.pop %v408
    %v435 = vmul.f32 1.0, %v434
    %v436 = vrcp.pop %v409
    %v437 = vmul.f32 1.0, %v436
    %v438 = vrcp.pop %v410
    %v439 = vmul.f32 1.0, %v438
    %v440 = vrcp.pop %v411
    %v441 = vmul.f32 1.0, %v440
    %v442 = vrcp.pop %v412
    %v443 = vmul.f32 1.0, %v442
    %v444 = vrcp.pop %v413
    %v445 = vmul.f32 1.0, %v444
    %v446 = vmul.f32 %v334, %v415
    %v447 = vmul.f32 %v335, %v417
    %v448 = vmul.f32 %v336, %v419
    %v449 = vmul.f32 %v337, %v421
    %v450 = vmul.f32 %v338, %v423
    %v451 = vmul.f32 %v339, %v425
    %v452 = vmul.f32 %v340, %v427
    %v453 = vmul.f32 %v341, %v429
    %v454 = vmul.f32 %v342, %v431
    %v455 = vmul.f32 %v343, %v433
    %v456 = vmul.f32 %v344, %v435
    %v457 = vmul.f32 %v345, %v437
    %v458 = vmul.f32 %v346, %v439
    %v459 = vmul.f32 %v347, %v441
    %v460 = vmul.f32 %v348, %v443
    %v461 = vmul.f32 %v349, %v445
    %v462 = vpack.c.bf16 %v447, %v446
    %v463 = vpack.c.bf16 %v449, %v448
    %v464 = vpack.c.bf16 %v451, %v450
    %v465 = vpack.c.bf16 %v453, %v452
    %v466 = vpack.c.bf16 %v455, %v454
    %v467 = vpack.c.bf16 %v457, %v456
    %v468 = vpack.c.bf16 %v459, %v458
    %v469 = vpack.c.bf16 %v461, %v460
    %v478 = vunpack.c.l.b16 %v462
    %v479 = vunpack.c.h.b16 %v462
    %v480 = vunpack.c.l.b16 %v463
    %v481 = vunpack.c.h.b16 %v463
    %v482 = vunpack.c.l.b16 %v464
    %v483 = vunpack.c.h.b16 %v464
    %v484 = vunpack.c.l.b16 %v465
    %v485 = vunpack.c.h.b16 %v465
    %v486 = vunpack.c.l.b16 %v466
    %v487 = vunpack.c.h.b16 %v466
    %v488 = vunpack.c.l.b16 %v467
    %v489 = vunpack.c.h.b16 %v467
    %v490 = vunpack.c.l.b16 %v468
    %v491 = vunpack.c.h.b16 %v468
    %v492 = vunpack.c.l.b16 %v469
    %v493 = vunpack.c.h.b16 %v469
    %v494 = vpack.c.b16 %v478, %v478
    %v495 = vpack.c.b16 %v479, %v479
    %v496 = vpack.c.b16 %v480, %v480
    %v497 = vpack.c.b16 %v481, %v481
    %v498 = vpack.c.b16 %v482, %v482
    %v499 = vpack.c.b16 %v483, %v483
    %v500 = vpack.c.b16 %v484, %v484
    %v501 = vpack.c.b16 %v485, %v485
    %v502 = vpack.c.b16 %v486, %v486
    %v503 = vpack.c.b16 %v487, %v487
    %v504 = vpack.c.b16 %v488, %v488
    %v505 = vpack.c.b16 %v489, %v489
    %v506 = vpack.c.b16 %v490, %v490
    %v507 = vpack.c.b16 %v491, %v491
    %v508 = vpack.c.b16 %v492, %v492
    %v509 = vpack.c.b16 %v493, %v493
    %526 = vst [vmem:[%s3] sm:$0xf] %v494
    %527 = vst [vmem:[%s3 + $0x4] sm:$0xf] %v495
    %528 = vst [vmem:[%s3 + $0x8] sm:$0xf] %v496
    %529 = vst [vmem:[%s3 + $0xc] sm:$0xf] %v497
    %530 = vst [vmem:[%s3 + $0x10] sm:$0xf] %v498
    %531 = vst [vmem:[%s3 + $0x14] sm:$0xf] %v499
    %532 = vst [vmem:[%s3 + $0x18] sm:$0xf] %v500
    %533 = vst [vmem:[%s3 + $0x1c] sm:$0xf] %v501
    %534 = vst [vmem:[%s3 + $0x20] sm:$0xf] %v502
    %535 = vst [vmem:[%s3 + $0x24] sm:$0xf] %v503
    %536 = vst [vmem:[%s3 + $0x28] sm:$0xf] %v504
    %537 = vst [vmem:[%s3 + $0x2c] sm:$0xf] %v505
    %538 = vst [vmem:[%s3 + $0x30] sm:$0xf] %v506
    %539 = vst [vmem:[%s3 + $0x34] sm:$0xf] %v507
    %540 = vst [vmem:[%s3 + $0x38] sm:$0xf] %v508
    %541 = vst [vmem:[%s3 + $0x3c] sm:$0xf] %v509
  $region21: #{_lambda_.6} parent=0 // pred_fallthru
    _
  // Predicated region
  $region22: #{_lambda_.6} parent=0 // pred_check
    _
  $region23: #{_lambda_.6} parent=0 // pred_check_branch
    %543 = sbr.rel (0) target = $region25
  $region24: #{_lambda_.6} parent=0 // pred_region
    _
  $region25: #{_lambda_.6} parent=0 // pred_fallthru
    _
  // Predicated region
  $region26: #{_lambda_.6} parent=0 // pred_check
    _
  $region27: #{_lambda_.6} parent=0 // pred_check_branch
    %545 = sbr.rel (0) target = $region29
  $region28: #{_lambda_.6} parent=0 // pred_region
    _
  $region29: #{_lambda_.6} parent=0 // pred_fallthru
    _

// kernel: _lambda_.7
$region0: #{_lambda_.7}
  #allocation0 [shape = 'u32[]', space=smem, size = 0x4, offset = 0x4, fixed_abs, tag = 'smem constant byte address 0x4 - core index']
  #allocation1 [shape = 'u32[144,128]{1,0:T(1,128)}', space=vmem, size = 0x12000, scoped, tag = 'internal scratch']
  #allocation2 [shape = 'f32[32,128]{1,0:T(8,128)}', space=vmem, size = 0x4000, scoped, tag = 'scratch operand']
  %s0 = inlined_call_operand.vmem [shape: bf16[1,32,128], index: 0, kind: input, shape index: {}]
  %s1 = inlined_call_operand.vmem [shape: bf16[1,128,128], index: 1, kind: input, shape index: {}]
  %s2 = inlined_call_operand.vmem [shape: f32[1,128], index: 2, kind: input, shape index: {}]
  %s3 = inlined_call_operand.vmem [shape: bf16[1,32,128], index: 3, kind: output, shape index: {}]
  %s4 = sld [smem:[#allocation0]]
  $region30: #{_lambda_.7} parent=0
    _
  %s6 = ssub.s32 1, %s4
  %s7 = scalar_select 0, %s6, %s4
  // Predicated region
  $region2: #{_lambda_.7} parent=0 // pred_check
    _
  $region3: #{_lambda_.7} parent=0 // pred_check_branch
    %9 = sbr.rel (0) target = $region5
  $region4: #{_lambda_.7} parent=0 // pred_region
    _
  $region5: #{_lambda_.7} parent=0 // pred_fallthru
    _
  // Predicated region
  $region6: #{_lambda_.7} parent=0 // pred_check
    _
  $region7: #{_lambda_.7} parent=0 // pred_check_branch
    %11 = sbr.rel (0) target = $region9
  $region8: #{_lambda_.7} parent=0 // pred_region
    _
  $region9: #{_lambda_.7} parent=0 // pred_fallthru
    _
  // Predicated region
  $region10: #{_lambda_.7} parent=0 // pred_check
    _
  $region11: #{_lambda_.7} parent=0 // pred_check_branch
    %13 = sbr.rel (0) target = $region13
  $region12: #{_lambda_.7} parent=0 // pred_region
    _
  $region13: #{_lambda_.7} parent=0 // pred_fallthru
    _
  %p15 = scmp.eq.s32.totalorder 0, 0
  // Predicated region
  $region14: #{_lambda_.7} parent=0 // pred_check
    %p16 = pneg %p15
  $region15: #{_lambda_.7} parent=0 // pred_check_branch
    %18 = sbr.rel (%p16) target = $region17
  $region16: #{_lambda_.7} parent=0 // pred_region
    %19 = vst [vmem:[#allocation2] sm:$0xff] 0.0
    %20 = vst [vmem:[#allocation2 + $0x8] sm:$0xff] 0.0
    %21 = vst [vmem:[#allocation2 + $0x10] sm:$0xff] 0.0
    %22 = vst [vmem:[#allocation2 + $0x18] sm:$0xff] 0.0
  $region17: #{_lambda_.7} parent=0 // pred_fallthru
    _
  %v23 = vld [vmem:[#allocation2] sm:$0xff]
  %v24 = vld [vmem:[#allocation2 + $0x8] sm:$0xff]
  %v25 = vld [vmem:[#allocation2 + $0x10] sm:$0xff]
  %v26 = vld [vmem:[#allocation2 + $0x18] sm:$0xff]
  %v27 = vld [vmem:[%s0] sm:$0xf]
  %v28 = vld [vmem:[%s0 + $0x4] sm:$0xf]
  %v29 = vld [vmem:[%s0 + $0x8] sm:$0xf]
  %v30 = vld [vmem:[%s0 + $0xc] sm:$0xf]
  %v31 = vld [vmem:[%s1] sm:$0xf]
  %v32 = vld [vmem:[%s1 + $0x4] sm:$0xf]
  %v33 = vld [vmem:[%s1 + $0x8] sm:$0xf]
  %v34 = vld [vmem:[%s1 + $0xc] sm:$0xf]
  %v35 = vld [vmem:[%s1 + $0x10] sm:$0xf]
  %v36 = vld [vmem:[%s1 + $0x14] sm:$0xf]
  %v37 = vld [vmem:[%s1 + $0x18] sm:$0xf]
  %v38 = vld [vmem:[%s1 + $0x1c] sm:$0xf]
  %v39 = vld [vmem:[%s1 + $0x20] sm:$0xf]
  %v40 = vld [vmem:[%s1 + $0x24] sm:$0xf]
  %v41 = vld [vmem:[%s1 + $0x28] sm:$0xf]
  %v42 = vld [vmem:[%s1 + $0x2c] sm:$0xf]
  %v43 = vld [vmem:[%s1 + $0x30] sm:$0xf]
  %v44 = vld [vmem:[%s1 + $0x34] sm:$0xf]
  %v45 = vld [vmem:[%s1 + $0x38] sm:$0xf]
  %v46 = vld [vmem:[%s1 + $0x3c] sm:$0xf]
  %v51 = vunpack.c.l.b16 %v27
  %v52 = vunpack.c.l.b16 %v28
  %v53 = vunpack.c.l.b16 %v29
  %v54 = vunpack.c.l.b16 %v30
  %v55 = vpack.c.b16 %v52, %v51
  %v56 = vpack.c.b16 %v54, %v53
  %v75 = vunpack.c.l.b16 %v31
  %v76 = vunpack.c.l.b16 %v32
  %v77 = vunpack.c.l.b16 %v33
  %v78 = vunpack.c.l.b16 %v34
  %v79 = vunpack.c.l.b16 %v35
  %v80 = vunpack.c.l.b16 %v36
  %v81 = vunpack.c.l.b16 %v37
  %v82 = vunpack.c.l.b16 %v38
  %v83 = vunpack.c.l.b16 %v39
  %v84 = vunpack.c.l.b16 %v40
  %v85 = vunpack.c.l.b16 %v41
  %v86 = vunpack.c.l.b16 %v42
  %v87 = vunpack.c.l.b16 %v43
  %v88 = vunpack.c.l.b16 %v44
  %v89 = vunpack.c.l.b16 %v45
  %v90 = vunpack.c.l.b16 %v46
  %v91 = vpack.c.b16 %v76, %v75
  %v92 = vpack.c.b16 %v78, %v77
  %v93 = vpack.c.b16 %v80, %v79
  %v94 = vpack.c.b16 %v82, %v81
  %v95 = vpack.c.b16 %v84, %v83
  %v96 = vpack.c.b16 %v86, %v85
  %v97 = vpack.c.b16 %v88, %v87
  %v98 = vpack.c.b16 %v90, %v89
  %107 = vmatprep.subr.bf16.mxu0 0
  %108 = vmatpush1.bf16.msra.mxu0 %v91
  %109 = vmatprep.subr.bf16.mxu0 0
  %110 = vmatpush1.bf16.msra.mxu0 %v92
  %111 = vmatprep.subr.bf16.mxu0 0
  %112 = vmatpush1.bf16.msra.mxu0 %v93
  %113 = vmatprep.subr.bf16.mxu0 0
  %114 = vmatpush1.bf16.msra.mxu0 %v94
  %115 = vmatprep.subr.bf16.mxu0 0
  %116 = vmatpush1.bf16.msra.mxu0 %v95
  %117 = vmatprep.subr.bf16.mxu0 0
  %118 = vmatpush1.bf16.msra.mxu0 %v96
  %119 = vmatprep.subr.bf16.mxu0 0
  %120 = vmatpush1.bf16.msra.mxu0 %v97
  %121 = vmatprep.subr.bf16.mxu0 0
  %122 = vmatpush1.bf16.msra.mxu0 %v98
  %123 = vmatprep.subr.bf16.mxu0 0
  %124 = vmatpush1.bf16.msra.mxu0 0
  %125 = vmatprep.subr.bf16.mxu0 0
  %126 = vmatpush1.bf16.msra.mxu0 0
  %127 = vmatprep.subr.bf16.mxu0 0
  %128 = vmatpush1.bf16.msra.mxu0 0
  %129 = vmatprep.subr.bf16.mxu0 0
  %130 = vmatpush1.bf16.msra.mxu0 0
  %131 = vmatprep.subr.bf16.mxu0 0
  %132 = vmatpush1.bf16.msra.mxu0 0
  %133 = vmatprep.subr.bf16.mxu0 0
  %134 = vmatpush1.bf16.msra.mxu0 0
  %135 = vmatprep.subr.bf16.mxu0 0
  %136 = vmatpush1.bf16.msra.mxu0 0
  %137 = vmatprep.subr.bf16.mxu0 0
  %138 = vmatpush1.bf16.msra.mxu0 0
  %139 = vmatprep.mubr.bf16.mxu0 0
  %140 = vmatmul.mubr.bf16.gmra.mrb[0].mxu0 %v55
  %v141 = vpop.f32.mrb[0].mxu0
  %v142 = vadd.f32 0.0, %v141
  %v143 = vpop.f32.mrb[0].mxu0
  %v144 = vpop.f32.mrb[0].mxu0
  %v145 = vadd.f32 0.0, %v144
  %v146 = vpop.f32.mrb[0].mxu0
  %147 = vmatprep.mubr.bf16.mxu0 0
  %148 = vmatmul.mubr.bf16.gmra.mrb[0].mxu0 %v56
  %v149 = vpop.f32.mrb[0].mxu0
  %v150 = vadd.f32 0.0, %v149
  %v151 = vpop.f32.mrb[0].mxu0
  %v152 = vpop.f32.mrb[0].mxu0
  %v153 = vadd.f32 0.0, %v152
  %v154 = vpop.f32.mrb[0].mxu0
  %155 = vdwg.mxu0
  %v156 = vadd.f32 %v23, %v142
  %v157 = vadd.f32 %v24, %v145
  %v158 = vadd.f32 %v25, %v150
  %v159 = vadd.f32 %v26, %v153
  %160 = vst [vmem:[#allocation2] sm:$0xff] %v156
  %161 = vst [vmem:[#allocation2 + $0x8] sm:$0xff] %v157
  %162 = vst [vmem:[#allocation2 + $0x10] sm:$0xff] %v158
  %163 = vst [vmem:[#allocation2 + $0x18] sm:$0xff] %v159
  // Predicated region
  $region18: #{_lambda_.7} parent=0 // pred_check
    %p164 = pneg %p15
  $region19: #{_lambda_.7} parent=0 // pred_check_branch
    %166 = sbr.rel (%p164) target = $region21
  $region20: #{_lambda_.7} parent=0 // pred_region
    %v167 = vld [vmem:[#allocation2] sm:$0xff]
    %v168 = vld [vmem:[#allocation2 + $0x8] sm:$0xff]
    %v169 = vld [vmem:[#allocation2 + $0x10] sm:$0xff]
    %v170 = vld [vmem:[#allocation2 + $0x18] sm:$0xff]
    %v171 = vld [vmem:[%s2] sm:$0x1]
    %v173 = vlaneseq
    %v174 = vshrl.u32 %v173, 7
    %v175 = vsub.s32 0, %v174
    %v176 = vrot.slane %v171, %v175
    %v178 = vadd.f32 %v167, %v176
    %v179 = vadd.f32 %v168, %v176
    %v180 = vadd.f32 %v169, %v176
    %v181 = vadd.f32 %v170, %v176
    %v182 = vpack.c.bf16 %v179, %v178
    %v183 = vpack.c.bf16 %v181, %v180
    %v186 = vunpack.c.l.b16 %v182
    %v187 = vunpack.c.h.b16 %v182
    %v188 = vunpack.c.l.b16 %v183
    %v189 = vunpack.c.h.b16 %v183
    %v190 = vpack.c.b16 %v186, %v186
    %v191 = vpack.c.b16 %v187, %v187
    %v192 = vpack.c.b16 %v188, %v188
    %v193 = vpack.c.b16 %v189, %v189
    %198 = vst [vmem:[%s3] sm:$0xf] %v190
    %199 = vst [vmem:[%s3 + $0x4] sm:$0xf] %v191
    %200 = vst [vmem:[%s3 + $0x8] sm:$0xf] %v192
    %201 = vst [vmem:[%s3 + $0xc] sm:$0xf] %v193
  $region21: #{_lambda_.7} parent=0 // pred_fallthru
    _
  // Predicated region
  $region22: #{_lambda_.7} parent=0 // pred_check
    _
  $region23: #{_lambda_.7} parent=0 // pred_check_branch
    %203 = sbr.rel (0) target = $region25
  $region24: #{_lambda_.7} parent=0 // pred_region
    _
  $region25: #{_lambda_.7} parent=0 // pred_fallthru
    _
  // Predicated region
  $region26: #{_lambda_.7} parent=0 // pred_check
    _
  $region27: #{_lambda_.7} parent=0 // pred_check_branch
    %205 = sbr.rel (0) target = $region29
  $region28: #{_lambda_.7} parent=0 // pred_region
    _
  $region29: #{_lambda_.7} parent=0 // pred_fallthru
    _

// kernel: squeeze.5
$region0: #{squeeze.5}
  %s0 = inlined_call_operand.vmem [shape: bf16[1,2,128], index: 0, kind: input, shape index: {}]
  %s1 = inlined_call_operand.vmem [shape: bf16[2,8,4,4], index: 1, kind: output, shape index: {}]
  $region1: #{squeeze.5} parent=0
    #allocation0 [shape = 'u8[65536]{0}', space=vmem, size = 0x10000, scoped, tag = 'scoped mem for output reshape']
    #allocation1 [shape = 'u8[4096]{0}', space=vmem, size = 0x1000, scoped, tag = 'scoped mem for input reshape']
    %s3 = smul.u32 1, 2
    %s4 = sshllo.u32 0, %s3
    %s5 = sshrl.u32 %s4, 1
    %s6 = sor.u32 %s4, %s5
    %s7 = sand.u32 %s6, 85
    %s8 = sshrl.u32 %s7, 1
    %s9 = sor.u32 %s7, %s8
    %s10 = sand.u32 51, %s9
    %s11 = sshrl.u32 %s10, 2
    %s12 = sor.u32 %s10, %s11
    %s13 = sand.u32 15, %s12
    %v14 = vld [vmem:[%s0] sm:%s13]
    %v15 = vunpack.c.l.bf16 %v14
    %v16 = vunpack.c.h.bf16 %v14
    %17 = vst [vmem:[#allocation1] sm:%s4] %v15
    %v18 = vld [vmem:[#allocation1] sm:$0x3]
    %vm19 = vcmask 31744
    %20 = vst.msk [vmem:[#allocation0] sm:$0x1] %vm19, %v18
    %s21 = scalar_lea.vmem [#allocation0], 63
    %22 = vst.msk [vmem:[%s21] sm:$0x2] %vm19, %v18
    %v23 = vld [vmem:[#allocation1] sm:$0x3]
    %24 = vrot.lane.b32.xlu0 %v23, 124
    %v25 = vpop.permute.xlu0 %24
    %vm26 = vcmask 31744
    %s27 = scalar_lea.vmem [#allocation0], 1
    %28 = vst.msk [vmem:[%s27] sm:$0x1] %vm26, %v25
    %s29 = scalar_lea.vmem [#allocation0], 64
    %30 = vst.msk [vmem:[%s29] sm:$0x2] %vm26, %v25
    %v31 = vld [vmem:[#allocation1] sm:$0x3]
    %32 = vrot.lane.b32.xlu0 %v31, 120
    %v33 = vpop.permute.xlu0 %32
    %vm34 = vcmask 31744
    %s35 = scalar_lea.vmem [#allocation0], 2
    %36 = vst.msk [vmem:[%s35] sm:$0x1] %vm34, %v33
    %s37 = scalar_lea.vmem [#allocation0], 65
    %38 = vst.msk [vmem:[%s37] sm:$0x2] %vm34, %v33
    %v39 = vld [vmem:[#allocation1] sm:$0x3]
    %40 = vrot.lane.b32.xlu0 %v39, 116
    %v41 = vpop.permute.xlu0 %40
    %vm42 = vcmask 31744
    %s43 = scalar_lea.vmem [#allocation0], 3
    %44 = vst.msk [vmem:[%s43] sm:$0x1] %vm42, %v41
    %s45 = scalar_lea.vmem [#allocation0], 66
    %46 = vst.msk [vmem:[%s45] sm:$0x2] %vm42, %v41
    %v47 = vld [vmem:[#allocation1] sm:$0x3]
    %48 = vrot.lane.b32.xlu0 %v47, 112
    %v49 = vpop.permute.xlu0 %48
    %vm50 = vcmask 31744
    %s51 = scalar_lea.vmem [#allocation0], 8
    %52 = vst.msk [vmem:[%s51] sm:$0x1] %vm50, %v49
    %s53 = scalar_lea.vmem [#allocation0], 71
    %54 = vst.msk [vmem:[%s53] sm:$0x2] %vm50, %v49
    %v55 = vld [vmem:[#allocation1] sm:$0x3]
    %56 = vrot.lane.b32.xlu0 %v55, 108
    %v57 = vpop.permute.xlu0 %56
    %vm58 = vcmask 31744
    %s59 = scalar_lea.vmem [#allocation0], 9
    %60 = vst.msk [vmem:[%s59] sm:$0x1] %vm58, %v57
    %s61 = scalar_lea.vmem [#allocation0], 72
    %62 = vst.msk [vmem:[%s61] sm:$0x2] %vm58, %v57
    %v63 = vld [vmem:[#allocation1] sm:$0x3]
    %64 = vrot.lane.b32.xlu0 %v63, 104
    %v65 = vpop.permute.xlu0 %64
    %vm66 = vcmask 31744
    %s67 = scalar_lea.vmem [#allocation0], 10
    %68 = vst.msk [vmem:[%s67] sm:$0x1] %vm66, %v65
    %s69 = scalar_lea.vmem [#allocation0], 73
    %70 = vst.msk [vmem:[%s69] sm:$0x2] %vm66, %v65
    %v71 = vld [vmem:[#allocation1] sm:$0x3]
    %72 = vrot.lane.b32.xlu0 %v71, 100
    %v73 = vpop.permute.xlu0 %72
    %vm74 = vcmask 31744
    %s75 = scalar_lea.vmem [#allocation0], 11
    %76 = vst.msk [vmem:[%s75] sm:$0x1] %vm74, %v73
    %s77 = scalar_lea.vmem [#allocation0], 74
    %78 = vst.msk [vmem:[%s77] sm:$0x2] %vm74, %v73
    %v79 = vld [vmem:[#allocation1] sm:$0x3]
    %80 = vrot.lane.b32.xlu0 %v79, 96
    %v81 = vpop.permute.xlu0 %80
    %vm82 = vcmask 31744
    %s83 = scalar_lea.vmem [#allocation0], 16
    %84 = vst.msk [vmem:[%s83] sm:$0x1] %vm82, %v81
    %s85 = scalar_lea.vmem [#allocation0], 79
    %86 = vst.msk [vmem:[%s85] sm:$0x2] %vm82, %v81
    %v87 = vld [vmem:[#allocation1] sm:$0x3]
    %88 = vrot.lane.b32.xlu0 %v87, 92
    %v89 = vpop.permute.xlu0 %88
    %vm90 = vcmask 31744
    %s91 = scalar_lea.vmem [#allocation0], 17
    %92 = vst.msk [vmem:[%s91] sm:$0x1] %vm90, %v89
    %s93 = scalar_lea.vmem [#allocation0], 80
    %94 = vst.msk [vmem:[%s93] sm:$0x2] %vm90, %v89
    %v95 = vld [vmem:[#allocation1] sm:$0x3]
    %96 = vrot.lane.b32.xlu0 %v95, 88
    %v97 = vpop.permute.xlu0 %96
    %vm98 = vcmask 31744
    %s99 = scalar_lea.vmem [#allocation0], 18
    %100 = vst.msk [vmem:[%s99] sm:$0x1] %vm98, %v97
    %s101 = scalar_lea.vmem [#allocation0], 81
    %102 = vst.msk [vmem:[%s101] sm:$0x2] %vm98, %v97
    %v103 = vld [vmem:[#allocation1] sm:$0x3]
    %104 = vrot.lane.b32.xlu0 %v103, 84
    %v105 = vpop.permute.xlu0 %104
    %vm106 = vcmask 31744
    %s107 = scalar_lea.vmem [#allocation0], 19
    %108 = vst.msk [vmem:[%s107] sm:$0x1] %vm106, %v105
    %s109 = scalar_lea.vmem [#allocation0], 82
    %110 = vst.msk [vmem:[%s109] sm:$0x2] %vm106, %v105
    %v111 = vld [vmem:[#allocation1] sm:$0x3]
    %112 = vrot.lane.b32.xlu0 %v111, 80
    %v113 = vpop.permute.xlu0 %112
    %vm114 = vcmask 31744
    %s115 = scalar_lea.vmem [#allocation0], 24
    %116 = vst.msk [vmem:[%s115] sm:$0x1] %vm114, %v113
    %s117 = scalar_lea.vmem [#allocation0], 87
    %118 = vst.msk [vmem:[%s117] sm:$0x2] %vm114, %v113
    %v119 = vld [vmem:[#allocation1] sm:$0x3]
    %120 = vrot.lane.b32.xlu0 %v119, 76
    %v121 = vpop.permute.xlu0 %120
    %vm122 = vcmask 31744
    %s123 = scalar_lea.vmem [#allocation0], 25
    %124 = vst.msk [vmem:[%s123] sm:$0x1] %vm122, %v121
    %s125 = scalar_lea.vmem [#allocation0], 88
    %126 = vst.msk [vmem:[%s125] sm:$0x2] %vm122, %v121
    %v127 = vld [vmem:[#allocation1] sm:$0x3]
    %128 = vrot.lane.b32.xlu0 %v127, 72
    %v129 = vpop.permute.xlu0 %128
    %vm130 = vcmask 31744
    %s131 = scalar_lea.vmem [#allocation0], 26
    %132 = vst.msk [vmem:[%s131] sm:$0x1] %vm130, %v129
    %s133 = scalar_lea.vmem [#allocation0], 89
    %134 = vst.msk [vmem:[%s133] sm:$0x2] %vm130, %v129
    %v135 = vld [vmem:[#allocation1] sm:$0x3]
    %136 = vrot.lane.b32.xlu0 %v135, 68
    %v137 = vpop.permute.xlu0 %136
    %vm138 = vcmask 31744
    %s139 = scalar_lea.vmem [#allocation0], 27
    %140 = vst.msk [vmem:[%s139] sm:$0x1] %vm138, %v137
    %s141 = scalar_lea.vmem [#allocation0], 90
    %142 = vst.msk [vmem:[%s141] sm:$0x2] %vm138, %v137
    %v143 = vld [vmem:[#allocation1] sm:$0x3]
    %144 = vrot.lane.b32.xlu0 %v143, 64
    %v145 = vpop.permute.xlu0 %144
    %vm146 = vcmask 31744
    %s147 = scalar_lea.vmem [#allocation0], 32
    %148 = vst.msk [vmem:[%s147] sm:$0x1] %vm146, %v145
    %s149 = scalar_lea.vmem [#allocation0], 95
    %150 = vst.msk [vmem:[%s149] sm:$0x2] %vm146, %v145
    %v151 = vld [vmem:[#allocation1] sm:$0x3]
    %152 = vrot.lane.b32.xlu0 %v151, 60
    %v153 = vpop.permute.xlu0 %152
    %vm154 = vcmask 31744
    %s155 = scalar_lea.vmem [#allocation0], 33
    %156 = vst.msk [vmem:[%s155] sm:$0x1] %vm154, %v153
    %s157 = scalar_lea.vmem [#allocation0], 96
    %158 = vst.msk [vmem:[%s157] sm:$0x2] %vm154, %v153
    %v159 = vld [vmem:[#allocation1] sm:$0x3]
    %160 = vrot.lane.b32.xlu0 %v159, 56
    %v161 = vpop.permute.xlu0 %160
    %vm162 = vcmask 31744
    %s163 = scalar_lea.vmem [#allocation0], 34
    %164 = vst.msk [vmem:[%s163] sm:$0x1] %vm162, %v161
    %s165 = scalar_lea.vmem [#allocation0], 97
    %166 = vst.msk [vmem:[%s165] sm:$0x2] %vm162, %v161
    %v167 = vld [vmem:[#allocation1] sm:$0x3]
    %168 = vrot.lane.b32.xlu0 %v167, 52
    %v169 = vpop.permute.xlu0 %168
    %vm170 = vcmask 31744
    %s171 = scalar_lea.vmem [#allocation0], 35
    %172 = vst.msk [vmem:[%s171] sm:$0x1] %vm170, %v169
    %s173 = scalar_lea.vmem [#allocation0], 98
    %174 = vst.msk [vmem:[%s173] sm:$0x2] %vm170, %v169
    %v175 = vld [vmem:[#allocation1] sm:$0x3]
    %176 = vrot.lane.b32.xlu0 %v175, 48
    %v177 = vpop.permute.xlu0 %176
    %vm178 = vcmask 31744
    %s179 = scalar_lea.vmem [#allocation0], 40
    %180 = vst.msk [vmem:[%s179] sm:$0x1] %vm178, %v177
    %s181 = scalar_lea.vmem [#allocation0], 103
    %182 = vst.msk [vmem:[%s181] sm:$0x2] %vm178, %v177
    %v183 = vld [vmem:[#allocation1] sm:$0x3]
    %184 = vrot.lane.b32.xlu0 %v183, 44
    %v185 = vpop.permute.xlu0 %184
    %vm186 = vcmask 31744
    %s187 = scalar_lea.vmem [#allocation0], 41
    %188 = vst.msk [vmem:[%s187] sm:$0x1] %vm186, %v185
    %s189 = scalar_lea.vmem [#allocation0], 104
    %190 = vst.msk [vmem:[%s189] sm:$0x2] %vm186, %v185
    %v191 = vld [vmem:[#allocation1] sm:$0x3]
    %192 = vrot.lane.b32.xlu0 %v191, 40
    %v193 = vpop.permute.xlu0 %192
    %vm194 = vcmask 31744
    %s195 = scalar_lea.vmem [#allocation0], 42
    %196 = vst.msk [vmem:[%s195] sm:$0x1] %vm194, %v193
    %s197 = scalar_lea.vmem [#allocation0], 105
    %198 = vst.msk [vmem:[%s197] sm:$0x2] %vm194, %v193
    %v199 = vld [vmem:[#allocation1] sm:$0x3]
    %200 = vrot.lane.b32.xlu0 %v199, 36
    %v201 = vpop.permute.xlu0 %200
    %vm202 = vcmask 31744
    %s203 = scalar_lea.vmem [#allocation0], 43
    %204 = vst.msk [vmem:[%s203] sm:$0x1] %vm202, %v201
    %s205 = scalar_lea.vmem [#allocation0], 106
    %206 = vst.msk [vmem:[%s205] sm:$0x2] %vm202, %v201
    %v207 = vld [vmem:[#allocation1] sm:$0x3]
    %208 = vrot.lane.b32.xlu0 %v207, 32
    %v209 = vpop.permute.xlu0 %208
    %vm210 = vcmask 31744
    %s211 = scalar_lea.vmem [#allocation0], 48
    %212 = vst.msk [vmem:[%s211] sm:$0x1] %vm210, %v209
    %s213 = scalar_lea.vmem [#allocation0], 111
    %214 = vst.msk [vmem:[%s213] sm:$0x2] %vm210, %v209
    %v215 = vld [vmem:[#allocation1] sm:$0x3]
    %216 = vrot.lane.b32.xlu0 %v215, 28
    %v217 = vpop.permute.xlu0 %216
    %vm218 = vcmask 31744
    %s219 = scalar_lea.vmem [#allocation0], 49
    %220 = vst.msk [vmem:[%s219] sm:$0x1] %vm218, %v217
    %s221 = scalar_lea.vmem [#allocation0], 112
    %222 = vst.msk [vmem:[%s221] sm:$0x2] %vm218, %v217
    %v223 = vld [vmem:[#allocation1] sm:$0x3]
    %224 = vrot.lane.b32.xlu0 %v223, 24
    %v225 = vpop.permute.xlu0 %224
    %vm226 = vcmask 31744
    %s227 = scalar_lea.vmem [#allocation0], 50
    %228 = vst.msk [vmem:[%s227] sm:$0x1] %vm226, %v225
    %s229 = scalar_lea.vmem [#allocation0], 113
    %230 = vst.msk [vmem:[%s229] sm:$0x2] %vm226, %v225
    %v231 = vld [vmem:[#allocation1] sm:$0x3]
    %232 = vrot.lane.b32.xlu0 %v231, 20
    %v233 = vpop.permute.xlu0 %232
    %vm234 = vcmask 31744
    %s235 = scalar_lea.vmem [#allocation0], 51
    %236 = vst.msk [vmem:[%s235] sm:$0x1] %vm234, %v233
    %s237 = scalar_lea.vmem [#allocation0], 114
    %238 = vst.msk [vmem:[%s237] sm:$0x2] %vm234, %v233
    %v239 = vld [vmem:[#allocation1] sm:$0x3]
    %240 = vrot.lane.b32.xlu0 %v239, 16
    %v241 = vpop.permute.xlu0 %240
    %vm242 = vcmask 31744
    %s243 = scalar_lea.vmem [#allocation0], 56
    %244 = vst.msk [vmem:[%s243] sm:$0x1] %vm242, %v241
    %s245 = scalar_lea.vmem [#allocation0], 119
    %246 = vst.msk [vmem:[%s245] sm:$0x2] %vm242, %v241
    %v247 = vld [vmem:[#allocation1] sm:$0x3]
    %248 = vrot.lane.b32.xlu0 %v247, 12
    %v249 = vpop.permute.xlu0 %248
    %vm250 = vcmask 31744
    %s251 = scalar_lea.vmem [#allocation0], 57
    %252 = vst.msk [vmem:[%s251] sm:$0x1] %vm250, %v249
    %s253 = scalar_lea.vmem [#allocation0], 120
    %254 = vst.msk [vmem:[%s253] sm:$0x2] %vm250, %v249
    %v255 = vld [vmem:[#allocation1] sm:$0x3]
    %256 = vrot.lane.b32.xlu0 %v255, 8
    %v257 = vpop.permute.xlu0 %256
    %vm258 = vcmask 31744
    %s259 = scalar_lea.vmem [#allocation0], 58
    %260 = vst.msk [vmem:[%s259] sm:$0x1] %vm258, %v257
    %s261 = scalar_lea.vmem [#allocation0], 121
    %262 = vst.msk [vmem:[%s261] sm:$0x2] %vm258, %v257
    %v263 = vld [vmem:[#allocation1] sm:$0x3]
    %264 = vrot.lane.b32.xlu0 %v263, 4
    %v265 = vpop.permute.xlu0 %264
    %vm266 = vcmask 31744
    %s267 = scalar_lea.vmem [#allocation0], 59
    %268 = vst.msk [vmem:[%s267] sm:$0x1] %vm266, %v265
    %s269 = scalar_lea.vmem [#allocation0], 122
    %270 = vst.msk [vmem:[%s269] sm:$0x2] %vm266, %v265
    %s272 = smul.u32 2, 2
    %s273 = sshllo.u32 0, %s272
    %s274 = sshrl.u32 %s272, 1
    %v275 = vld [vmem:[#allocation0] sm:%s273]
    %v276 = vpack.c.bf16 0.0, %v275
    %s277 = sshllo.u32 0, %s274
    %278 = vst [vmem:[%s1] sm:%s277] %v276
    %s279 = scalar_lea.vmem [#allocation0], 8
    %v280 = vld [vmem:[%s279] sm:%s273]
    %v281 = vpack.c.bf16 0.0, %v280
    %s282 = sshllo.u32 0, %s274
    %s283 = scalar_lea.vmem %s1, 2
    %284 = vst [vmem:[%s283] sm:%s282] %v281
    %s285 = scalar_lea.vmem [#allocation0], 16
    %v286 = vld [vmem:[%s285] sm:%s273]
    %v287 = vpack.c.bf16 0.0, %v286
    %s288 = sshllo.u32 0, %s274
    %s289 = smul.addr 2, 2
    %s290 = scalar_lea.vmem %s1, %s289
    %291 = vst [vmem:[%s290] sm:%s288] %v287
    %s292 = scalar_lea.vmem [#allocation0], 24
    %v293 = vld [vmem:[%s292] sm:%s273]
    %v294 = vpack.c.bf16 0.0, %v293
    %s295 = sshllo.u32 0, %s274
    %s296 = smul.addr 2, 3
    %s297 = scalar_lea.vmem %s1, %s296
    %298 = vst [vmem:[%s297] sm:%s295] %v294
    %s299 = scalar_lea.vmem [#allocation0], 32
    %v300 = vld [vmem:[%s299] sm:%s273]
    %v301 = vpack.c.bf16 0.0, %v300
    %s302 = sshllo.u32 0, %s274
    %s303 = smul.addr 2, 4
    %s304 = scalar_lea.vmem %s1, %s303
    %305 = vst [vmem:[%s304] sm:%s302] %v301
    %s306 = scalar_lea.vmem [#allocation0], 40
    %v307 = vld [vmem:[%s306] sm:%s273]
    %v308 = vpack.c.bf16 0.0, %v307
    %s309 = sshllo.u32 0, %s274
    %s310 = smul.addr 2, 5
    %s311 = scalar_lea.vmem %s1, %s310
    %312 = vst [vmem:[%s311] sm:%s309] %v308
    %s313 = scalar_lea.vmem [#allocation0], 48
    %v314 = vld [vmem:[%s313] sm:%s273]
    %v315 = vpack.c.bf16 0.0, %v314
    %s316 = sshllo.u32 0, %s274
    %s317 = smul.addr 2, 6
    %s318 = scalar_lea.vmem %s1, %s317
    %319 = vst [vmem:[%s318] sm:%s316] %v315
    %s320 = scalar_lea.vmem [#allocation0], 56
    %v321 = vld [vmem:[%s320] sm:%s273]
    %v322 = vpack.c.bf16 0.0, %v321
    %s323 = sshllo.u32 0, %s274
    %s324 = smul.addr 2, 7
    %s325 = scalar_lea.vmem %s1, %s324
    %326 = vst [vmem:[%s325] sm:%s323] %v322
    %s327 = scalar_lea.vmem [#allocation0], 64
    %v328 = vld [vmem:[%s327] sm:%s273]
    %v329 = vpack.c.bf16 0.0, %v328
    %s330 = sshllo.u32 0, %s274
    %s331 = smul.addr 2, 8
    %s332 = scalar_lea.vmem %s1, %s331
    %333 = vst [vmem:[%s332] sm:%s330] %v329
    %s334 = scalar_lea.vmem [#allocation0], 72
    %v335 = vld [vmem:[%s334] sm:%s273]
    %v336 = vpack.c.bf16 0.0, %v335
    %s337 = sshllo.u32 0, %s274
    %s338 = smul.addr 2, 9
    %s339 = scalar_lea.vmem %s1, %s338
    %340 = vst [vmem:[%s339] sm:%s337] %v336
    %s341 = scalar_lea.vmem [#allocation0], 80
    %v342 = vld [vmem:[%s341] sm:%s273]
    %v343 = vpack.c.bf16 0.0, %v342
    %s344 = sshllo.u32 0, %s274
    %s345 = smul.addr 2, 10
    %s346 = scalar_lea.vmem %s1, %s345
    %347 = vst [vmem:[%s346] sm:%s344] %v343
    %s348 = scalar_lea.vmem [#allocation0], 88
    %v349 = vld [vmem:[%s348] sm:%s273]
    %v350 = vpack.c.bf16 0.0, %v349
    %s351 = sshllo.u32 0, %s274
    %s352 = smul.addr 2, 11
    %s353 = scalar_lea.vmem %s1, %s352
    %354 = vst [vmem:[%s353] sm:%s351] %v350
    %s355 = scalar_lea.vmem [#allocation0], 96
    %v356 = vld [vmem:[%s355] sm:%s273]
    %v357 = vpack.c.bf16 0.0, %v356
    %s358 = sshllo.u32 0, %s274
    %s359 = smul.addr 2, 12
    %s360 = scalar_lea.vmem %s1, %s359
    %361 = vst [vmem:[%s360] sm:%s358] %v357
    %s362 = scalar_lea.vmem [#allocation0], 104
    %v363 = vld [vmem:[%s362] sm:%s273]
    %v364 = vpack.c.bf16 0.0, %v363
    %s365 = sshllo.u32 0, %s274
    %s366 = smul.addr 2, 13
    %s367 = scalar_lea.vmem %s1, %s366
    %368 = vst [vmem:[%s367] sm:%s365] %v364
    %s369 = scalar_lea.vmem [#allocation0], 112
    %v370 = vld [vmem:[%s369] sm:%s273]
    %v371 = vpack.c.bf16 0.0, %v370
    %s372 = sshllo.u32 0, %s274
    %s373 = smul.addr 2, 14
    %s374 = scalar_lea.vmem %s1, %s373
    %375 = vst [vmem:[%s374] sm:%s372] %v371
    %s376 = scalar_lea.vmem [#allocation0], 120
    %v377 = vld [vmem:[%s376] sm:%s273]
    %v378 = vpack.c.bf16 0.0, %v377
    %s379 = sshllo.u32 0, %s274
    %s380 = smul.addr 2, 15
    %s381 = scalar_lea.vmem %s1, %s380
    %382 = vst [vmem:[%s381] sm:%s379] %v378

// kernel: _lambda_.8
$region0: #{_lambda_.8}
  #allocation0 [shape = 'u32[]', space=smem, size = 0x4, offset = 0x4, fixed_abs, tag = 'smem constant byte address 0x4 - core index']
  #allocation1 [shape = 'u32[144,128]{1,0:T(1,128)}', space=vmem, size = 0x12000, scoped, tag = 'internal scratch']
  #allocation2 [shape = 'f32[16,128]{1,0:T(8,128)}', space=vmem, size = 0x2000, scoped, tag = 'scratch operand']
  %s0 = inlined_call_operand.vmem [shape: bf16[16,128], index: 0, kind: input, shape index: {}]
  %s1 = inlined_call_operand.vmem [shape: bf16[128,128], index: 1, kind: input, shape index: {}]
  %s2 = inlined_call_operand.vmem [shape: f32[1,128], index: 2, kind: input, shape index: {}]
  %s3 = inlined_call_operand.vmem [shape: f32[16,128], index: 3, kind: input, shape index: {}]
  %s4 = inlined_call_operand.vmem [shape: f32[16,128], index: 4, kind: output, shape index: {0}]
  %s5 = inlined_call_operand.vmem [shape: f32[16,128], index: 5, kind: output, shape index: {1}]
  %s6 = inlined_call_operand.vmem [shape: f32[16,128], index: 6, kind: output, shape index: {2}]
  %7 = xla_tuple %s4, %s5, %s6
  %s8 = sld [smem:[#allocation0]]
  $region50: #{_lambda_.8} parent=0
    _
  %s10 = ssub.s32 1, %s8
  %s11 = scalar_select 0, %s10, %s8
  // Predicated region
  $region2: #{_lambda_.8} parent=0 // pred_check
    _
  $region3: #{_lambda_.8} parent=0 // pred_check_branch
    %13 = sbr.rel (0) target = $region5
  $region4: #{_lambda_.8} parent=0 // pred_region
    _
  $region5: #{_lambda_.8} parent=0 // pred_fallthru
    _
  // Predicated region
  $region6: #{_lambda_.8} parent=0 // pred_check
    _
  $region7: #{_lambda_.8} parent=0 // pred_check_branch
    %15 = sbr.rel (0) target = $region9
  $region8: #{_lambda_.8} parent=0 // pred_region
    _
  $region9: #{_lambda_.8} parent=0 // pred_fallthru
    _
  // Predicated region
  $region10: #{_lambda_.8} parent=0 // pred_check
    _
  $region11: #{_lambda_.8} parent=0 // pred_check_branch
    %17 = sbr.rel (0) target = $region13
  $region12: #{_lambda_.8} parent=0 // pred_region
    _
  $region13: #{_lambda_.8} parent=0 // pred_fallthru
    _
  // Predicated region
  $region14: #{_lambda_.8} parent=0 // pred_check
    _
  $region15: #{_lambda_.8} parent=0 // pred_check_branch
    %19 = sbr.rel (0) target = $region17
  $region16: #{_lambda_.8} parent=0 // pred_region
    _
  $region17: #{_lambda_.8} parent=0 // pred_fallthru
    _
  %p21 = scmp.eq.s32.totalorder 0, 0
  // Predicated region
  $region18: #{_lambda_.8} parent=0 // pred_check
    %p22 = pneg %p21
  $region19: #{_lambda_.8} parent=0 // pred_check_branch
    %24 = sbr.rel (%p22) target = $region21
  $region20: #{_lambda_.8} parent=0 // pred_region
    %25 = vst [vmem:[#allocation2] sm:$0xff] 0.0
    %26 = vst [vmem:[#allocation2 + $0x8] sm:$0xff] 0.0
  $region21: #{_lambda_.8} parent=0 // pred_fallthru
    _
  %v27 = vld [vmem:[#allocation2] sm:$0xff]
  %v28 = vld [vmem:[#allocation2 + $0x8] sm:$0xff]
  %v29 = vld [vmem:[%s0] sm:$0xf]
  %v30 = vld [vmem:[%s0 + $0x4] sm:$0xf]
  %v31 = vld [vmem:[%s1] sm:$0xf]
  %v32 = vld [vmem:[%s1 + $0x4] sm:$0xf]
  %v33 = vld [vmem:[%s1 + $0x8] sm:$0xf]
  %v34 = vld [vmem:[%s1 + $0xc] sm:$0xf]
  %v35 = vld [vmem:[%s1 + $0x10] sm:$0xf]
  %v36 = vld [vmem:[%s1 + $0x14] sm:$0xf]
  %v37 = vld [vmem:[%s1 + $0x18] sm:$0xf]
  %v38 = vld [vmem:[%s1 + $0x1c] sm:$0xf]
  %v39 = vld [vmem:[%s1 + $0x20] sm:$0xf]
  %v40 = vld [vmem:[%s1 + $0x24] sm:$0xf]
  %v41 = vld [vmem:[%s1 + $0x28] sm:$0xf]
  %v42 = vld [vmem:[%s1 + $0x2c] sm:$0xf]
  %v43 = vld [vmem:[%s1 + $0x30] sm:$0xf]
  %v44 = vld [vmem:[%s1 + $0x34] sm:$0xf]
  %v45 = vld [vmem:[%s1 + $0x38] sm:$0xf]
  %v46 = vld [vmem:[%s1 + $0x3c] sm:$0xf]
  %v49 = vunpack.c.l.b16 %v29
  %v50 = vunpack.c.l.b16 %v30
  %v51 = vpack.c.b16 %v50, %v49
  %v69 = vunpack.c.l.b16 %v31
  %v70 = vunpack.c.l.b16 %v32
  %v71 = vunpack.c.l.b16 %v33
  %v72 = vunpack.c.l.b16 %v34
  %v73 = vunpack.c.l.b16 %v35
  %v74 = vunpack.c.l.b16 %v36
  %v75 = vunpack.c.l.b16 %v37
  %v76 = vunpack.c.l.b16 %v38
  %v77 = vunpack.c.l.b16 %v39
  %v78 = vunpack.c.l.b16 %v40
  %v79 = vunpack.c.l.b16 %v41
  %v80 = vunpack.c.l.b16 %v42
  %v81 = vunpack.c.l.b16 %v43
  %v82 = vunpack.c.l.b16 %v44
  %v83 = vunpack.c.l.b16 %v45
  %v84 = vunpack.c.l.b16 %v46
  %v85 = vpack.c.b16 %v70, %v69
  %v86 = vpack.c.b16 %v72, %v71
  %v87 = vpack.c.b16 %v74, %v73
  %v88 = vpack.c.b16 %v76, %v75
  %v89 = vpack.c.b16 %v78, %v77
  %v90 = vpack.c.b16 %v80, %v79
  %v91 = vpack.c.b16 %v82, %v81
  %v92 = vpack.c.b16 %v84, %v83
  %101 = vmatprep.subr.bf16.mxu0 0
  %102 = vmatpush1.bf16.msra.mxu0 %v85
  %103 = vmatprep.subr.bf16.mxu0 0
  %104 = vmatpush1.bf16.msra.mxu0 %v86
  %105 = vmatprep.subr.bf16.mxu0 0
  %106 = vmatpush1.bf16.msra.mxu0 %v87
  %107 = vmatprep.subr.bf16.mxu0 0
  %108 = vmatpush1.bf16.msra.mxu0 %v88
  %109 = vmatprep.subr.bf16.mxu0 0
  %110 = vmatpush1.bf16.msra.mxu0 %v89
  %111 = vmatprep.subr.bf16.mxu0 0
  %112 = vmatpush1.bf16.msra.mxu0 %v90
  %113 = vmatprep.subr.bf16.mxu0 0
  %114 = vmatpush1.bf16.msra.mxu0 %v91
  %115 = vmatprep.subr.bf16.mxu0 0
  %116 = vmatpush1.bf16.msra.mxu0 %v92
  %117 = vmatprep.subr.bf16.mxu0 0
  %118 = vmatpush1.bf16.msra.mxu0 0
  %119 = vmatprep.subr.bf16.mxu0 0
  %120 = vmatpush1.bf16.msra.mxu0 0
  %121 = vmatprep.subr.bf16.mxu0 0
  %122 = vmatpush1.bf16.msra.mxu0 0
  %123 = vmatprep.subr.bf16.mxu0 0
  %124 = vmatpush1.bf16.msra.mxu0 0
  %125 = vmatprep.subr.bf16.mxu0 0
  %126 = vmatpush1.bf16.msra.mxu0 0
  %127 = vmatprep.subr.bf16.mxu0 0
  %128 = vmatpush1.bf16.msra.mxu0 0
  %129 = vmatprep.subr.bf16.mxu0 0
  %130 = vmatpush1.bf16.msra.mxu0 0
  %131 = vmatprep.subr.bf16.mxu0 0
  %132 = vmatpush1.bf16.msra.mxu0 0
  %133 = vmatprep.mubr.bf16.mxu0 0
  %134 = vmatmul.mubr.bf16.gmra.mrb[0].mxu0 %v51
  %v135 = vpop.f32.mrb[0].mxu0
  %v136 = vadd.f32 0.0, %v135
  %v137 = vpop.f32.mrb[0].mxu0
  %v138 = vpop.f32.mrb[0].mxu0
  %v139 = vadd.f32 0.0, %v138
  %v140 = vpop.f32.mrb[0].mxu0
  %141 = vdwg.mxu0
  %v142 = vadd.f32 %v27, %v136
  %v143 = vadd.f32 %v28, %v139
  %144 = vst [vmem:[#allocation2] sm:$0xff] %v142
  %145 = vst [vmem:[#allocation2 + $0x8] sm:$0xff] %v143
  // Predicated region
  $region22: #{_lambda_.8} parent=0 // pred_check
    %p146 = pneg %p21
  $region23: #{_lambda_.8} parent=0 // pred_check_branch
    %148 = sbr.rel (%p146) target = $region25
  $region24: #{_lambda_.8} parent=0 // pred_region
    %v149 = vld [vmem:[#allocation2] sm:$0xff]
    %v150 = vld [vmem:[#allocation2 + $0x8] sm:$0xff]
    %v151 = vld [vmem:[%s2] sm:$0x1]
    %v153 = vlaneseq
    %v154 = vshrl.u32 %v153, 7
    %v155 = vsub.s32 0, %v154
    %v156 = vrot.slane %v151, %v155
    %v158 = vadd.f32 %v149, %v156
    %v159 = vadd.f32 %v150, %v156
    %v160 = vlaneseq
    %v161 = vshrl.u32 %v160, 7
    %v162 = vadd.s32 %v161, 8
    %v163 = vadd.s32 %v161, 16
    %v164 = vadd.s32 %v161, 24
    %v165 = vadd.s32 %v161, 32
    %v166 = vadd.s32 %v161, 40
    %v167 = vadd.s32 %v161, 48
    %v168 = vadd.s32 %v161, 56
    %v169 = vadd.s32 %v161, 64
    %v170 = vadd.s32 %v161, 72
    %v171 = vadd.s32 %v161, 80
    %v172 = vadd.s32 %v161, 88
    %v173 = vadd.s32 %v161, 96
    %v174 = vadd.s32 %v161, 104
    %v175 = vadd.s32 %v161, 112
    %v176 = vadd.s32 %v161, 120
    %v177 = vlaneseq
    %v178 = vand.u32 %v177, 127
    %vm179 = vcmp.lt.s32.totalorder %v178, 6
    %vm180 = vcmp.eq.s32.totalorder %v161, %v178
    %vm181 = vcmp.eq.s32.totalorder %v162, %v178
    %vm182 = vcmp.eq.s32.totalorder %v163, %v178
    %vm183 = vcmp.eq.s32.totalorder %v164, %v178
    %vm184 = vcmp.eq.s32.totalorder %v165, %v178
    %vm185 = vcmp.eq.s32.totalorder %v166, %v178
    %vm186 = vcmp.eq.s32.totalorder %v167, %v178
    %vm187 = vcmp.eq.s32.totalorder %v168, %v178
    %vm188 = vcmp.eq.s32.totalorder %v169, %v178
    %vm189 = vcmp.eq.s32.totalorder %v170, %v178
    %vm190 = vcmp.eq.s32.totalorder %v171, %v178
    %vm191 = vcmp.eq.s32.totalorder %v172, %v178
    %vm192 = vcmp.eq.s32.totalorder %v173, %v178
    %vm193 = vcmp.eq.s32.totalorder %v174, %v178
    %vm194 = vcmp.eq.s32.totalorder %v175, %v178
    %vm195 = vcmp.eq.s32.totalorder %v176, %v178
    %vm196 = vmand %vm180, %vm179
    %vm197 = vmand %vm181, %vm179
    %vm198 = vmand %vm182, %vm179
    %vm199 = vmand %vm183, %vm179
    %vm200 = vmand %vm184, %vm179
    %vm201 = vmand %vm185, %vm179
    %vm202 = vmand %vm186, %vm179
    %vm203 = vmand %vm187, %vm179
    %vm204 = vmand %vm188, %vm179
    %vm205 = vmand %vm189, %vm179
    %vm206 = vmand %vm190, %vm179
    %vm207 = vmand %vm191, %vm179
    %vm208 = vmand %vm192, %vm179
    %vm209 = vmand %vm193, %vm179
    %vm210 = vmand %vm194, %vm179
    %vm211 = vmand %vm195, %vm179
    %v212 = vsel %vm196, 1, 0
    %v213 = vsel %vm197, 1, 0
    %v214 = vsel %vm198, 1, 0
    %v215 = vsel %vm199, 1, 0
    %v216 = vsel %vm200, 1, 0
    %v217 = vsel %vm201, 1, 0
    %v218 = vsel %vm202, 1, 0
    %v219 = vsel %vm203, 1, 0
    %v220 = vsel %vm204, 1, 0
    %v221 = vsel %vm205, 1, 0
    %v222 = vsel %vm206, 1, 0
    %v223 = vsel %vm207, 1, 0
    %v224 = vsel %vm208, 1, 0
    %v225 = vsel %vm209, 1, 0
    %v226 = vsel %vm210, 1, 0
    %v227 = vsel %vm211, 1, 0
    %v228 = vcvt.s32.f32 %v212
    %v229 = vcvt.s32.f32 %v213
    %v230 = vcvt.s32.f32 %v214
    %v231 = vcvt.s32.f32 %v215
    %v232 = vcvt.s32.f32 %v216
    %v233 = vcvt.s32.f32 %v217
    %v234 = vcvt.s32.f32 %v218
    %v235 = vcvt.s32.f32 %v219
    %v236 = vcvt.s32.f32 %v220
    %v237 = vcvt.s32.f32 %v221
    %v238 = vcvt.s32.f32 %v222
    %v239 = vcvt.s32.f32 %v223
    %v240 = vcvt.s32.f32 %v224
    %v241 = vcvt.s32.f32 %v225
    %v242 = vcvt.s32.f32 %v226
    %v243 = vcvt.s32.f32 %v227
    %v244 = vadd.s32 %v178, 6
    %vm245 = vcmp.eq.s32.totalorder %v161, %v244
    %vm246 = vcmp.eq.s32.totalorder %v162, %v244
    %vm247 = vcmp.eq.s32.totalorder %v163, %v244
    %vm248 = vcmp.eq.s32.totalorder %v164, %v244
    %vm249 = vcmp.eq.s32.totalorder %v165, %v244
    %vm250 = vcmp.eq.s32.totalorder %v166, %v244
    %vm251 = vcmp.eq.s32.totalorder %v167, %v244
    %vm252 = vcmp.eq.s32.totalorder %v168, %v244
    %vm253 = vcmp.eq.s32.totalorder %v169, %v244
    %vm254 = vcmp.eq.s32.totalorder %v170, %v244
    %vm255 = vcmp.eq.s32.totalorder %v171, %v244
    %vm256 = vcmp.eq.s32.totalorder %v172, %v244
    %vm257 = vcmp.eq.s32.totalorder %v173, %v244
    %vm258 = vcmp.eq.s32.totalorder %v174, %v244
    %vm259 = vcmp.eq.s32.totalorder %v175, %v244
    %vm260 = vcmp.eq.s32.totalorder %v176, %v244
    %vm261 = vmand %vm245, %vm179
    %vm262 = vmand %vm246, %vm179
    %vm263 = vmand %vm247, %vm179
    %vm264 = vmand %vm248, %vm179
    %vm265 = vmand %vm249, %vm179
    %vm266 = vmand %vm250, %vm179
    %vm267 = vmand %vm251, %vm179
    %vm268 = vmand %vm252, %vm179
    %vm269 = vmand %vm253, %vm179
    %vm270 = vmand %vm254, %vm179
    %vm271 = vmand %vm255, %vm179
    %vm272 = vmand %vm256, %vm179
    %vm273 = vmand %vm257, %vm179
    %vm274 = vmand %vm258, %vm179
    %vm275 = vmand %vm259, %vm179
    %vm276 = vmand %vm260, %vm179
    %v277 = vsel %vm261, 1, 0
    %v278 = vsel %vm262, 1, 0
    %v279 = vsel %vm263, 1, 0
    %v280 = vsel %vm264, 1, 0
    %v281 = vsel %vm265, 1, 0
    %v282 = vsel %vm266, 1, 0
    %v283 = vsel %vm267, 1, 0
    %v284 = vsel %vm268, 1, 0
    %v285 = vsel %vm269, 1, 0
    %v286 = vsel %vm270, 1, 0
    %v287 = vsel %vm271, 1, 0
    %v288 = vsel %vm272, 1, 0
    %v289 = vsel %vm273, 1, 0
    %v290 = vsel %vm274, 1, 0
    %v291 = vsel %vm275, 1, 0
    %v292 = vsel %vm276, 1, 0
    %v293 = vcvt.s32.f32 %v277
    %v294 = vcvt.s32.f32 %v278
    %v295 = vcvt.s32.f32 %v279
    %v296 = vcvt.s32.f32 %v280
    %v297 = vcvt.s32.f32 %v281
    %v298 = vcvt.s32.f32 %v282
    %v299 = vcvt.s32.f32 %v283
    %v300 = vcvt.s32.f32 %v284
    %v301 = vcvt.s32.f32 %v285
    %v302 = vcvt.s32.f32 %v286
    %v303 = vcvt.s32.f32 %v287
    %v304 = vcvt.s32.f32 %v288
    %v305 = vcvt.s32.f32 %v289
    %v306 = vcvt.s32.f32 %v290
    %v307 = vcvt.s32.f32 %v291
    %v308 = vcvt.s32.f32 %v292
    %309 = vmatprep.subr.mxu0 0.0
    %310 = vmatpush1.msra.mxu0 %v228
    %311 = vmatprep.subr.mxu0 0.0
    %312 = vmatpush1.msra.mxu0 %v229
    %313 = vmatprep.subr.mxu0 0.0
    %314 = vmatpush1.msra.mxu0 %v230
    %315 = vmatprep.subr.mxu0 0.0
    %316 = vmatpush1.msra.mxu0 %v231
    %317 = vmatprep.subr.mxu0 0.0
    %318 = vmatpush1.msra.mxu0 %v232
    %319 = vmatprep.subr.mxu0 0.0
    %320 = vmatpush1.msra.mxu0 %v233
    %321 = vmatprep.subr.mxu0 0.0
    %322 = vmatpush1.msra.mxu0 %v234
    %323 = vmatprep.subr.mxu0 0.0
    %324 = vmatpush1.msra.mxu0 %v235
    %325 = vmatprep.subr.mxu0 0.0
    %326 = vmatpush1.msra.mxu0 %v236
    %327 = vmatprep.subr.mxu0 0.0
    %328 = vmatpush1.msra.mxu0 %v237
    %329 = vmatprep.subr.mxu0 0.0
    %330 = vmatpush1.msra.mxu0 %v238
    %331 = vmatprep.subr.mxu0 0.0
    %332 = vmatpush1.msra.mxu0 %v239
    %333 = vmatprep.subr.mxu0 0.0
    %334 = vmatpush1.msra.mxu0 %v240
    %335 = vmatprep.subr.mxu0 0.0
    %336 = vmatpush1.msra.mxu0 %v241
    %337 = vmatprep.subr.mxu0 0.0
    %338 = vmatpush1.msra.mxu0 %v242
    %339 = vmatprep.subr.mxu0 0.0
    %340 = vmatpush1.msra.mxu0 %v243
    %341 = vmatprep.subr.mxu0 0.0
    %342 = vmatpush1.msra.mxu0 0.0
    %343 = vmatprep.subr.mxu0 0.0
    %344 = vmatpush1.msra.mxu0 0.0
    %345 = vmatprep.subr.mxu0 0.0
    %346 = vmatpush1.msra.mxu0 0.0
    %347 = vmatprep.subr.mxu0 0.0
    %348 = vmatpush1.msra.mxu0 0.0
    %349 = vmatprep.subr.mxu0 0.0
    %350 = vmatpush1.msra.mxu0 0.0
    %351 = vmatprep.subr.mxu0 0.0
    %352 = vmatpush1.msra.mxu0 0.0
    %353 = vmatprep.subr.mxu0 0.0
    %354 = vmatpush1.msra.mxu0 0.0
    %355 = vmatprep.subr.mxu0 0.0
    %356 = vmatpush1.msra.mxu0 0.0
    %357 = vmatprep.subr.mxu0 0.0
    %358 = vmatpush1.msra.mxu0 0.0
    %359 = vmatprep.subr.mxu0 0.0
    %360 = vmatpush1.msra.mxu0 0.0
    %361 = vmatprep.subr.mxu0 0.0
    %362 = vmatpush1.msra.mxu0 0.0
    %363 = vmatprep.subr.mxu0 0.0
    %364 = vmatpush1.msra.mxu0 0.0
    %365 = vmatprep.subr.mxu0 0.0
    %366 = vmatpush1.msra.mxu0 0.0
    %367 = vmatprep.subr.mxu0 0.0
    %368 = vmatpush1.msra.mxu0 0.0
    %369 = vmatprep.subr.mxu0 0.0
    %370 = vmatpush1.msra.mxu0 0.0
    %371 = vmatprep.subr.mxu0 0.0
    %372 = vmatpush1.msra.mxu0 0.0
    %373 = vmatprep.mubr.f32.mxu0 0.0
    %374 = vmatmul.mubr.f32.gmra.mrb[0].mxu0 %v158
    %v375 = vpop.f32.mrb[0].mxu0
    %v376 = vadd.f32 0.0, %v375
    %v377 = vpop.f32.mrb[0].mxu0
    %378 = vmatprep.mubr.f32.mxu0 0.0
    %379 = vmatmul.mubr.f32.gmra.mrb[0].mxu0 %v159
    %v380 = vpop.f32.mrb[0].mxu0
    %v381 = vadd.f32 0.0, %v380
    %v382 = vpop.f32.mrb[0].mxu0
    %383 = vdwg.mxu0
    %384 = vmatprep.subr.mxu0 0.0
    %385 = vmatpush1.msra.mxu0 %v293
    %386 = vmatprep.subr.mxu0 0.0
    %387 = vmatpush1.msra.mxu0 %v294
    %388 = vmatprep.subr.mxu0 0.0
    %389 = vmatpush1.msra.mxu0 %v295
    %390 = vmatprep.subr.mxu0 0.0
    %391 = vmatpush1.msra.mxu0 %v296
    %392 = vmatprep.subr.mxu0 0.0
    %393 = vmatpush1.msra.mxu0 %v297
    %394 = vmatprep.subr.mxu0 0.0
    %395 = vmatpush1.msra.mxu0 %v298
    %396 = vmatprep.subr.mxu0 0.0
    %397 = vmatpush1.msra.mxu0 %v299
    %398 = vmatprep.subr.mxu0 0.0
    %399 = vmatpush1.msra.mxu0 %v300
    %400 = vmatprep.subr.mxu0 0.0
    %401 = vmatpush1.msra.mxu0 %v301
    %402 = vmatprep.subr.mxu0 0.0
    %403 = vmatpush1.msra.mxu0 %v302
    %404 = vmatprep.subr.mxu0 0.0
    %405 = vmatpush1.msra.mxu0 %v303
    %406 = vmatprep.subr.mxu0 0.0
    %407 = vmatpush1.msra.mxu0 %v304
    %408 = vmatprep.subr.mxu0 0.0
    %409 = vmatpush1.msra.mxu0 %v305
    %410 = vmatprep.subr.mxu0 0.0
    %411 = vmatpush1.msra.mxu0 %v306
    %412 = vmatprep.subr.mxu0 0.0
    %413 = vmatpush1.msra.mxu0 %v307
    %414 = vmatprep.subr.mxu0 0.0
    %415 = vmatpush1.msra.mxu0 %v308
    %416 = vmatprep.subr.mxu0 0.0
    %417 = vmatpush1.msra.mxu0 0.0
    %418 = vmatprep.subr.mxu0 0.0
    %419 = vmatpush1.msra.mxu0 0.0
    %420 = vmatprep.subr.mxu0 0.0
    %421 = vmatpush1.msra.mxu0 0.0
    %422 = vmatprep.subr.mxu0 0.0
    %423 = vmatpush1.msra.mxu0 0.0
    %424 = vmatprep.subr.mxu0 0.0
    %425 = vmatpush1.msra.mxu0 0.0
    %426 = vmatprep.subr.mxu0 0.0
    %427 = vmatpush1.msra.mxu0 0.0
    %428 = vmatprep.subr.mxu0 0.0
    %429 = vmatpush1.msra.mxu0 0.0
    %430 = vmatprep.subr.mxu0 0.0
    %431 = vmatpush1.msra.mxu0 0.0
    %432 = vmatprep.subr.mxu0 0.0
    %433 = vmatpush1.msra.mxu0 0.0
    %434 = vmatprep.subr.mxu0 0.0
    %435 = vmatpush1.msra.mxu0 0.0
    %436 = vmatprep.subr.mxu0 0.0
    %437 = vmatpush1.msra.mxu0 0.0
    %438 = vmatprep.subr.mxu0 0.0
    %439 = vmatpush1.msra.mxu0 0.0
    %440 = vmatprep.subr.mxu0 0.0
    %441 = vmatpush1.msra.mxu0 0.0
    %442 = vmatprep.subr.mxu0 0.0
    %443 = vmatpush1.msra.mxu0 0.0
    %444 = vmatprep.subr.mxu0 0.0
    %445 = vmatpush1.msra.mxu0 0.0
    %446 = vmatprep.subr.mxu0 0.0
    %447 = vmatpush1.msra.mxu0 0.0
    %448 = vmatprep.mubr.f32.mxu0 0.0
    %449 = vmatmul.mubr.f32.gmra.mrb[0].mxu0 %v158
    %v450 = vpop.f32.mrb[0].mxu0
    %v451 = vadd.f32 0.0, %v450
    %v452 = vpop.f32.mrb[0].mxu0
    %453 = vmatprep.mubr.f32.mxu0 0.0
    %454 = vmatmul.mubr.f32.gmra.mrb[0].mxu0 %v159
    %v455 = vpop.f32.mrb[0].mxu0
    %v456 = vadd.f32 0.0, %v455
    %v457 = vpop.f32.mrb[0].mxu0
    %458 = vdwg.mxu0
    %v459 = vld [vmem:[%s3] sm:$0xff]
    %v460 = vld [vmem:[%s3 + $0x8] sm:$0xff]
    %v461 = vmul.f32 %v451, 0.5
    %v462 = vmul.f32 %v456, 0.5
    %v463 = vmul.f32 %v461, 1.442695
    %v464 = vpow.pop %v463
    %v465 = vmul.f32 %v462, 1.442695
    %v466 = vpow.pop %v465
    %v467 = vmul.f32 %v459, %v464
    %v468 = vmul.f32 %v460, %v466
    %v469 = vadd.f32 %v376, %v467
    %v470 = vadd.f32 %v381, %v468
    %471 = vst [vmem:[%s4] sm:$0xff] %v376
    %472 = vst [vmem:[%s4 + $0x8] sm:$0xff] %v381
    %473 = vst [vmem:[%s5] sm:$0xff] %v451
    %474 = vst [vmem:[%s5 + $0x8] sm:$0xff] %v456
    %475 = vst [vmem:[%s6] sm:$0xff] %v469
    %476 = vst [vmem:[%s6 + $0x8] sm:$0xff] %v470
  $region25: #{_lambda_.8} parent=0 // pred_fallthru
    _
  // Predicated region
  $region26: #{_lambda_.8} parent=0 // pred_check
    _
  $region27: #{_lambda_.8} parent=0 // pred_check_branch
    %478 = sbr.rel (0) target = $region29
  $region28: #{_lambda_.8} parent=0 // pred_region
    _
  $region29: #{_lambda_.8} parent=0 // pred_fallthru
    _
  // Predicated region
  $region30: #{_lambda_.8} parent=0 // pred_check
    _
  $region31: #{_lambda_.8} parent=0 // pred_check_branch
    %480 = sbr.rel (0) target = $region33
  $region32: #{_lambda_.8} parent=0 // pred_region
    _
  $region33: #{_lambda_.8} parent=0 // pred_fallthru
    _
  // Predicated region
  $region34: #{_lambda_.8} parent=0 // pred_check
    _
  $region35: #{_lambda_.8} parent=0 // pred_check_branch
    %482 = sbr.rel (0) target = $region37
  $region36: #{_lambda_.8} parent=0 // pred_region
    _
  $region37: #{_lambda_.8} parent=0 // pred_fallthru
    _
  // Predicated region
  $region38: #{_lambda_.8} parent=0 // pred_check
    _
  $region39: #{_lambda_.8} parent=0 // pred_check_branch
    %484 = sbr.rel (0) target = $region41
  $region40: #{_lambda_.8} parent=0 // pred_region
    _
  $region41: #{_lambda_.8} parent=0 // pred_fallthru
    _
  // Predicated region
  $region42: #{_lambda_.8} parent=0 // pred_check
    _
  $region43: #{_lambda_.8} parent=0 // pred_check_branch
    %486 = sbr.rel (0) target = $region45
  $region44: #{_lambda_.8} parent=0 // pred_region
    _
  $region45: #{_lambda_.8} parent=0 // pred_fallthru
    _
  // Predicated region
  $region46: #{_lambda_.8} parent=0 // pred_check
    _
  $region47: #{_lambda_.8} parent=0 // pred_check_branch
    %488 = sbr.rel (0) target = $region49
  $region48: #{_lambda_.8} parent=0 // pred_region
    _
  $region49: #{_lambda_.8} parent=0 // pred_fallthru
    _

// kernel: _lambda_.9
$region0: #{_lambda_.9}
  #allocation0 [shape = 'u32[]', space=smem, size = 0x4, offset = 0x4, fixed_abs, tag = 'smem constant byte address 0x4 - core index']
  #allocation1 [shape = 'u32[144,128]{1,0:T(1,128)}', space=vmem, size = 0x12000, scoped, tag = 'internal scratch']
  #allocation2 [shape = 'f32[16,128]{1,0:T(8,128)}', space=vmem, size = 0x2000, scoped, tag = 'scratch operand']
  %s0 = inlined_call_operand.vmem [shape: bf16[1,16,128], index: 0, kind: input, shape index: {}]
  %s1 = inlined_call_operand.vmem [shape: bf16[1,128,128], index: 1, kind: input, shape index: {}]
  %s2 = inlined_call_operand.vmem [shape: f32[1,128], index: 2, kind: input, shape index: {}]
  %s3 = inlined_call_operand.vmem [shape: bf16[1,16,128], index: 3, kind: output, shape index: {}]
  %s4 = sld [smem:[#allocation0]]
  $region30: #{_lambda_.9} parent=0
    _
  %s6 = ssub.s32 1, %s4
  %s7 = scalar_select 0, %s6, %s4
  // Predicated region
  $region2: #{_lambda_.9} parent=0 // pred_check
    _
  $region3: #{_lambda_.9} parent=0 // pred_check_branch
    %9 = sbr.rel (0) target = $region5
  $region4: #{_lambda_.9} parent=0 // pred_region
    _
  $region5: #{_lambda_.9} parent=0 // pred_fallthru
    _
  // Predicated region
  $region6: #{_lambda_.9} parent=0 // pred_check
    _
  $region7: #{_lambda_.9} parent=0 // pred_check_branch
    %11 = sbr.rel (0) target = $region9
  $region8: #{_lambda_.9} parent=0 // pred_region
    _
  $region9: #{_lambda_.9} parent=0 // pred_fallthru
    _
  // Predicated region
  $region10: #{_lambda_.9} parent=0 // pred_check
    _
  $region11: #{_lambda_.9} parent=0 // pred_check_branch
    %13 = sbr.rel (0) target = $region13
  $region12: #{_lambda_.9} parent=0 // pred_region
    _
  $region13: #{_lambda_.9} parent=0 // pred_fallthru
    _
  %p15 = scmp.eq.s32.totalorder 0, 0
  // Predicated region
  $region14: #{_lambda_.9} parent=0 // pred_check
    %p16 = pneg %p15
  $region15: #{_lambda_.9} parent=0 // pred_check_branch
    %18 = sbr.rel (%p16) target = $region17
  $region16: #{_lambda_.9} parent=0 // pred_region
    %19 = vst [vmem:[#allocation2] sm:$0xff] 0.0
    %20 = vst [vmem:[#allocation2 + $0x8] sm:$0xff] 0.0
  $region17: #{_lambda_.9} parent=0 // pred_fallthru
    _
  %v21 = vld [vmem:[#allocation2] sm:$0xff]
  %v22 = vld [vmem:[#allocation2 + $0x8] sm:$0xff]
  %v23 = vld [vmem:[%s0] sm:$0xf]
  %v24 = vld [vmem:[%s0 + $0x4] sm:$0xf]
  %v25 = vld [vmem:[%s1] sm:$0xf]
  %v26 = vld [vmem:[%s1 + $0x4] sm:$0xf]
  %v27 = vld [vmem:[%s1 + $0x8] sm:$0xf]
  %v28 = vld [vmem:[%s1 + $0xc] sm:$0xf]
  %v29 = vld [vmem:[%s1 + $0x10] sm:$0xf]
  %v30 = vld [vmem:[%s1 + $0x14] sm:$0xf]
  %v31 = vld [vmem:[%s1 + $0x18] sm:$0xf]
  %v32 = vld [vmem:[%s1 + $0x1c] sm:$0xf]
  %v33 = vld [vmem:[%s1 + $0x20] sm:$0xf]
  %v34 = vld [vmem:[%s1 + $0x24] sm:$0xf]
  %v35 = vld [vmem:[%s1 + $0x28] sm:$0xf]
  %v36 = vld [vmem:[%s1 + $0x2c] sm:$0xf]
  %v37 = vld [vmem:[%s1 + $0x30] sm:$0xf]
  %v38 = vld [vmem:[%s1 + $0x34] sm:$0xf]
  %v39 = vld [vmem:[%s1 + $0x38] sm:$0xf]
  %v40 = vld [vmem:[%s1 + $0x3c] sm:$0xf]
  %v43 = vunpack.c.l.b16 %v23
  %v44 = vunpack.c.l.b16 %v24
  %v45 = vpack.c.b16 %v44, %v43
  %v63 = vunpack.c.l.b16 %v25
  %v64 = vunpack.c.l.b16 %v26
  %v65 = vunpack.c.l.b16 %v27
  %v66 = vunpack.c.l.b16 %v28
  %v67 = vunpack.c.l.b16 %v29
  %v68 = vunpack.c.l.b16 %v30
  %v69 = vunpack.c.l.b16 %v31
  %v70 = vunpack.c.l.b16 %v32
  %v71 = vunpack.c.l.b16 %v33
  %v72 = vunpack.c.l.b16 %v34
  %v73 = vunpack.c.l.b16 %v35
  %v74 = vunpack.c.l.b16 %v36
  %v75 = vunpack.c.l.b16 %v37
  %v76 = vunpack.c.l.b16 %v38
  %v77 = vunpack.c.l.b16 %v39
  %v78 = vunpack.c.l.b16 %v40
  %v79 = vpack.c.b16 %v64, %v63
  %v80 = vpack.c.b16 %v66, %v65
  %v81 = vpack.c.b16 %v68, %v67
  %v82 = vpack.c.b16 %v70, %v69
  %v83 = vpack.c.b16 %v72, %v71
  %v84 = vpack.c.b16 %v74, %v73
  %v85 = vpack.c.b16 %v76, %v75
  %v86 = vpack.c.b16 %v78, %v77
  %95 = vmatprep.subr.bf16.mxu0 0
  %96 = vmatpush1.bf16.msra.mxu0 %v79
  %97 = vmatprep.subr.bf16.mxu0 0
  %98 = vmatpush1.bf16.msra.mxu0 %v80
  %99 = vmatprep.subr.bf16.mxu0 0
  %100 = vmatpush1.bf16.msra.mxu0 %v81
  %101 = vmatprep.subr.bf16.mxu0 0
  %102 = vmatpush1.bf16.msra.mxu0 %v82
  %103 = vmatprep.subr.bf16.mxu0 0
  %104 = vmatpush1.bf16.msra.mxu0 %v83
  %105 = vmatprep.subr.bf16.mxu0 0
  %106 = vmatpush1.bf16.msra.mxu0 %v84
  %107 = vmatprep.subr.bf16.mxu0 0
  %108 = vmatpush1.bf16.msra.mxu0 %v85
  %109 = vmatprep.subr.bf16.mxu0 0
  %110 = vmatpush1.bf16.msra.mxu0 %v86
  %111 = vmatprep.subr.bf16.mxu0 0
  %112 = vmatpush1.bf16.msra.mxu0 0
  %113 = vmatprep.subr.bf16.mxu0 0
  %114 = vmatpush1.bf16.msra.mxu0 0
  %115 = vmatprep.subr.bf16.mxu0 0
  %116 = vmatpush1.bf16.msra.mxu0 0
  %117 = vmatprep.subr.bf16.mxu0 0
  %118 = vmatpush1.bf16.msra.mxu0 0
  %119 = vmatprep.subr.bf16.mxu0 0
  %120 = vmatpush1.bf16.msra.mxu0 0
  %121 = vmatprep.subr.bf16.mxu0 0
  %122 = vmatpush1.bf16.msra.mxu0 0
  %123 = vmatprep.subr.bf16.mxu0 0
  %124 = vmatpush1.bf16.msra.mxu0 0
  %125 = vmatprep.subr.bf16.mxu0 0
  %126 = vmatpush1.bf16.msra.mxu0 0
  %127 = vmatprep.mubr.bf16.mxu0 0
  %128 = vmatmul.mubr.bf16.gmra.mrb[0].mxu0 %v45
  %v129 = vpop.f32.mrb[0].mxu0
  %v130 = vadd.f32 0.0, %v129
  %v131 = vpop.f32.mrb[0].mxu0
  %v132 = vpop.f32.mrb[0].mxu0
  %v133 = vadd.f32 0.0, %v132
  %v134 = vpop.f32.mrb[0].mxu0
  %135 = vdwg.mxu0
  %v136 = vadd.f32 %v21, %v130
  %v137 = vadd.f32 %v22, %v133
  %138 = vst [vmem:[#allocation2] sm:$0xff] %v136
  %139 = vst [vmem:[#allocation2 + $0x8] sm:$0xff] %v137
  // Predicated region
  $region18: #{_lambda_.9} parent=0 // pred_check
    %p140 = pneg %p15
  $region19: #{_lambda_.9} parent=0 // pred_check_branch
    %142 = sbr.rel (%p140) target = $region21
  $region20: #{_lambda_.9} parent=0 // pred_region
    %v143 = vld [vmem:[#allocation2] sm:$0xff]
    %v144 = vld [vmem:[#allocation2 + $0x8] sm:$0xff]
    %v145 = vld [vmem:[%s2] sm:$0x1]
    %v147 = vlaneseq
    %v148 = vshrl.u32 %v147, 7
    %v149 = vsub.s32 0, %v148
    %v150 = vrot.slane %v145, %v149
    %v152 = vadd.f32 %v143, %v150
    %v153 = vadd.f32 %v144, %v150
    %v154 = vpack.c.bf16 %v153, %v152
    %v156 = vunpack.c.l.b16 %v154
    %v157 = vunpack.c.h.b16 %v154
    %v158 = vpack.c.b16 %v156, %v156
    %v159 = vpack.c.b16 %v157, %v157
    %162 = vst [vmem:[%s3] sm:$0xf] %v158
    %163 = vst [vmem:[%s3 + $0x4] sm:$0xf] %v159
  $region21: #{_lambda_.9} parent=0 // pred_fallthru
    _
  // Predicated region
  $region22: #{_lambda_.9} parent=0 // pred_check
    _
  $region23: #{_lambda_.9} parent=0 // pred_check_branch
    %165 = sbr.rel (0) target = $region25
  $region24: #{_lambda_.9} parent=0 // pred_region
    _
  $region25: #{_lambda_.9} parent=0 // pred_fallthru
    _
  // Predicated region
  $region26: #{_lambda_.9} parent=0 // pred_check
    _
  $region27: #{_lambda_.9} parent=0 // pred_check_branch
    %167 = sbr.rel (0) target = $region29
  $region28: #{_lambda_.9} parent=0 // pred_region
    _
  $region29: #{_lambda_.9} parent=0 // pred_fallthru
    _

// kernel: _lambda_.10
$region0: #{_lambda_.10}
  #allocation0 [shape = 'u32[]', space=smem, size = 0x4, offset = 0x4, fixed_abs, tag = 'smem constant byte address 0x4 - core index']
  #allocation1 [shape = 'u32[144,128]{1,0:T(1,128)}', space=vmem, size = 0x12000, scoped, tag = 'internal scratch']
  #allocation2 [shape = 'f32[32,128]{1,0:T(8,128)}', space=vmem, size = 0x4000, scoped, tag = 'scratch operand']
  %s0 = inlined_call_operand.vmem [shape: bf16[4,32,128], index: 0, kind: input, shape index: {}]
  %s1 = inlined_call_operand.vmem [shape: bf16[4,128,128], index: 1, kind: input, shape index: {}]
  %s2 = inlined_call_operand.vmem [shape: f32[1,128], index: 2, kind: input, shape index: {}]
  %s3 = inlined_call_operand.vmem [shape: bf16[4,32,128], index: 3, kind: output, shape index: {}]
  %s4 = sld [smem:[#allocation0]]
  $region53: #{_lambda_.10} parent=0
    _
  %s6 = ssub.s32 1, %s4
  %s7 = scalar_select 0, %s6, %s4
  loop: start=0, step=1, limit=6
  $region2: #{_lambda_.10} parent=0 // loop_pre_header
    _
  $region3: #{_lambda_.10} parent=0 // loop_header
    %s9 = sphi 0, %s13
    %p10 = scmp.ge.s32.totalorder %s9, 6
    %s16 = sphi 0, %s42
    %s17 = sphi 0, %s38
    %s18 = sphi 0, %s34
    %s19 = sphi 0, %s30
    %s20 = sphi 0, %s16
    %s21 = sphi 0, %s17
    %s22 = sphi 0, %s18
    %s23 = sphi 0, %s19
    %s24 = sphi 0, %s20
    %s25 = sphi 0, %s21
    %s26 = sphi 0, %s22
    %s27 = sphi 0, %s23
    %s49 = sphi 0, %s51
    %s52 = sphi 0, %s49
    %s53 = sphi 0, %s52
    %s69 = sphi 0, %s53
    %s79 = sphi 0, %s81
    %s82 = sphi 0, %s79
    %s83 = sphi 0, %s82
    %s99 = sphi 0, %s83
    %s105 = sphi 0, %s107
    %s108 = sphi 0, %s105
    %s109 = sphi 0, %s108
    %s125 = sphi 0, %s109
    %s135 = sphi 0, %s137
    %s138 = sphi 0, %s135
    %s139 = sphi 0, %s138
    %s155 = sphi 0, %s139
  $region4: #{_lambda_.10} parent=0 // loop_header_branch
    %12 = sbr.rel (%p10) target = $region8
  $region5: #{_lambda_.10} parent=0 // loop_body
    %s14 = ssub.s32 %s9, 1
    %s15 = ssub.s32 %s9, 2
    %s28 = sadd.s32 1, %s19
    %p29 = scmp.ge.s32.totalorder %s28, 1
    %s30 = scalar_select %p29, 0, %s28
    %s31 = sadd.s32 1, %s18
    %s32 = scalar_select %p29, %s31, %s18
    %p33 = scmp.ge.s32.totalorder %s32, 1
    %s34 = scalar_select %p33, 0, %s32
    %s35 = sadd.s32 1, %s17
    %s36 = scalar_select %p33, %s35, %s17
    %p37 = scmp.ge.s32.totalorder %s36, 1
    %s38 = scalar_select %p37, 0, %s36
    %s39 = sadd.s32 1, %s16
    %s40 = scalar_select %p37, %s39, %s16
    %p41 = scmp.ge.s32.totalorder %s40, 4
    %s42 = scalar_select %p41, 0, %s40
    %s43 = ssub.s32 %s16, %s42
    %s44 = ssub.s32 %s17, %s38
    %s45 = sor.u32 %s43, %s44
    %s46 = ssub.s32 %s19, %s30
    %s47 = sor.u32 %s45, %s46
    %p48 = scmp.eq.s32.totalorder %s47, 0
    %s50 = sadd.s32 %s49, 1
    %s51 = scalar_select %p48, %s49, %s50
    %p54 = pneg %p48
    %p55 = scmp.eq.s32.totalorder %s9, 3
    %p56 = por %p54, %p55
    %p57 = scmp.ne.s32.totalorder %s49, %s52
    %p58 = scmp.eq.s32.totalorder %s9, 0
    %p59 = por %p57, %p58
    %p60 = scmp.ne.s32.totalorder %s49, %s52
    %p61 = scmp.eq.s32.totalorder %s14, 3
    %p62 = por %p60, %p61
    %p63 = scmp.ne.s32.totalorder %s52, %s53
    %p64 = scmp.eq.s32.totalorder %s14, 0
    %p65 = por %p63, %p64
    %p66 = scmp.ne.s32.totalorder %s52, %s53
    %p67 = scmp.eq.s32.totalorder %s15, 3
    %p68 = por %p66, %p67
    %p70 = scmp.ne.s32.totalorder %s53, %s69
    %p71 = scmp.eq.s32.totalorder %s15, 0
    %p72 = por %p70, %p71
    %s73 = ssub.s32 %s16, %s42
    %s74 = ssub.s32 %s19, %s30
    %s75 = sor.u32 %s73, %s74
    %s76 = ssub.s32 %s18, %s34
    %s77 = sor.u32 %s75, %s76
    %p78 = scmp.eq.s32.totalorder %s77, 0
    %s80 = sadd.s32 %s79, 1
    %s81 = scalar_select %p78, %s79, %s80
    %p84 = pneg %p78
    %p85 = scmp.eq.s32.totalorder %s9, 3
    %p86 = por %p84, %p85
    %p87 = scmp.ne.s32.totalorder %s79, %s82
    %p88 = scmp.eq.s32.totalorder %s9, 0
    %p89 = por %p87, %p88
    %p90 = scmp.ne.s32.totalorder %s79, %s82
    %p91 = scmp.eq.s32.totalorder %s14, 3
    %p92 = por %p90, %p91
    %p93 = scmp.ne.s32.totalorder %s82, %s83
    %p94 = scmp.eq.s32.totalorder %s14, 0
    %p95 = por %p93, %p94
    %p96 = scmp.ne.s32.totalorder %s82, %s83
    %p97 = scmp.eq.s32.totalorder %s15, 3
    %p98 = por %p96, %p97
    %p100 = scmp.ne.s32.totalorder %s83, %s99
    %p101 = scmp.eq.s32.totalorder %s15, 0
    %p102 = por %p100, %p101
    %s103 = ssub.s32 %s18, %s34
    %p104 = scmp.eq.s32.totalorder %s103, 0
    %s106 = sadd.s32 %s105, 1
    %s107 = scalar_select %p104, %s105, %s106
    %p110 = pneg %p104
    %p111 = scmp.eq.s32.totalorder %s9, 3
    %p112 = por %p110, %p111
    %p113 = scmp.ne.s32.totalorder %s105, %s108
    %p114 = scmp.eq.s32.totalorder %s9, 0
    %p115 = por %p113, %p114
    %p116 = scmp.ne.s32.totalorder %s105, %s108
    %p117 = scmp.eq.s32.totalorder %s14, 3
    %p118 = por %p116, %p117
    %p119 = scmp.ne.s32.totalorder %s108, %s109
    %p120 = scmp.eq.s32.totalorder %s14, 0
    %p121 = por %p119, %p120
    %p122 = scmp.ne.s32.totalorder %s108, %s109
    %p123 = scmp.eq.s32.totalorder %s15, 3
    %p124 = por %p122, %p123
    %p126 = scmp.ne.s32.totalorder %s109, %s125
    %p127 = scmp.eq.s32.totalorder %s15, 0
    %p128 = por %p126, %p127
    %s129 = ssub.s32 %s16, %s42
    %s130 = ssub.s32 %s17, %s38
    %s131 = sor.u32 %s129, %s130
    %s132 = ssub.s32 %s18, %s34
    %s133 = sor.u32 %s131, %s132
    %p134 = scmp.eq.s32.totalorder %s133, 0
    %s136 = sadd.s32 %s135, 1
    %s137 = scalar_select %p134, %s135, %s136
    %p140 = pneg %p134
    %p141 = scmp.eq.s32.totalorder %s9, 3
    %p142 = por %p140, %p141
    %p143 = scmp.ne.s32.totalorder %s135, %s138
    %p144 = scmp.eq.s32.totalorder %s9, 0
    %p145 = por %p143, %p144
    %p146 = scmp.ne.s32.totalorder %s135, %s138
    %p147 = scmp.eq.s32.totalorder %s14, 3
    %p148 = por %p146, %p147
    %p149 = scmp.ne.s32.totalorder %s138, %s139
    %p150 = scmp.eq.s32.totalorder %s14, 0
    %p151 = por %p149, %p150
    %p152 = scmp.ne.s32.totalorder %s138, %s139
    %p153 = scmp.eq.s32.totalorder %s15, 3
    %p154 = por %p152, %p153
    %p156 = scmp.ne.s32.totalorder %s139, %s155
    %p157 = scmp.eq.s32.totalorder %s15, 0
    %p158 = por %p156, %p157
    %p159 = scmp.le.s32.totalorder 1, %s9
    %p160 = scmp.lt.s32.totalorder %s9, 5
    %p161 = pnand %p159, %p160
    %p162 = pneg %p161
    // Predicated region
    $region9: #{_lambda_.10} parent=5 // pred_check
      _
    $region10: #{_lambda_.10} parent=5 // pred_check_branch
      %164 = sbr.rel (%p161) target = $region12
    $region11: #{_lambda_.10} parent=5 // pred_region
      %s165 = ssub.s32 %s9, 1
      // Predicated region
      $region13: #{_lambda_.10} parent=11 // pred_check
        %p166 = pneg %p121
      $region14: #{_lambda_.10} parent=11 // pred_check_branch
        %168 = sbr.rel (%p166) target = $region16
      $region15: #{_lambda_.10} parent=11 // pred_region
        %p169 = scmp.lt.s32.totalorder %s22, 0
        %s170 = scalar_select %p169, %s22, 0
        %s171 = scalar_lea.vmem %s2, %s170
      $region16: #{_lambda_.10} parent=11 // pred_fallthru
        _
    $region12: #{_lambda_.10} parent=5 // pred_fallthru
      _
    %p172 = scmp.lt.s32.totalorder %s9, 4
    // Predicated region
    $region17: #{_lambda_.10} parent=5 // pred_check
      %p173 = pneg %p172
    $region18: #{_lambda_.10} parent=5 // pred_check_branch
      %175 = sbr.rel (%p173) target = $region20
    $region19: #{_lambda_.10} parent=5 // pred_region
      // Predicated region
      $region21: #{_lambda_.10} parent=19 // pred_check
        %p176 = pneg %p59
      $region22: #{_lambda_.10} parent=19 // pred_check_branch
        %178 = sbr.rel (%p176) target = $region24
      $region23: #{_lambda_.10} parent=19 // pred_region
        %s179 = smul.u32 4, %s17
        %p180 = scmp.lt.s32.totalorder %s16, 3
        %s181 = scalar_select %p180, %s16, 3
        %p182 = scmp.lt.s32.totalorder %s179, 3
        %s183 = scalar_select %p182, %s179, 3
        %p184 = scmp.lt.s32.totalorder %s19, 0
        %s185 = scalar_select %p184, %s19, 0
        %s186 = sadd.s32 %s185, %s183
        %s187 = smul.addr %s181, 4
        %s188 = sadd.s32 %s186, %s187
        %s189 = smul.addr %s188, 4
        %s190 = scalar_lea.vmem %s0, %s189
        %s191 = smul.u32 4, %s17
      $region24: #{_lambda_.10} parent=19 // pred_fallthru
        _
      // Predicated region
      $region25: #{_lambda_.10} parent=19 // pred_check
        %p192 = pneg %p89
      $region26: #{_lambda_.10} parent=19 // pred_check_branch
        %194 = sbr.rel (%p192) target = $region28
      $region27: #{_lambda_.10} parent=19 // pred_region
        %s195 = smul.u32 16, %s19
        %p196 = scmp.lt.s32.totalorder %s16, 3
        %s197 = scalar_select %p196, %s16, 3
        %p198 = scmp.lt.s32.totalorder %s195, 15
        %s199 = scalar_select %p198, %s195, 15
        %p200 = scmp.lt.s32.totalorder %s18, 0
        %s201 = scalar_select %p200, %s18, 0
        %s202 = sadd.s32 %s201, %s199
        %s203 = smul.addr %s197, 16
        %s204 = sadd.s32 %s202, %s203
        %s205 = smul.addr %s204, 4
        %s206 = scalar_lea.vmem %s1, %s205
        %s207 = smul.u32 16, %s19
      $region28: #{_lambda_.10} parent=19 // pred_fallthru
        _
    $region20: #{_lambda_.10} parent=5 // pred_fallthru
      _
    %p208 = scmp.le.s32.totalorder 1, %s9
    %p209 = scmp.lt.s32.totalorder %s9, 5
    %p210 = pnand %p208, %p209
    %p211 = pneg %p210
    // Predicated region
    $region29: #{_lambda_.10} parent=5 // pred_check
      _
    $region30: #{_lambda_.10} parent=5 // pred_check_branch
      %213 = sbr.rel (%p210) target = $region32
    $region31: #{_lambda_.10} parent=5 // pred_region
      %s214 = ssub.s32 %s9, 1
      %s215 = smul.u32 4, %s21
      %p216 = scmp.lt.s32.totalorder %s20, 3
      %s217 = scalar_select %p216, %s20, 3
      %p218 = scmp.lt.s32.totalorder %s215, 3
      %s219 = scalar_select %p218, %s215, 3
      %p220 = scmp.lt.s32.totalorder %s23, 0
      %s221 = scalar_select %p220, %s23, 0
      %s222 = sadd.s32 %s221, %s219
      %s223 = smul.addr %s217, 4
      %s224 = sadd.s32 %s222, %s223
      %s225 = smul.addr %s224, 4
      %s226 = scalar_lea.vmem %s0, %s225
      %p227 = pneg %p65
      %p228 = pneg %p62
      %s229 = smul.u32 16, %s23
      %p230 = scmp.lt.s32.totalorder %s20, 3
      %s231 = scalar_select %p230, %s20, 3
      %p232 = scmp.lt.s32.totalorder %s229, 15
      %s233 = scalar_select %p232, %s229, 15
      %p234 = scmp.lt.s32.totalorder %s22, 0
      %s235 = scalar_select %p234, %s22, 0
      %s236 = sadd.s32 %s235, %s233
      %s237 = smul.addr %s231, 16
      %s238 = sadd.s32 %s236, %s237
      %s239 = smul.addr %s238, 4
      %s240 = scalar_lea.vmem %s1, %s239
      %p241 = pneg %p95
      %p242 = pneg %p92
      %p243 = scmp.lt.s32.totalorder %s22, 0
      %s244 = scalar_select %p243, %s22, 0
      %s245 = scalar_lea.vmem %s2, %s244
      %p246 = pneg %p121
      %p247 = pneg %p118
      %p248 = pneg %p151
      %p249 = pneg %p148
      %s250 = smul.u32 4, %s21
      %p251 = scmp.lt.s32.totalorder %s20, 3
      %s252 = scalar_select %p251, %s20, 3
      %p253 = scmp.lt.s32.totalorder %s250, 3
      %s254 = scalar_select %p253, %s250, 3
      %p255 = scmp.lt.s32.totalorder %s22, 0
      %s256 = scalar_select %p255, %s22, 0
      %s257 = sadd.s32 %s256, %s254
      %s258 = smul.addr %s252, 4
      %s259 = sadd.s32 %s257, %s258
      %s260 = smul.addr %s259, 4
      %s261 = scalar_lea.vmem %s3, %s260
      %s262 = smul.u32 4, %s21
      %p263 = scmp.lt.s32.totalorder %s20, 3
      %s264 = scalar_select %p263, %s20, 3
      %p265 = scmp.lt.s32.totalorder %s262, 3
      %s266 = scalar_select %p265, %s262, 3
      %p267 = scmp.lt.s32.totalorder %s23, 0
      %s268 = scalar_select %p267, %s23, 0
      %s269 = sadd.s32 %s268, %s266
      %s270 = smul.addr %s264, 4
      %s271 = sadd.s32 %s269, %s270
      %s272 = smul.addr %s271, 4
      %s273 = scalar_lea.vmem %s0, %s272
      %s274 = smul.u32 4, %s21
      %s275 = smul.u32 16, %s23
      %p276 = scmp.lt.s32.totalorder %s20, 3
      %s277 = scalar_select %p276, %s20, 3
      %p278 = scmp.lt.s32.totalorder %s275, 15
      %s279 = scalar_select %p278, %s275, 15
      %p280 = scmp.lt.s32.totalorder %s22, 0
      %s281 = scalar_select %p280, %s22, 0
      %s282 = sadd.s32 %s281, %s279
      %s283 = smul.addr %s277, 16
      %s284 = sadd.s32 %s282, %s283
      %s285 = smul.addr %s284, 4
      %s286 = scalar_lea.vmem %s1, %s285
      %s287 = smul.u32 16, %s23
      %p288 = scmp.lt.s32.totalorder %s22, 0
      %s289 = scalar_select %p288, %s22, 0
      %s290 = scalar_lea.vmem %s2, %s289
      %s291 = smul.u32 4, %s21
      %p292 = scmp.lt.s32.totalorder %s20, 3
      %s293 = scalar_select %p292, %s20, 3
      %p294 = scmp.lt.s32.totalorder %s291, 3
      %s295 = scalar_select %p294, %s291, 3
      %p296 = scmp.lt.s32.totalorder %s22, 0
      %s297 = scalar_select %p296, %s22, 0
      %s298 = sadd.s32 %s297, %s295
      %s299 = smul.addr %s293, 4
      %s300 = sadd.s32 %s298, %s299
      %s301 = smul.addr %s300, 4
      %s302 = scalar_lea.vmem %s3, %s301
      %s303 = smul.u32 4, %s21
      %p305 = scmp.eq.s32.totalorder %s23, 0
      // Predicated region
      $region33: #{_lambda_.10} parent=31 // pred_check
        %p306 = pneg %p305
      $region34: #{_lambda_.10} parent=31 // pred_check_branch
        %308 = sbr.rel (%p306) target = $region36
      $region35: #{_lambda_.10} parent=31 // pred_region
        %309 = vst [vmem:[#allocation2] sm:$0xff] 0.0
        %310 = vst [vmem:[#allocation2 + $0x8] sm:$0xff] 0.0
        %311 = vst [vmem:[#allocation2 + $0x10] sm:$0xff] 0.0
        %312 = vst [vmem:[#allocation2 + $0x18] sm:$0xff] 0.0
      $region36: #{_lambda_.10} parent=31 // pred_fallthru
        _
      %v313 = vld [vmem:[#allocation2] sm:$0xff]
      %v314 = vld [vmem:[#allocation2 + $0x8] sm:$0xff]
      %v315 = vld [vmem:[#allocation2 + $0x10] sm:$0xff]
      %v316 = vld [vmem:[#allocation2 + $0x18] sm:$0xff]
      %v317 = vld [vmem:[%s273] sm:$0xf]
      %v318 = vld [vmem:[%s273 + $0x4] sm:$0xf]
      %v319 = vld [vmem:[%s273 + $0x8] sm:$0xf]
      %v320 = vld [vmem:[%s273 + $0xc] sm:$0xf]
      %v321 = vld [vmem:[%s286] sm:$0xf]
      %v322 = vld [vmem:[%s286 + $0x4] sm:$0xf]
      %v323 = vld [vmem:[%s286 + $0x8] sm:$0xf]
      %v324 = vld [vmem:[%s286 + $0xc] sm:$0xf]
      %v325 = vld [vmem:[%s286 + $0x10] sm:$0xf]
      %v326 = vld [vmem:[%s286 + $0x14] sm:$0xf]
      %v327 = vld [vmem:[%s286 + $0x18] sm:$0xf]
      %v328 = vld [vmem:[%s286 + $0x1c] sm:$0xf]
      %v329 = vld [vmem:[%s286 + $0x20] sm:$0xf]
      %v330 = vld [vmem:[%s286 + $0x24] sm:$0xf]
      %v331 = vld [vmem:[%s286 + $0x28] sm:$0xf]
      %v332 = vld [vmem:[%s286 + $0x2c] sm:$0xf]
      %v333 = vld [vmem:[%s286 + $0x30] sm:$0xf]
      %v334 = vld [vmem:[%s286 + $0x34] sm:$0xf]
      %v335 = vld [vmem:[%s286 + $0x38] sm:$0xf]
      %v336 = vld [vmem:[%s286 + $0x3c] sm:$0xf]
      %v341 = vunpack.c.l.b16 %v317
      %v342 = vunpack.c.l.b16 %v318
      %v343 = vunpack.c.l.b16 %v319
      %v344 = vunpack.c.l.b16 %v320
      %v345 = vpack.c.b16 %v342, %v341
      %v346 = vpack.c.b16 %v344, %v343
      %v365 = vunpack.c.l.b16 %v321
      %v366 = vunpack.c.l.b16 %v322
      %v367 = vunpack.c.l.b16 %v323
      %v368 = vunpack.c.l.b16 %v324
      %v369 = vunpack.c.l.b16 %v325
      %v370 = vunpack.c.l.b16 %v326
      %v371 = vunpack.c.l.b16 %v327
      %v372 = vunpack.c.l.b16 %v328
      %v373 = vunpack.c.l.b16 %v329
      %v374 = vunpack.c.l.b16 %v330
      %v375 = vunpack.c.l.b16 %v331
      %v376 = vunpack.c.l.b16 %v332
      %v377 = vunpack.c.l.b16 %v333
      %v378 = vunpack.c.l.b16 %v334
      %v379 = vunpack.c.l.b16 %v335
      %v380 = vunpack.c.l.b16 %v336
      %v381 = vpack.c.b16 %v366, %v365
      %v382 = vpack.c.b16 %v368, %v367
      %v383 = vpack.c.b16 %v370, %v369
      %v384 = vpack.c.b16 %v372, %v371
      %v385 = vpack.c.b16 %v374, %v373
      %v386 = vpack.c.b16 %v376, %v375
      %v387 = vpack.c.b16 %v378, %v377
      %v388 = vpack.c.b16 %v380, %v379
      %397 = vmatprep.subr.bf16.mxu0 0
      %398 = vmatpush1.bf16.msra.mxu0 %v381
      %399 = vmatprep.subr.bf16.mxu0 0
      %400 = vmatpush1.bf16.msra.mxu0 %v382
      %401 = vmatprep.subr.bf16.mxu0 0
      %402 = vmatpush1.bf16.msra.mxu0 %v383
      %403 = vmatprep.subr.bf16.mxu0 0
      %404 = vmatpush1.bf16.msra.mxu0 %v384
      %405 = vmatprep.subr.bf16.mxu0 0
      %406 = vmatpush1.bf16.msra.mxu0 %v385
      %407 = vmatprep.subr.bf16.mxu0 0
      %408 = vmatpush1.bf16.msra.mxu0 %v386
      %409 = vmatprep.subr.bf16.mxu0 0
      %410 = vmatpush1.bf16.msra.mxu0 %v387
      %411 = vmatprep.subr.bf16.mxu0 0
      %412 = vmatpush1.bf16.msra.mxu0 %v388
      %413 = vmatprep.subr.bf16.mxu0 0
      %414 = vmatpush1.bf16.msra.mxu0 0
      %415 = vmatprep.subr.bf16.mxu0 0
      %416 = vmatpush1.bf16.msra.mxu0 0
      %417 = vmatprep.subr.bf16.mxu0 0
      %418 = vmatpush1.bf16.msra.mxu0 0
      %419 = vmatprep.subr.bf16.mxu0 0
      %420 = vmatpush1.bf16.msra.mxu0 0
      %421 = vmatprep.subr.bf16.mxu0 0
      %422 = vmatpush1.bf16.msra.mxu0 0
      %423 = vmatprep.subr.bf16.mxu0 0
      %424 = vmatpush1.bf16.msra.mxu0 0
      %425 = vmatprep.subr.bf16.mxu0 0
      %426 = vmatpush1.bf16.msra.mxu0 0
      %427 = vmatprep.subr.bf16.mxu0 0
      %428 = vmatpush1.bf16.msra.mxu0 0
      %429 = vmatprep.mubr.bf16.mxu0 0
      %430 = vmatmul.mubr.bf16.gmra.mrb[0].mxu0 %v345
      %v431 = vpop.f32.mrb[0].mxu0
      %v432 = vadd.f32 0.0, %v431
      %v433 = vpop.f32.mrb[0].mxu0
      %v434 = vpop.f32.mrb[0].mxu0
      %v435 = vadd.f32 0.0, %v434
      %v436 = vpop.f32.mrb[0].mxu0
      %437 = vmatprep.mubr.bf16.mxu0 0
      %438 = vmatmul.mubr.bf16.gmra.mrb[0].mxu0 %v346
      %v439 = vpop.f32.mrb[0].mxu0
      %v440 = vadd.f32 0.0, %v439
      %v441 = vpop.f32.mrb[0].mxu0
      %v442 = vpop.f32.mrb[0].mxu0
      %v443 = vadd.f32 0.0, %v442
      %v444 = vpop.f32.mrb[0].mxu0
      %445 = vdwg.mxu0
      %v446 = vadd.f32 %v313, %v432
      %v447 = vadd.f32 %v314, %v435
      %v448 = vadd.f32 %v315, %v440
      %v449 = vadd.f32 %v316, %v443
      %450 = vst [vmem:[#allocation2] sm:$0xff] %v446
      %451 = vst [vmem:[#allocation2 + $0x8] sm:$0xff] %v447
      %452 = vst [vmem:[#allocation2 + $0x10] sm:$0xff] %v448
      %453 = vst [vmem:[#allocation2 + $0x18] sm:$0xff] %v449
      // Predicated region
      $region37: #{_lambda_.10} parent=31 // pred_check
        %p454 = pneg %p305
      $region38: #{_lambda_.10} parent=31 // pred_check_branch
        %456 = sbr.rel (%p454) target = $region40
      $region39: #{_lambda_.10} parent=31 // pred_region
        %v457 = vld [vmem:[#allocation2] sm:$0xff]
        %v458 = vld [vmem:[#allocation2 + $0x8] sm:$0xff]
        %v459 = vld [vmem:[#allocation2 + $0x10] sm:$0xff]
        %v460 = vld [vmem:[#allocation2 + $0x18] sm:$0xff]
        %v461 = vld [vmem:[%s290] sm:$0x1]
        %v463 = vlaneseq
        %v464 = vshrl.u32 %v463, 7
        %v465 = vsub.s32 0, %v464
        %v466 = vrot.slane %v461, %v465
        %v468 = vadd.f32 %v457, %v466
        %v469 = vadd.f32 %v458, %v466
        %v470 = vadd.f32 %v459, %v466
        %v471 = vadd.f32 %v460, %v466
        %v472 = vxor.u32 %v468, 2147483648
        %v473 = vxor.u32 %v469, 2147483648
        %v474 = vxor.u32 %v470, 2147483648
        %v475 = vxor.u32 %v471, 2147483648
        %v476 = vmul.f32 %v472, 1.442695
        %v477 = vpow.pop %v476
        %v478 = vmul.f32 %v473, 1.442695
        %v479 = vpow.pop %v478
        %v480 = vmul.f32 %v474, 1.442695
        %v481 = vpow.pop %v480
        %v482 = vmul.f32 %v475, 1.442695
        %v483 = vpow.pop %v482
        %v484 = vadd.f32 %v477, 1.0
        %v485 = vadd.f32 %v479, 1.0
        %v486 = vadd.f32 %v481, 1.0
        %v487 = vadd.f32 %v483, 1.0
        %v488 = vrcp.pop %v484
        %v489 = vmul.f32 1.0, %v488
        %v490 = vrcp.pop %v485
        %v491 = vmul.f32 1.0, %v490
        %v492 = vrcp.pop %v486
        %v493 = vmul.f32 1.0, %v492
        %v494 = vrcp.pop %v487
        %v495 = vmul.f32 1.0, %v494
        %v496 = vmul.f32 %v468, %v489
        %v497 = vmul.f32 %v469, %v491
        %v498 = vmul.f32 %v470, %v493
        %v499 = vmul.f32 %v471, %v495
        %v500 = vpack.c.bf16 %v497, %v496
        %v501 = vpack.c.bf16 %v499, %v498
        %v504 = vunpack.c.l.b16 %v500
        %v505 = vunpack.c.h.b16 %v500
        %v506 = vunpack.c.l.b16 %v501
        %v507 = vunpack.c.h.b16 %v501
        %v508 = vpack.c.b16 %v504, %v504
        %v509 = vpack.c.b16 %v505, %v505
        %v510 = vpack.c.b16 %v506, %v506
        %v511 = vpack.c.b16 %v507, %v507
        %516 = vst [vmem:[%s302] sm:$0xf] %v508
        %517 = vst [vmem:[%s302 + $0x4] sm:$0xf] %v509
        %518 = vst [vmem:[%s302 + $0x8] sm:$0xf] %v510
        %519 = vst [vmem:[%s302 + $0xc] sm:$0xf] %v511
      $region40: #{_lambda_.10} parent=31 // pred_fallthru
        _
      %s520 = smul.u32 4, %s21
      %p521 = scmp.lt.s32.totalorder %s20, 3
      %s522 = scalar_select %p521, %s20, 3
      %p523 = scmp.lt.s32.totalorder %s520, 3
      %s524 = scalar_select %p523, %s520, 3
      %p525 = scmp.lt.s32.totalorder %s22, 0
      %s526 = scalar_select %p525, %s22, 0
      %s527 = sadd.s32 %s526, %s524
      %s528 = smul.addr %s522, 4
      %s529 = sadd.s32 %s527, %s528
      %s530 = smul.addr %s529, 4
      %s531 = scalar_lea.vmem %s3, %s530
      // Predicated region
      $region41: #{_lambda_.10} parent=31 // pred_check
        %p532 = pneg %p148
      $region42: #{_lambda_.10} parent=31 // pred_check_branch
        %534 = sbr.rel (%p532) target = $region44
      $region43: #{_lambda_.10} parent=31 // pred_region
        %s535 = smul.u32 4, %s21
      $region44: #{_lambda_.10} parent=31 // pred_fallthru
        _
    $region32: #{_lambda_.10} parent=5 // pred_fallthru
      _
    %p536 = scmp.le.s32.totalorder 2, %s9
    // Predicated region
    $region45: #{_lambda_.10} parent=5 // pred_check
      %p537 = pneg %p536
    $region46: #{_lambda_.10} parent=5 // pred_check_branch
      %539 = sbr.rel (%p537) target = $region48
    $region47: #{_lambda_.10} parent=5 // pred_region
      %s540 = ssub.s32 %s9, 2
      // Predicated region
      $region49: #{_lambda_.10} parent=47 // pred_check
        %p541 = pneg %p154
      $region50: #{_lambda_.10} parent=47 // pred_check_branch
        %543 = sbr.rel (%p541) target = $region52
      $region51: #{_lambda_.10} parent=47 // pred_region
        %s544 = smul.u32 4, %s25
        %p545 = scmp.lt.s32.totalorder %s24, 3
        %s546 = scalar_select %p545, %s24, 3
        %p547 = scmp.lt.s32.totalorder %s544, 3
        %s548 = scalar_select %p547, %s544, 3
        %p549 = scmp.lt.s32.totalorder %s26, 0
        %s550 = scalar_select %p549, %s26, 0
        %s551 = sadd.s32 %s550, %s548
        %s552 = smul.addr %s546, 4
        %s553 = sadd.s32 %s551, %s552
        %s554 = smul.addr %s553, 4
        %s555 = scalar_lea.vmem %s3, %s554
      $region52: #{_lambda_.10} parent=47 // pred_fallthru
        _
    $region48: #{_lambda_.10} parent=5 // pred_fallthru
      _
  $region6: #{_lambda_.10} parent=0 // loop_footer
    %s13 = sadd.s32 1, %s9
  $region7: #{_lambda_.10} parent=0 // loop_footer_branch
    %8 = sbr.rel target = $region3
  $region8: #{_lambda_.10} parent=0 // loop_exit
    _

// kernel: _lambda_.11
$region0: #{_lambda_.11}
  #allocation0 [shape = 'u32[]', space=smem, size = 0x4, offset = 0x4, fixed_abs, tag = 'smem constant byte address 0x4 - core index']
  #allocation1 [shape = 'u32[144,128]{1,0:T(1,128)}', space=vmem, size = 0x12000, scoped, tag = 'internal scratch']
  #allocation2 [shape = 'f32[128,128]{1,0:T(8,128)}', space=vmem, size = 0x10000, scoped, tag = 'scratch operand']
  %s0 = inlined_call_operand.vmem [shape: bf16[4,128,128], index: 0, kind: input, shape index: {}]
  %s1 = inlined_call_operand.vmem [shape: bf16[4,128,128], index: 1, kind: input, shape index: {}]
  %s2 = inlined_call_operand.vmem [shape: f32[1,128], index: 2, kind: input, shape index: {}]
  %s3 = inlined_call_operand.vmem [shape: f32[4,128,128], index: 3, kind: output, shape index: {}]
  %s4 = sld [smem:[#allocation0]]
  $region53: #{_lambda_.11} parent=0
    _
  %s6 = ssub.s32 1, %s4
  %s7 = scalar_select 0, %s6, %s4
  loop: start=0, step=1, limit=6
  $region2: #{_lambda_.11} parent=0 // loop_pre_header
    _
  $region3: #{_lambda_.11} parent=0 // loop_header
    %s9 = sphi 0, %s13
    %p10 = scmp.ge.s32.totalorder %s9, 6
    %s16 = sphi 0, %s42
    %s17 = sphi 0, %s38
    %s18 = sphi 0, %s34
    %s19 = sphi 0, %s30
    %s20 = sphi 0, %s16
    %s21 = sphi 0, %s17
    %s22 = sphi 0, %s18
    %s23 = sphi 0, %s19
    %s24 = sphi 0, %s20
    %s25 = sphi 0, %s21
    %s26 = sphi 0, %s22
    %s27 = sphi 0, %s23
    %s49 = sphi 0, %s51
    %s52 = sphi 0, %s49
    %s53 = sphi 0, %s52
    %s69 = sphi 0, %s53
    %s79 = sphi 0, %s81
    %s82 = sphi 0, %s79
    %s83 = sphi 0, %s82
    %s99 = sphi 0, %s83
    %s105 = sphi 0, %s107
    %s108 = sphi 0, %s105
    %s109 = sphi 0, %s108
    %s125 = sphi 0, %s109
    %s135 = sphi 0, %s137
    %s138 = sphi 0, %s135
    %s139 = sphi 0, %s138
    %s155 = sphi 0, %s139
  $region4: #{_lambda_.11} parent=0 // loop_header_branch
    %12 = sbr.rel (%p10) target = $region8
  $region5: #{_lambda_.11} parent=0 // loop_body
    %s14 = ssub.s32 %s9, 1
    %s15 = ssub.s32 %s9, 2
    %s28 = sadd.s32 1, %s19
    %p29 = scmp.ge.s32.totalorder %s28, 1
    %s30 = scalar_select %p29, 0, %s28
    %s31 = sadd.s32 1, %s18
    %s32 = scalar_select %p29, %s31, %s18
    %p33 = scmp.ge.s32.totalorder %s32, 1
    %s34 = scalar_select %p33, 0, %s32
    %s35 = sadd.s32 1, %s17
    %s36 = scalar_select %p33, %s35, %s17
    %p37 = scmp.ge.s32.totalorder %s36, 1
    %s38 = scalar_select %p37, 0, %s36
    %s39 = sadd.s32 1, %s16
    %s40 = scalar_select %p37, %s39, %s16
    %p41 = scmp.ge.s32.totalorder %s40, 4
    %s42 = scalar_select %p41, 0, %s40
    %s43 = ssub.s32 %s16, %s42
    %s44 = ssub.s32 %s17, %s38
    %s45 = sor.u32 %s43, %s44
    %s46 = ssub.s32 %s19, %s30
    %s47 = sor.u32 %s45, %s46
    %p48 = scmp.eq.s32.totalorder %s47, 0
    %s50 = sadd.s32 %s49, 1
    %s51 = scalar_select %p48, %s49, %s50
    %p54 = pneg %p48
    %p55 = scmp.eq.s32.totalorder %s9, 3
    %p56 = por %p54, %p55
    %p57 = scmp.ne.s32.totalorder %s49, %s52
    %p58 = scmp.eq.s32.totalorder %s9, 0
    %p59 = por %p57, %p58
    %p60 = scmp.ne.s32.totalorder %s49, %s52
    %p61 = scmp.eq.s32.totalorder %s14, 3
    %p62 = por %p60, %p61
    %p63 = scmp.ne.s32.totalorder %s52, %s53
    %p64 = scmp.eq.s32.totalorder %s14, 0
    %p65 = por %p63, %p64
    %p66 = scmp.ne.s32.totalorder %s52, %s53
    %p67 = scmp.eq.s32.totalorder %s15, 3
    %p68 = por %p66, %p67
    %p70 = scmp.ne.s32.totalorder %s53, %s69
    %p71 = scmp.eq.s32.totalorder %s15, 0
    %p72 = por %p70, %p71
    %s73 = ssub.s32 %s16, %s42
    %s74 = ssub.s32 %s19, %s30
    %s75 = sor.u32 %s73, %s74
    %s76 = ssub.s32 %s18, %s34
    %s77 = sor.u32 %s75, %s76
    %p78 = scmp.eq.s32.totalorder %s77, 0
    %s80 = sadd.s32 %s79, 1
    %s81 = scalar_select %p78, %s79, %s80
    %p84 = pneg %p78
    %p85 = scmp.eq.s32.totalorder %s9, 3
    %p86 = por %p84, %p85
    %p87 = scmp.ne.s32.totalorder %s79, %s82
    %p88 = scmp.eq.s32.totalorder %s9, 0
    %p89 = por %p87, %p88
    %p90 = scmp.ne.s32.totalorder %s79, %s82
    %p91 = scmp.eq.s32.totalorder %s14, 3
    %p92 = por %p90, %p91
    %p93 = scmp.ne.s32.totalorder %s82, %s83
    %p94 = scmp.eq.s32.totalorder %s14, 0
    %p95 = por %p93, %p94
    %p96 = scmp.ne.s32.totalorder %s82, %s83
    %p97 = scmp.eq.s32.totalorder %s15, 3
    %p98 = por %p96, %p97
    %p100 = scmp.ne.s32.totalorder %s83, %s99
    %p101 = scmp.eq.s32.totalorder %s15, 0
    %p102 = por %p100, %p101
    %s103 = ssub.s32 %s18, %s34
    %p104 = scmp.eq.s32.totalorder %s103, 0
    %s106 = sadd.s32 %s105, 1
    %s107 = scalar_select %p104, %s105, %s106
    %p110 = pneg %p104
    %p111 = scmp.eq.s32.totalorder %s9, 3
    %p112 = por %p110, %p111
    %p113 = scmp.ne.s32.totalorder %s105, %s108
    %p114 = scmp.eq.s32.totalorder %s9, 0
    %p115 = por %p113, %p114
    %p116 = scmp.ne.s32.totalorder %s105, %s108
    %p117 = scmp.eq.s32.totalorder %s14, 3
    %p118 = por %p116, %p117
    %p119 = scmp.ne.s32.totalorder %s108, %s109
    %p120 = scmp.eq.s32.totalorder %s14, 0
    %p121 = por %p119, %p120
    %p122 = scmp.ne.s32.totalorder %s108, %s109
    %p123 = scmp.eq.s32.totalorder %s15, 3
    %p124 = por %p122, %p123
    %p126 = scmp.ne.s32.totalorder %s109, %s125
    %p127 = scmp.eq.s32.totalorder %s15, 0
    %p128 = por %p126, %p127
    %s129 = ssub.s32 %s16, %s42
    %s130 = ssub.s32 %s17, %s38
    %s131 = sor.u32 %s129, %s130
    %s132 = ssub.s32 %s18, %s34
    %s133 = sor.u32 %s131, %s132
    %p134 = scmp.eq.s32.totalorder %s133, 0
    %s136 = sadd.s32 %s135, 1
    %s137 = scalar_select %p134, %s135, %s136
    %p140 = pneg %p134
    %p141 = scmp.eq.s32.totalorder %s9, 3
    %p142 = por %p140, %p141
    %p143 = scmp.ne.s32.totalorder %s135, %s138
    %p144 = scmp.eq.s32.totalorder %s9, 0
    %p145 = por %p143, %p144
    %p146 = scmp.ne.s32.totalorder %s135, %s138
    %p147 = scmp.eq.s32.totalorder %s14, 3
    %p148 = por %p146, %p147
    %p149 = scmp.ne.s32.totalorder %s138, %s139
    %p150 = scmp.eq.s32.totalorder %s14, 0
    %p151 = por %p149, %p150
    %p152 = scmp.ne.s32.totalorder %s138, %s139
    %p153 = scmp.eq.s32.totalorder %s15, 3
    %p154 = por %p152, %p153
    %p156 = scmp.ne.s32.totalorder %s139, %s155
    %p157 = scmp.eq.s32.totalorder %s15, 0
    %p158 = por %p156, %p157
    %p159 = scmp.le.s32.totalorder 1, %s9
    %p160 = scmp.lt.s32.totalorder %s9, 5
    %p161 = pnand %p159, %p160
    %p162 = pneg %p161
    // Predicated region
    $region9: #{_lambda_.11} parent=5 // pred_check
      _
    $region10: #{_lambda_.11} parent=5 // pred_check_branch
      %164 = sbr.rel (%p161) target = $region12
    $region11: #{_lambda_.11} parent=5 // pred_region
      %s165 = ssub.s32 %s9, 1
      // Predicated region
      $region13: #{_lambda_.11} parent=11 // pred_check
        %p166 = pneg %p121
      $region14: #{_lambda_.11} parent=11 // pred_check_branch
        %168 = sbr.rel (%p166) target = $region16
      $region15: #{_lambda_.11} parent=11 // pred_region
        %p169 = scmp.lt.s32.totalorder %s22, 0
        %s170 = scalar_select %p169, %s22, 0
        %s171 = scalar_lea.vmem %s2, %s170
      $region16: #{_lambda_.11} parent=11 // pred_fallthru
        _
    $region12: #{_lambda_.11} parent=5 // pred_fallthru
      _
    %p172 = scmp.lt.s32.totalorder %s9, 4
    // Predicated region
    $region17: #{_lambda_.11} parent=5 // pred_check
      %p173 = pneg %p172
    $region18: #{_lambda_.11} parent=5 // pred_check_branch
      %175 = sbr.rel (%p173) target = $region20
    $region19: #{_lambda_.11} parent=5 // pred_region
      // Predicated region
      $region21: #{_lambda_.11} parent=19 // pred_check
        %p176 = pneg %p59
      $region22: #{_lambda_.11} parent=19 // pred_check_branch
        %178 = sbr.rel (%p176) target = $region24
      $region23: #{_lambda_.11} parent=19 // pred_region
        %s179 = smul.u32 16, %s17
        %p180 = scmp.lt.s32.totalorder %s16, 3
        %s181 = scalar_select %p180, %s16, 3
        %p182 = scmp.lt.s32.totalorder %s179, 15
        %s183 = scalar_select %p182, %s179, 15
        %p184 = scmp.lt.s32.totalorder %s19, 0
        %s185 = scalar_select %p184, %s19, 0
        %s186 = sadd.s32 %s185, %s183
        %s187 = smul.addr %s181, 16
        %s188 = sadd.s32 %s186, %s187
        %s189 = smul.addr %s188, 4
        %s190 = scalar_lea.vmem %s0, %s189
        %s191 = smul.u32 16, %s17
      $region24: #{_lambda_.11} parent=19 // pred_fallthru
        _
      // Predicated region
      $region25: #{_lambda_.11} parent=19 // pred_check
        %p192 = pneg %p89
      $region26: #{_lambda_.11} parent=19 // pred_check_branch
        %194 = sbr.rel (%p192) target = $region28
      $region27: #{_lambda_.11} parent=19 // pred_region
        %s195 = smul.u32 16, %s19
        %p196 = scmp.lt.s32.totalorder %s16, 3
        %s197 = scalar_select %p196, %s16, 3
        %p198 = scmp.lt.s32.totalorder %s195, 15
        %s199 = scalar_select %p198, %s195, 15
        %p200 = scmp.lt.s32.totalorder %s18, 0
        %s201 = scalar_select %p200, %s18, 0
        %s202 = sadd.s32 %s201, %s199
        %s203 = smul.addr %s197, 16
        %s204 = sadd.s32 %s202, %s203
        %s205 = smul.addr %s204, 4
        %s206 = scalar_lea.vmem %s1, %s205
        %s207 = smul.u32 16, %s19
      $region28: #{_lambda_.11} parent=19 // pred_fallthru
        _
    $region20: #{_lambda_.11} parent=5 // pred_fallthru
      _
    %p208 = scmp.le.s32.totalorder 1, %s9
    %p209 = scmp.lt.s32.totalorder %s9, 5
    %p210 = pnand %p208, %p209
    %p211 = pneg %p210
    // Predicated region
    $region29: #{_lambda_.11} parent=5 // pred_check
      _
    $region30: #{_lambda_.11} parent=5 // pred_check_branch
      %213 = sbr.rel (%p210) target = $region32
    $region31: #{_lambda_.11} parent=5 // pred_region
      %s214 = ssub.s32 %s9, 1
      %s215 = smul.u32 16, %s21
      %p216 = scmp.lt.s32.totalorder %s20, 3
      %s217 = scalar_select %p216, %s20, 3
      %p218 = scmp.lt.s32.totalorder %s215, 15
      %s219 = scalar_select %p218, %s215, 15
      %p220 = scmp.lt.s32.totalorder %s23, 0
      %s221 = scalar_select %p220, %s23, 0
      %s222 = sadd.s32 %s221, %s219
      %s223 = smul.addr %s217, 16
      %s224 = sadd.s32 %s222, %s223
      %s225 = smul.addr %s224, 4
      %s226 = scalar_lea.vmem %s0, %s225
      %p227 = pneg %p65
      %p228 = pneg %p62
      %s229 = smul.u32 16, %s23
      %p230 = scmp.lt.s32.totalorder %s20, 3
      %s231 = scalar_select %p230, %s20, 3
      %p232 = scmp.lt.s32.totalorder %s229, 15
      %s233 = scalar_select %p232, %s229, 15
      %p234 = scmp.lt.s32.totalorder %s22, 0
      %s235 = scalar_select %p234, %s22, 0
      %s236 = sadd.s32 %s235, %s233
      %s237 = smul.addr %s231, 16
      %s238 = sadd.s32 %s236, %s237
      %s239 = smul.addr %s238, 4
      %s240 = scalar_lea.vmem %s1, %s239
      %p241 = pneg %p95
      %p242 = pneg %p92
      %p243 = scmp.lt.s32.totalorder %s22, 0
      %s244 = scalar_select %p243, %s22, 0
      %s245 = scalar_lea.vmem %s2, %s244
      %p246 = pneg %p121
      %p247 = pneg %p118
      %p248 = pneg %p151
      %p249 = pneg %p148
      %s250 = smul.u32 16, %s21
      %p251 = scmp.lt.s32.totalorder %s20, 3
      %s252 = scalar_select %p251, %s20, 3
      %p253 = scmp.lt.s32.totalorder %s250, 15
      %s254 = scalar_select %p253, %s250, 15
      %p255 = scmp.lt.s32.totalorder %s22, 0
      %s256 = scalar_select %p255, %s22, 0
      %s257 = sadd.s32 %s256, %s254
      %s258 = smul.addr %s252, 16
      %s259 = sadd.s32 %s257, %s258
      %s260 = smul.addr %s259, 8
      %s261 = scalar_lea.vmem %s3, %s260
      %s262 = smul.u32 16, %s21
      %p263 = scmp.lt.s32.totalorder %s20, 3
      %s264 = scalar_select %p263, %s20, 3
      %p265 = scmp.lt.s32.totalorder %s262, 15
      %s266 = scalar_select %p265, %s262, 15
      %p267 = scmp.lt.s32.totalorder %s23, 0
      %s268 = scalar_select %p267, %s23, 0
      %s269 = sadd.s32 %s268, %s266
      %s270 = smul.addr %s264, 16
      %s271 = sadd.s32 %s269, %s270
      %s272 = smul.addr %s271, 4
      %s273 = scalar_lea.vmem %s0, %s272
      %s274 = smul.u32 16, %s21
      %s275 = smul.u32 16, %s23
      %p276 = scmp.lt.s32.totalorder %s20, 3
      %s277 = scalar_select %p276, %s20, 3
      %p278 = scmp.lt.s32.totalorder %s275, 15
      %s279 = scalar_select %p278, %s275, 15
      %p280 = scmp.lt.s32.totalorder %s22, 0
      %s281 = scalar_select %p280, %s22, 0
      %s282 = sadd.s32 %s281, %s279
      %s283 = smul.addr %s277, 16
      %s284 = sadd.s32 %s282, %s283
      %s285 = smul.addr %s284, 4
      %s286 = scalar_lea.vmem %s1, %s285
      %s287 = smul.u32 16, %s23
      %p288 = scmp.lt.s32.totalorder %s22, 0
      %s289 = scalar_select %p288, %s22, 0
      %s290 = scalar_lea.vmem %s2, %s289
      %s291 = smul.u32 16, %s21
      %p292 = scmp.lt.s32.totalorder %s20, 3
      %s293 = scalar_select %p292, %s20, 3
      %p294 = scmp.lt.s32.totalorder %s291, 15
      %s295 = scalar_select %p294, %s291, 15
      %p296 = scmp.lt.s32.totalorder %s22, 0
      %s297 = scalar_select %p296, %s22, 0
      %s298 = sadd.s32 %s297, %s295
      %s299 = smul.addr %s293, 16
      %s300 = sadd.s32 %s298, %s299
      %s301 = smul.addr %s300, 8
      %s302 = scalar_lea.vmem %s3, %s301
      %s303 = smul.u32 16, %s21
      %p305 = scmp.eq.s32.totalorder %s23, 0
      // Predicated region
      $region33: #{_lambda_.11} parent=31 // pred_check
        %p306 = pneg %p305
      $region34: #{_lambda_.11} parent=31 // pred_check_branch
        %308 = sbr.rel (%p306) target = $region36
      $region35: #{_lambda_.11} parent=31 // pred_region
        %309 = vst [vmem:[#allocation2] sm:$0xff] 0.0
        %310 = vst [vmem:[#allocation2 + $0x8] sm:$0xff] 0.0
        %311 = vst [vmem:[#allocation2 + $0x10] sm:$0xff] 0.0
        %312 = vst [vmem:[#allocation2 + $0x18] sm:$0xff] 0.0
        %313 = vst [vmem:[#allocation2 + $0x20] sm:$0xff] 0.0
        %314 = vst [vmem:[#allocation2 + $0x28] sm:$0xff] 0.0
        %315 = vst [vmem:[#allocation2 + $0x30] sm:$0xff] 0.0
        %316 = vst [vmem:[#allocation2 + $0x38] sm:$0xff] 0.0
        %317 = vst [vmem:[#allocation2 + $0x40] sm:$0xff] 0.0
        %318 = vst [vmem:[#allocation2 + $0x48] sm:$0xff] 0.0
        %319 = vst [vmem:[#allocation2 + $0x50] sm:$0xff] 0.0
        %320 = vst [vmem:[#allocation2 + $0x58] sm:$0xff] 0.0
        %321 = vst [vmem:[#allocation2 + $0x60] sm:$0xff] 0.0
        %322 = vst [vmem:[#allocation2 + $0x68] sm:$0xff] 0.0
        %323 = vst [vmem:[#allocation2 + $0x70] sm:$0xff] 0.0
        %324 = vst [vmem:[#allocation2 + $0x78] sm:$0xff] 0.0
      $region36: #{_lambda_.11} parent=31 // pred_fallthru
        _
      %v325 = vld [vmem:[#allocation2] sm:$0xff]
      %v326 = vld [vmem:[#allocation2 + $0x8] sm:$0xff]
      %v327 = vld [vmem:[#allocation2 + $0x10] sm:$0xff]
      %v328 = vld [vmem:[#allocation2 + $0x18] sm:$0xff]
      %v329 = vld [vmem:[#allocation2 + $0x20] sm:$0xff]
      %v330 = vld [vmem:[#allocation2 + $0x28] sm:$0xff]
      %v331 = vld [vmem:[#allocation2 + $0x30] sm:$0xff]
      %v332 = vld [vmem:[#allocation2 + $0x38] sm:$0xff]
      %v333 = vld [vmem:[#allocation2 + $0x40] sm:$0xff]
      %v334 = vld [vmem:[#allocation2 + $0x48] sm:$0xff]
      %v335 = vld [vmem:[#allocation2 + $0x50] sm:$0xff]
      %v336 = vld [vmem:[#allocation2 + $0x58] sm:$0xff]
      %v337 = vld [vmem:[#allocation2 + $0x60] sm:$0xff]
      %v338 = vld [vmem:[#allocation2 + $0x68] sm:$0xff]
      %v339 = vld [vmem:[#allocation2 + $0x70] sm:$0xff]
      %v340 = vld [vmem:[#allocation2 + $0x78] sm:$0xff]
      %v341 = vld [vmem:[%s273] sm:$0xf]
      %v342 = vld [vmem:[%s273 + $0x4] sm:$0xf]
      %v343 = vld [vmem:[%s273 + $0x8] sm:$0xf]
      %v344 = vld [vmem:[%s273 + $0xc] sm:$0xf]
      %v345 = vld [vmem:[%s273 + $0x10] sm:$0xf]
      %v346 = vld [vmem:[%s273 + $0x14] sm:$0xf]
      %v347 = vld [vmem:[%s273 + $0x18] sm:$0xf]
      %v348 = vld [vmem:[%s273 + $0x1c] sm:$0xf]
      %v349 = vld [vmem:[%s273 + $0x20] sm:$0xf]
      %v350 = vld [vmem:[%s273 + $0x24] sm:$0xf]
      %v351 = vld [vmem:[%s273 + $0x28] sm:$0xf]
      %v352 = vld [vmem:[%s273 + $0x2c] sm:$0xf]
      %v353 = vld [vmem:[%s273 + $0x30] sm:$0xf]
      %v354 = vld [vmem:[%s273 + $0x34] sm:$0xf]
      %v355 = vld [vmem:[%s273 + $0x38] sm:$0xf]
      %v356 = vld [vmem:[%s273 + $0x3c] sm:$0xf]
      %v357 = vld [vmem:[%s286] sm:$0xf]
      %v358 = vld [vmem:[%s286 + $0x4] sm:$0xf]
      %v359 = vld [vmem:[%s286 + $0x8] sm:$0xf]
      %v360 = vld [vmem:[%s286 + $0xc] sm:$0xf]
      %v361 = vld [vmem:[%s286 + $0x10] sm:$0xf]
      %v362 = vld [vmem:[%s286 + $0x14] sm:$0xf]
      %v363 = vld [vmem:[%s286 + $0x18] sm:$0xf]
      %v364 = vld [vmem:[%s286 + $0x1c] sm:$0xf]
      %v365 = vld [vmem:[%s286 + $0x20] sm:$0xf]
      %v366 = vld [vmem:[%s286 + $0x24] sm:$0xf]
      %v367 = vld [vmem:[%s286 + $0x28] sm:$0xf]
      %v368 = vld [vmem:[%s286 + $0x2c] sm:$0xf]
      %v369 = vld [vmem:[%s286 + $0x30] sm:$0xf]
      %v370 = vld [vmem:[%s286 + $0x34] sm:$0xf]
      %v371 = vld [vmem:[%s286 + $0x38] sm:$0xf]
      %v372 = vld [vmem:[%s286 + $0x3c] sm:$0xf]
      %v389 = vunpack.c.l.b16 %v341
      %v390 = vunpack.c.l.b16 %v342
      %v391 = vunpack.c.l.b16 %v343
      %v392 = vunpack.c.l.b16 %v344
      %v393 = vunpack.c.l.b16 %v345
      %v394 = vunpack.c.l.b16 %v346
      %v395 = vunpack.c.l.b16 %v347
      %v396 = vunpack.c.l.b16 %v348
      %v397 = vunpack.c.l.b16 %v349
      %v398 = vunpack.c.l.b16 %v350
      %v399 = vunpack.c.l.b16 %v351
      %v400 = vunpack.c.l.b16 %v352
      %v401 = vunpack.c.l.b16 %v353
      %v402 = vunpack.c.l.b16 %v354
      %v403 = vunpack.c.l.b16 %v355
      %v404 = vunpack.c.l.b16 %v356
      %v405 = vpack.c.b16 %v390, %v389
      %v406 = vpack.c.b16 %v392, %v391
      %v407 = vpack.c.b16 %v394, %v393
      %v408 = vpack.c.b16 %v396, %v395
      %v409 = vpack.c.b16 %v398, %v397
      %v410 = vpack.c.b16 %v400, %v399
      %v411 = vpack.c.b16 %v402, %v401
      %v412 = vpack.c.b16 %v404, %v403
      %v437 = vunpack.c.l.b16 %v357
      %v438 = vunpack.c.l.b16 %v358
      %v439 = vunpack.c.l.b16 %v359
      %v440 = vunpack.c.l.b16 %v360
      %v441 = vunpack.c.l.b16 %v361
      %v442 = vunpack.c.l.b16 %v362
      %v443 = vunpack.c.l.b16 %v363
      %v444 = vunpack.c.l.b16 %v364
      %v445 = vunpack.c.l.b16 %v365
      %v446 = vunpack.c.l.b16 %v366
      %v447 = vunpack.c.l.b16 %v367
      %v448 = vunpack.c.l.b16 %v368
      %v449 = vunpack.c.l.b16 %v369
      %v450 = vunpack.c.l.b16 %v370
      %v451 = vunpack.c.l.b16 %v371
      %v452 = vunpack.c.l.b16 %v372
      %v453 = vpack.c.b16 %v438, %v437
      %v454 = vpack.c.b16 %v440, %v439
      %v455 = vpack.c.b16 %v442, %v441
      %v456 = vpack.c.b16 %v444, %v443
      %v457 = vpack.c.b16 %v446, %v445
      %v458 = vpack.c.b16 %v448, %v447
      %v459 = vpack.c.b16 %v450, %v449
      %v460 = vpack.c.b16 %v452, %v451
      %469 = vmatprep.subr.bf16.mxu0 0
      %470 = vmatpush1.bf16.msra.mxu0 %v453
      %471 = vmatprep.subr.bf16.mxu0 0
      %472 = vmatpush1.bf16.msra.mxu0 %v454
      %473 = vmatprep.subr.bf16.mxu0 0
      %474 = vmatpush1.bf16.msra.mxu0 %v455
      %475 = vmatprep.subr.bf16.mxu0 0
      %476 = vmatpush1.bf16.msra.mxu0 %v456
      %477 = vmatprep.subr.bf16.mxu0 0
      %478 = vmatpush1.bf16.msra.mxu0 %v457
      %479 = vmatprep.subr.bf16.mxu0 0
      %480 = vmatpush1.bf16.msra.mxu0 %v458
      %481 = vmatprep.subr.bf16.mxu0 0
      %482 = vmatpush1.bf16.msra.mxu0 %v459
      %483 = vmatprep.subr.bf16.mxu0 0
      %484 = vmatpush1.bf16.msra.mxu0 %v460
      %485 = vmatprep.subr.bf16.mxu0 0
      %486 = vmatpush1.bf16.msra.mxu0 0
      %487 = vmatprep.subr.bf16.mxu0 0
      %488 = vmatpush1.bf16.msra.mxu0 0
      %489 = vmatprep.subr.bf16.mxu0 0
      %490 = vmatpush1.bf16.msra.mxu0 0
      %491 = vmatprep.subr.bf16.mxu0 0
      %492 = vmatpush1.bf16.msra.mxu0 0
      %493 = vmatprep.subr.bf16.mxu0 0
      %494 = vmatpush1.bf16.msra.mxu0 0
      %495 = vmatprep.subr.bf16.mxu0 0
      %496 = vmatpush1.bf16.msra.mxu0 0
      %497 = vmatprep.subr.bf16.mxu0 0
      %498 = vmatpush1.bf16.msra.mxu0 0
      %499 = vmatprep.subr.bf16.mxu0 0
      %500 = vmatpush1.bf16.msra.mxu0 0
      %501 = vmatprep.mubr.bf16.mxu0 0
      %502 = vmatmul.mubr.bf16.gmra.mrb[0].mxu0 %v405
      %v503 = vpop.f32.mrb[0].mxu0
      %v504 = vadd.f32 0.0, %v503
      %v505 = vpop.f32.mrb[0].mxu0
      %v506 = vpop.f32.mrb[0].mxu0
      %v507 = vadd.f32 0.0, %v506
      %v508 = vpop.f32.mrb[0].mxu0
      %509 = vmatprep.mubr.bf16.mxu0 0
      %510 = vmatmul.mubr.bf16.gmra.mrb[0].mxu0 %v406
      %v511 = vpop.f32.mrb[0].mxu0
      %v512 = vadd.f32 0.0, %v511
      %v513 = vpop.f32.mrb[0].mxu0
      %v514 = vpop.f32.mrb[0].mxu0
      %v515 = vadd.f32 0.0, %v514
      %v516 = vpop.f32.mrb[0].mxu0
      %517 = vmatprep.mubr.bf16.mxu0 0
      %518 = vmatmul.mubr.bf16.gmra.mrb[0].mxu0 %v407
      %v519 = vpop.f32.mrb[0].mxu0
      %v520 = vadd.f32 0.0, %v519
      %v521 = vpop.f32.mrb[0].mxu0
      %v522 = vpop.f32.mrb[0].mxu0
      %v523 = vadd.f32 0.0, %v522
      %v524 = vpop.f32.mrb[0].mxu0
      %525 = vmatprep.mubr.bf16.mxu0 0
      %526 = vmatmul.mubr.bf16.gmra.mrb[0].mxu0 %v408
      %v527 = vpop.f32.mrb[0].mxu0
      %v528 = vadd.f32 0.0, %v527
      %v529 = vpop.f32.mrb[0].mxu0
      %v530 = vpop.f32.mrb[0].mxu0
      %v531 = vadd.f32 0.0, %v530
      %v532 = vpop.f32.mrb[0].mxu0
      %533 = vmatprep.mubr.bf16.mxu0 0
      %534 = vmatmul.mubr.bf16.gmra.mrb[0].mxu0 %v409
      %v535 = vpop.f32.mrb[0].mxu0
      %v536 = vadd.f32 0.0, %v535
      %v537 = vpop.f32.mrb[0].mxu0
      %v538 = vpop.f32.mrb[0].mxu0
      %v539 = vadd.f32 0.0, %v538
      %v540 = vpop.f32.mrb[0].mxu0
      %541 = vmatprep.mubr.bf16.mxu0 0
      %542 = vmatmul.mubr.bf16.gmra.mrb[0].mxu0 %v410
      %v543 = vpop.f32.mrb[0].mxu0
      %v544 = vadd.f32 0.0, %v543
      %v545 = vpop.f32.mrb[0].mxu0
      %v546 = vpop.f32.mrb[0].mxu0
      %v547 = vadd.f32 0.0, %v546
      %v548 = vpop.f32.mrb[0].mxu0
      %549 = vmatprep.mubr.bf16.mxu0 0
      %550 = vmatmul.mubr.bf16.gmra.mrb[0].mxu0 %v411
      %v551 = vpop.f32.mrb[0].mxu0
      %v552 = vadd.f32 0.0, %v551
      %v553 = vpop.f32.mrb[0].mxu0
      %v554 = vpop.f32.mrb[0].mxu0
      %v555 = vadd.f32 0.0, %v554
      %v556 = vpop.f32.mrb[0].mxu0
      %557 = vmatprep.mubr.bf16.mxu0 0
      %558 = vmatmul.mubr.bf16.gmra.mrb[0].mxu0 %v412
      %v559 = vpop.f32.mrb[0].mxu0
      %v560 = vadd.f32 0.0, %v559
      %v561 = vpop.f32.mrb[0].mxu0
      %v562 = vpop.f32.mrb[0].mxu0
      %v563 = vadd.f32 0.0, %v562
      %v564 = vpop.f32.mrb[0].mxu0
      %565 = vdwg.mxu0
      %v566 = vadd.f32 %v325, %v504
      %v567 = vadd.f32 %v326, %v507
      %v568 = vadd.f32 %v327, %v512
      %v569 = vadd.f32 %v328, %v515
      %v570 = vadd.f32 %v329, %v520
      %v571 = vadd.f32 %v330, %v523
      %v572 = vadd.f32 %v331, %v528
      %v573 = vadd.f32 %v332, %v531
      %v574 = vadd.f32 %v333, %v536
      %v575 = vadd.f32 %v334, %v539
      %v576 = vadd.f32 %v335, %v544
      %v577 = vadd.f32 %v336, %v547
      %v578 = vadd.f32 %v337, %v552
      %v579 = vadd.f32 %v338, %v555
      %v580 = vadd.f32 %v339, %v560
      %v581 = vadd.f32 %v340, %v563
      %582 = vst [vmem:[#allocation2] sm:$0xff] %v566
      %583 = vst [vmem:[#allocation2 + $0x8] sm:$0xff] %v567
      %584 = vst [vmem:[#allocation2 + $0x10] sm:$0xff] %v568
      %585 = vst [vmem:[#allocation2 + $0x18] sm:$0xff] %v569
      %586 = vst [vmem:[#allocation2 + $0x20] sm:$0xff] %v570
      %587 = vst [vmem:[#allocation2 + $0x28] sm:$0xff] %v571
      %588 = vst [vmem:[#allocation2 + $0x30] sm:$0xff] %v572
      %589 = vst [vmem:[#allocation2 + $0x38] sm:$0xff] %v573
      %590 = vst [vmem:[#allocation2 + $0x40] sm:$0xff] %v574
      %591 = vst [vmem:[#allocation2 + $0x48] sm:$0xff] %v575
      %592 = vst [vmem:[#allocation2 + $0x50] sm:$0xff] %v576
      %593 = vst [vmem:[#allocation2 + $0x58] sm:$0xff] %v577
      %594 = vst [vmem:[#allocation2 + $0x60] sm:$0xff] %v578
      %595 = vst [vmem:[#allocation2 + $0x68] sm:$0xff] %v579
      %596 = vst [vmem:[#allocation2 + $0x70] sm:$0xff] %v580
      %597 = vst [vmem:[#allocation2 + $0x78] sm:$0xff] %v581
      // Predicated region
      $region37: #{_lambda_.11} parent=31 // pred_check
        %p598 = pneg %p305
      $region38: #{_lambda_.11} parent=31 // pred_check_branch
        %600 = sbr.rel (%p598) target = $region40
      $region39: #{_lambda_.11} parent=31 // pred_region
        %v601 = vld [vmem:[#allocation2] sm:$0xff]
        %v602 = vld [vmem:[#allocation2 + $0x8] sm:$0xff]
        %v603 = vld [vmem:[#allocation2 + $0x10] sm:$0xff]
        %v604 = vld [vmem:[#allocation2 + $0x18] sm:$0xff]
        %v605 = vld [vmem:[#allocation2 + $0x20] sm:$0xff]
        %v606 = vld [vmem:[#allocation2 + $0x28] sm:$0xff]
        %v607 = vld [vmem:[#allocation2 + $0x30] sm:$0xff]
        %v608 = vld [vmem:[#allocation2 + $0x38] sm:$0xff]
        %v609 = vld [vmem:[#allocation2 + $0x40] sm:$0xff]
        %v610 = vld [vmem:[#allocation2 + $0x48] sm:$0xff]
        %v611 = vld [vmem:[#allocation2 + $0x50] sm:$0xff]
        %v612 = vld [vmem:[#allocation2 + $0x58] sm:$0xff]
        %v613 = vld [vmem:[#allocation2 + $0x60] sm:$0xff]
        %v614 = vld [vmem:[#allocation2 + $0x68] sm:$0xff]
        %v615 = vld [vmem:[#allocation2 + $0x70] sm:$0xff]
        %v616 = vld [vmem:[#allocation2 + $0x78] sm:$0xff]
        %v617 = vld [vmem:[%s290] sm:$0x1]
        %v619 = vlaneseq
        %v620 = vshrl.u32 %v619, 7
        %v621 = vsub.s32 0, %v620
        %v622 = vrot.slane %v617, %v621
        %v624 = vadd.f32 %v601, %v622
        %v625 = vadd.f32 %v602, %v622
        %v626 = vadd.f32 %v603, %v622
        %v627 = vadd.f32 %v604, %v622
        %v628 = vadd.f32 %v605, %v622
        %v629 = vadd.f32 %v606, %v622
        %v630 = vadd.f32 %v607, %v622
        %v631 = vadd.f32 %v608, %v622
        %v632 = vadd.f32 %v609, %v622
        %v633 = vadd.f32 %v610, %v622
        %v634 = vadd.f32 %v611, %v622
        %v635 = vadd.f32 %v612, %v622
        %v636 = vadd.f32 %v613, %v622
        %v637 = vadd.f32 %v614, %v622
        %v638 = vadd.f32 %v615, %v622
        %v639 = vadd.f32 %v616, %v622
        %640 = vst [vmem:[%s302] sm:$0xff] %v624
        %641 = vst [vmem:[%s302 + $0x8] sm:$0xff] %v625
        %642 = vst [vmem:[%s302 + $0x10] sm:$0xff] %v626
        %643 = vst [vmem:[%s302 + $0x18] sm:$0xff] %v627
        %644 = vst [vmem:[%s302 + $0x20] sm:$0xff] %v628
        %645 = vst [vmem:[%s302 + $0x28] sm:$0xff] %v629
        %646 = vst [vmem:[%s302 + $0x30] sm:$0xff] %v630
        %647 = vst [vmem:[%s302 + $0x38] sm:$0xff] %v631
        %648 = vst [vmem:[%s302 + $0x40] sm:$0xff] %v632
        %649 = vst [vmem:[%s302 + $0x48] sm:$0xff] %v633
        %650 = vst [vmem:[%s302 + $0x50] sm:$0xff] %v634
        %651 = vst [vmem:[%s302 + $0x58] sm:$0xff] %v635
        %652 = vst [vmem:[%s302 + $0x60] sm:$0xff] %v636
        %653 = vst [vmem:[%s302 + $0x68] sm:$0xff] %v637
        %654 = vst [vmem:[%s302 + $0x70] sm:$0xff] %v638
        %655 = vst [vmem:[%s302 + $0x78] sm:$0xff] %v639
      $region40: #{_lambda_.11} parent=31 // pred_fallthru
        _
      %s656 = smul.u32 16, %s21
      %p657 = scmp.lt.s32.totalorder %s20, 3
      %s658 = scalar_select %p657, %s20, 3
      %p659 = scmp.lt.s32.totalorder %s656, 15
      %s660 = scalar_select %p659, %s656, 15
      %p661 = scmp.lt.s32.totalorder %s22, 0
      %s662 = scalar_select %p661, %s22, 0
      %s663 = sadd.s32 %s662, %s660
      %s664 = smul.addr %s658, 16
      %s665 = sadd.s32 %s663, %s664
      %s666 = smul.addr %s665, 8
      %s667 = scalar_lea.vmem %s3, %s666
      // Predicated region
      $region41: #{_lambda_.11} parent=31 // pred_check
        %p668 = pneg %p148
      $region42: #{_lambda_.11} parent=31 // pred_check_branch
        %670 = sbr.rel (%p668) target = $region44
      $region43: #{_lambda_.11} parent=31 // pred_region
        %s671 = smul.u32 16, %s21
      $region44: #{_lambda_.11} parent=31 // pred_fallthru
        _
    $region32: #{_lambda_.11} parent=5 // pred_fallthru
      _
    %p672 = scmp.le.s32.totalorder 2, %s9
    // Predicated region
    $region45: #{_lambda_.11} parent=5 // pred_check
      %p673 = pneg %p672
    $region46: #{_lambda_.11} parent=5 // pred_check_branch
      %675 = sbr.rel (%p673) target = $region48
    $region47: #{_lambda_.11} parent=5 // pred_region
      %s676 = ssub.s32 %s9, 2
      // Predicated region
      $region49: #{_lambda_.11} parent=47 // pred_check
        %p677 = pneg %p154
      $region50: #{_lambda_.11} parent=47 // pred_check_branch
        %679 = sbr.rel (%p677) target = $region52
      $region51: #{_lambda_.11} parent=47 // pred_region
        %s680 = smul.u32 16, %s25
        %p681 = scmp.lt.s32.totalorder %s24, 3
        %s682 = scalar_select %p681, %s24, 3
        %p683 = scmp.lt.s32.totalorder %s680, 15
        %s684 = scalar_select %p683, %s680, 15
        %p685 = scmp.lt.s32.totalorder %s26, 0
        %s686 = scalar_select %p685, %s26, 0
        %s687 = sadd.s32 %s686, %s684
        %s688 = smul.addr %s682, 16
        %s689 = sadd.s32 %s687, %s688
        %s690 = smul.addr %s689, 8
        %s691 = scalar_lea.vmem %s3, %s690
      $region52: #{_lambda_.11} parent=47 // pred_fallthru
        _
    $region48: #{_lambda_.11} parent=5 // pred_fallthru
      _
  $region6: #{_lambda_.11} parent=0 // loop_footer
    %s13 = sadd.s32 1, %s9
  $region7: #{_lambda_.11} parent=0 // loop_footer_branch
    %8 = sbr.rel target = $region3
  $region8: #{_lambda_.11} parent=0 // loop_exit
    _

</llo_original>
